<compile_context>
chip_gen: v7x
topology: tpu7x:2x2x1
jax: 0.10.0
libtpu: 0.0.40
codegen_flags: <defaults>
</compile_context>

<pallas_src>
import jax
import jax.numpy as jnp
import numpy as np
from jax.experimental import pallas as pl
from jax.experimental.pallas import tpu as pltpu


# ------------------------------ fused kernel -------------------------------

def _lenet_fused_kernel(x_ref, w1c_ref, b1_ref, rs1_ref, w2c_ref, b2_ref,
                        rs2_ref, w1fc_ref, b1f_ref, w2fc_ref, b2f_ref,
                        w3fc_ref, b3f_ref, out_ref):
    f32 = jnp.float32
    TB = out_ref.shape[0]                       # samples per grid step

    def sigmoid(v):                             # single EUP op, no inf intermediates
        return 0.5 * (jnp.tanh(0.5 * v) + 1.0)

    def dot(a, b):
        return jnp.dot(a, b, preferred_element_type=f32)

    # ---- conv1 (5x5, 1->6) + sigmoid --------------------------------------
    # LHS rows: b*28 + r (full 28-row strip per sample, rolled up by di per tap)
    # out lanes: co*24 + ow, zero-padded to 256.  Bias folded into the acc init.
    xf = x_ref[...]                             # (TB*28, 28)
    acc1 = jnp.broadcast_to(b1_ref[...], (TB * 28, 256))
    for di in range(5):
        xs = xf if di == 0 else pltpu.roll(xf, shift=TB * 28 - di, axis=0)
        acc1 = acc1 + dot(xs, w1c_ref[di])
    o1 = sigmoid(acc1)                          # rows b*28+oh valid for oh < 24

    # ---- maxpool 2x2: roll pair-max + one row-compaction matmul ------------
    m1 = jnp.maximum(o1, pltpu.roll(o1, shift=1, axis=0))   # oh pairs -> odd rows
    m1 = jnp.maximum(m1, pltpu.roll(m1, shift=1, axis=1))   # ow pairs -> odd lanes
    p1 = dot(rs1_ref[...], m1)                  # (12*TB, 256), rows h'*TB + b

    # ---- conv2 (5x5, 6->16) + sigmoid --------------------------------------
    # pool1's W-pooled values sit at odd lanes; that sparsity is folded into w2c.
    acc2 = jnp.broadcast_to(b2_ref[...], (TB * 8, 128))
    for di in range(5):
        acc2 = acc2 + dot(p1[di * TB:(di + 8) * TB, :], w2c_ref[di])
    o2 = sigmoid(acc2)                          # rows oh*TB + b, lanes co*8 + ow

    # ---- maxpool 2x2 --------------------------------------------------------
    m2 = jnp.maximum(o2, pltpu.roll(o2, shift=TB, axis=0))  # oh pairs -> odd oh
    m2 = jnp.maximum(m2, pltpu.roll(m2, shift=1, axis=1))   # ow pairs -> odd lanes
    p2 = dot(rs2_ref[...], m2)                  # (4*TB, 128), rows h''*TB + b

    # ---- fc1 (256->120) batched; flatten permutation folded into w1fc ------
    acc3 = jnp.broadcast_to(b1f_ref[...], (TB, 128))
    for h in range(4):
        acc3 = acc3 + dot(p2[h * TB:(h + 1) * TB, :], w1fc_ref[h])
    h1 = sigmoid(acc3)

    # ---- fc2 (120->84) + fc3 (84->10), all padded to 128 lanes --------------
    h2 = sigmoid(dot(h1, w2fc_ref[...]) + b2f_ref[...])
    out_ref[...] = dot(h2, w3fc_ref[...]) + b3f_ref[...]    # dense (TB,128) store


def lenet_forward(prepared, img):
    """Fused LeNet forward.  img: (B, 1, 28, 28) f32 -> (B, 10) logits."""
    B = img.shape[0]
    TB = prepared["rowsel1"].shape[0] // 12     # samples per grid step
    nsteps = -(-B // TB)
    Bp = nsteps * TB

    x = img.reshape(B, 28, 28).astype(jnp.float32)
    if Bp != B:
        x = jnp.pad(x, ((0, Bp - B), (0, 0), (0, 0)))
    x = x.reshape(Bp * 28, 28)                  # free host-side reshape

    out = pl.pallas_call(
        _lenet_fused_kernel,
        out_shape=jax.ShapeDtypeStruct((Bp, 128), jnp.float32),
        grid=(nsteps,),
        in_specs=[
            pl.BlockSpec((TB * 28, 28), lambda b: (b, 0)),       # TB images (strips)
            pl.BlockSpec((5, 28, 256), lambda b: (0, 0, 0)),     # conv1 banded GEMM
            pl.BlockSpec((1, 256), lambda b: (0, 0)),            # conv1 bias row
            pl.BlockSpec((12 * TB, 28 * TB), lambda b: (0, 0)),  # pool1 row select
            pl.BlockSpec((5, 256, 128), lambda b: (0, 0, 0)),    # conv2 banded GEMM
            pl.BlockSpec((1, 128), lambda b: (0, 0)),            # conv2 bias row
            pl.BlockSpec((4 * TB, 8 * TB), lambda b: (0, 0)),    # pool2 row select
            pl.BlockSpec((4, 128, 128), lambda b: (0, 0, 0)),    # fc1 (flatten folded)
            pl.BlockSpec((1, 128), lambda b: (0, 0)),            # fc1 bias
            pl.BlockSpec((128, 128), lambda b: (0, 0)),          # fc2 (padded)
            pl.BlockSpec((1, 128), lambda b: (0, 0)),            # fc2 bias
            pl.BlockSpec((128, 128), lambda b: (0, 0)),          # fc3 (padded)
            pl.BlockSpec((1, 128), lambda b: (0, 0)),            # fc3 bias
        ],
        out_specs=pl.BlockSpec((TB, 128), lambda b: (b, 0)),
        compiler_params=pltpu.CompilerParams(
            dimension_semantics=("parallel",)),
    )(x, prepared["w1c"], prepared["b1"], prepared["rowsel1"], prepared["w2c"],
      prepared["b2"], prepared["rowsel2"], prepared["w1fc"], prepared["b1f"],
      prepared["w2fc"], prepared["b2f"], prepared["w3fc"], prepared["b3f"])
    return out[:B, :10]


# -------------------- one-time parameter repacking (init) ------------------

def prepare_params(params, tb=8):
    """Repack PyTorch-layout LeNet params into kernel operands (done once).
    tb = samples per grid step (multiple of 8)."""
    assert tb % 8 == 0
    cw1 = np.asarray(params["conv1_w"], np.float32)   # (6, 1, 5, 5)
    cb1 = np.asarray(params["conv1_b"], np.float32)
    cw2 = np.asarray(params["conv2_w"], np.float32)   # (16, 6, 5, 5)
    cb2 = np.asarray(params["conv2_b"], np.float32)
    fw1 = np.asarray(params["fc1_w"], np.float32)     # (120, 256)
    fb1 = np.asarray(params["fc1_b"], np.float32)
    fw2 = np.asarray(params["fc2_w"], np.float32)     # (84, 120)
    fb2 = np.asarray(params["fc2_b"], np.float32)
    fw3 = np.asarray(params["fc3_w"], np.float32)     # (10, 84)
    fb3 = np.asarray(params["fc3_b"], np.float32)

    # conv1 banded GEMM: out lane = co*24 + ow (zero-padded to 256), K = input col.
    w1c = np.zeros((5, 28, 256), np.float32)
    for co in range(6):
        for di in range(5):
            for dj in range(5):
                for ow in range(24):
                    w1c[di, ow + dj, co * 24 + ow] = cw1[co, 0, di, dj]
    b1 = np.zeros((1, 256), np.float32)
    b1[0, :144] = np.repeat(cb1, 24)

    # pool1 row compaction: out row h'*tb + b  <-  m1 row b*28 + 2h' + 1.
    rs1 = np.zeros((12 * tb, 28 * tb), np.float32)
    for h in range(12):
        for b in range(tb):
            rs1[h * tb + b, b * 28 + 2 * h + 1] = 1.0

    # conv2 banded GEMM; pool1's W-pooled values live at ODD lanes ci*24 + 2w' + 1.
    w2c = np.zeros((5, 256, 128), np.float32)
    for co in range(16):
        for ci in range(6):
            for di in range(5):
                for dj in range(5):
                    for ow in range(8):
                        w2c[di, ci * 24 + 2 * (ow + dj) + 1, co * 8 + ow] = \
                            cw2[co, ci, di, dj]
    b2 = np.repeat(cb2, 8).reshape(1, 128).astype(np.float32)

    # pool2 row compaction: out row h''*tb + b  <-  m2 row (2h''+1)*tb + b.
    rs2 = np.zeros((4 * tb, 8 * tb), np.float32)
    for h in range(4):
        for b in range(tb):
            rs2[h * tb + b, (2 * h + 1) * tb + b] = 1.0

    # fc1 banded over h''; pool2 values at ODD lanes co*8 + 2w'' + 1; the PyTorch
    # NCHW flatten index is co*16 + h''*4 + w''.  N padded 120 -> 128.
    w1fc = np.zeros((4, 128, 128), np.float32)
    for h in range(4):
        for co in range(16):
            for w in range(4):
                w1fc[h, co * 8 + 2 * w + 1, :120] = fw1[:, co * 16 + h * 4 + w]
    b1f = np.zeros((1, 128), np.float32)
    b1f[0, :120] = fb1

    # fc2 / fc3 padded to 128x128; zero K-rows neutralize the sigmoid(0)=0.5 pads.
    w2fc = np.zeros((128, 128), np.float32)
    w2fc[:120, :84] = fw2.T
    b2f = np.zeros((1, 128), np.float32)
    b2f[0, :84] = fb2
    w3fc = np.zeros((128, 128), np.float32)
    w3fc[:84, :10] = fw3.T
    b3f = np.zeros((1, 128), np.float32)
    b3f[0, :10] = fb3

    to = lambda a: jnp.asarray(a, jnp.float32)
    return {"w1c": to(w1c), "b1": to(b1), "rowsel1": to(rs1), "w2c": to(w2c),
            "b2": to(b2), "rowsel2": to(rs2), "w1fc": to(w1fc), "b1f": to(b1f),
            "w2fc": to(w2fc), "b2f": to(b2f), "w3fc": to(w3fc), "b3f": to(b3f)}


def init_lenet_params(key):
    """Deterministic init mimicking PyTorch default U(-1/sqrt(fan_in), +1/sqrt(fan_in))."""
    def uni(k, shape, fan_in):
        bound = 1.0 / np.sqrt(fan_in)
        return jax.random.uniform(k, shape, jnp.float32, -bound, bound)

    ks = jax.random.split(key, 10)
    return {
        "conv1_w": uni(ks[0], (6, 1, 5, 5), 1 * 5 * 5),
        "conv1_b": uni(ks[1], (6,), 1 * 5 * 5),
        "conv2_w": uni(ks[2], (16, 6, 5, 5), 6 * 5 * 5),
        "conv2_b": uni(ks[3], (16,), 6 * 5 * 5),
        "fc1_w": uni(ks[4], (120, 16 * 4 * 4), 16 * 4 * 4),
        "fc1_b": uni(ks[5], (120,), 16 * 4 * 4),
        "fc2_w": uni(ks[6], (84, 120), 120),
        "fc2_b": uni(ks[7], (84,), 120),
        "fc3_w": uni(ks[8], (10, 84), 84),
        "fc3_b": uni(ks[9], (10,), 84),
    }


# ------------------------- pure-JAX reference check ------------------------

def lenet_reference(params, img):
    def conv(x, w, b):
        y = jax.lax.conv_general_dilated(
            x, w, window_strides=(1, 1), padding="VALID",
            dimension_numbers=("NCHW", "OIHW", "NCHW"))
        return jax.nn.sigmoid(y + b[None, :, None, None])

    def pool(x):
        return jax.lax.reduce_window(
            x, -jnp.inf, jax.lax.max, (1, 1, 2, 2), (1, 1, 2, 2), "VALID")

    x = pool(conv(img, params["conv1_w"], params["conv1_b"]))
    x = pool(conv(x, params["conv2_w"], params["conv2_b"]))
    feat = x.reshape(img.shape[0], -1)
    h = jax.nn.sigmoid(feat @ params["fc1_w"].T + params["fc1_b"])
    h = jax.nn.sigmoid(h @ params["fc2_w"].T + params["fc2_b"])
    return h @ params["fc3_w"].T + params["fc3_b"]


if __name__ == "__main__":
    key = jax.random.PRNGKey(0)
    pkey, xkey = jax.random.split(key)
    params = init_lenet_params(pkey)
    prepared = prepare_params(params, tb=8)     # one-time weight repacking

    # LeNet expects 28x28 single-channel inputs (MNIST); batch 32 -> 4 grid steps
    # (>= 2 "parallel" steps keeps both v7x TensorCores busy).
    x = jax.random.normal(xkey, (32, 1, 28, 28), dtype=jnp.float32)

    forward = jax.jit(lenet_forward)
    out = jax.block_until_ready(forward(prepared, x))
    assert out.shape == (32, 10) and out.dtype == jnp.float32

    ref = jax.block_until_ready(lenet_reference(params, x))
    np.testing.assert_allclose(np.asarray(out), np.asarray(ref), rtol=2e-4, atol=2e-4)

    print("KERNEL_OK")
</pallas_src>

<mosaic_0001>
module attributes {stable_mosaic.version = 11 : i64} {
  func.func @_lenet_fused_kernel(%arg0: i32, %arg1: memref<224x28xf32, #tpu.memory_space<vmem>>, %arg2: memref<5x28x256xf32, #tpu.memory_space<vmem>>, %arg3: memref<1x256xf32, #tpu.memory_space<vmem>>, %arg4: memref<96x224xf32, #tpu.memory_space<vmem>>, %arg5: memref<5x256x128xf32, #tpu.memory_space<vmem>>, %arg6: memref<1x128xf32, #tpu.memory_space<vmem>>, %arg7: memref<32x64xf32, #tpu.memory_space<vmem>>, %arg8: memref<4x128x128xf32, #tpu.memory_space<vmem>>, %arg9: memref<1x128xf32, #tpu.memory_space<vmem>>, %arg10: memref<128x128xf32, #tpu.memory_space<vmem>>, %arg11: memref<1x128xf32, #tpu.memory_space<vmem>>, %arg12: memref<128x128xf32, #tpu.memory_space<vmem>>, %arg13: memref<1x128xf32, #tpu.memory_space<vmem>>, %arg14: memref<8x128xf32, #tpu.memory_space<vmem>>) attributes {dimension_semantics = [#tpu.dimension_semantics<parallel>], iteration_bounds = array<i64: 4>, scalar_prefetch = 0 : i64, scratch_operands = 0 : i64, tpu.core_type = #tpu.core_type<tc>, window_params = [{transform_indices = @transform_0, window_bounds = array<i64: 224, 28>}, {pipeline_mode = #tpu.pipeline_mode<synchronous>, transform_indices = @transform_1, window_bounds = array<i64: 5, 28, 256>}, {pipeline_mode = #tpu.pipeline_mode<synchronous>, transform_indices = @transform_2, window_bounds = array<i64: 1, 256>}, {pipeline_mode = #tpu.pipeline_mode<synchronous>, transform_indices = @transform_3, window_bounds = array<i64: 96, 224>}, {pipeline_mode = #tpu.pipeline_mode<synchronous>, transform_indices = @transform_4, window_bounds = array<i64: 5, 256, 128>}, {pipeline_mode = #tpu.pipeline_mode<synchronous>, transform_indices = @transform_5, window_bounds = array<i64: 1, 128>}, {pipeline_mode = #tpu.pipeline_mode<synchronous>, transform_indices = @transform_6, window_bounds = array<i64: 32, 64>}, {pipeline_mode = #tpu.pipeline_mode<synchronous>, transform_indices = @transform_7, window_bounds = array<i64: 4, 128, 128>}, {pipeline_mode = #tpu.pipeline_mode<synchronous>, transform_indices = @transform_8, window_bounds = array<i64: 1, 128>}, {pipeline_mode = #tpu.pipeline_mode<synchronous>, transform_indices = @transform_9, window_bounds = array<i64: 128, 128>}, {pipeline_mode = #tpu.pipeline_mode<synchronous>, transform_indices = @transform_10, window_bounds = array<i64: 1, 128>}, {pipeline_mode = #tpu.pipeline_mode<synchronous>, transform_indices = @transform_11, window_bounds = array<i64: 128, 128>}, {pipeline_mode = #tpu.pipeline_mode<synchronous>, transform_indices = @transform_12, window_bounds = array<i64: 1, 128>}, {transform_indices = @transform_13, window_bounds = array<i64: 8, 128>}]} {
    %c0 = arith.constant 0 : index
    %c0_0 = arith.constant 0 : index
    %0 = vector.load %arg1[%c0, %c0_0] : memref<224x28xf32, #tpu.memory_space<vmem>>, vector<224x28xf32>
    %c0_1 = arith.constant 0 : index
    %c0_2 = arith.constant 0 : index
    %1 = vector.load %arg3[%c0_1, %c0_2] : memref<1x256xf32, #tpu.memory_space<vmem>>, vector<1x256xf32>
    %2 = vector.shape_cast %1 : vector<1x256xf32> to vector<1x256xf32>
    %3 = vector.broadcast %2 : vector<1x256xf32> to vector<224x256xf32>
    %c0_3 = arith.constant 0 : index
    %c0_4 = arith.constant 0 : index
    %c0_5 = arith.constant 0 : index
    %4 = vector.load %arg2[%c0_3, %c0_4, %c0_5] : memref<5x28x256xf32, #tpu.memory_space<vmem>>, vector<1x28x256xf32>
    %5 = vector.shape_cast %4 : vector<1x28x256xf32> to vector<28x256xf32>
    %cst = arith.constant dense<0.000000e+00> : vector<224x256xf32>
    %6 = tpu.matmul %0, %5, %cst {dimension_numbers = #tpu.dot_dimension_numbers<[1], [0], [0], [1], [0, 0, 1, 1], [], []>} : vector<224x28xf32>, vector<28x256xf32>, vector<224x256xf32> -> vector<224x256xf32>
    %7 = arith.addf %3, %6 : vector<224x256xf32>
    %c223_i32 = arith.constant 223 : i32
    %8 = tpu.dynamic_rotate %0 by %c223_i32 dim 0 : vector<224x28xf32>, i32 -> vector<224x28xf32>
    %c1 = arith.constant 1 : index
    %c0_6 = arith.constant 0 : index
    %c0_7 = arith.constant 0 : index
    %9 = vector.load %arg2[%c1, %c0_6, %c0_7] : memref<5x28x256xf32, #tpu.memory_space<vmem>>, vector<1x28x256xf32>
    %10 = vector.shape_cast %9 : vector<1x28x256xf32> to vector<28x256xf32>
    %cst_8 = arith.constant dense<0.000000e+00> : vector<224x256xf32>
    %11 = tpu.matmul %8, %10, %cst_8 {dimension_numbers = #tpu.dot_dimension_numbers<[1], [0], [0], [1], [0, 0, 1, 1], [], []>} : vector<224x28xf32>, vector<28x256xf32>, vector<224x256xf32> -> vector<224x256xf32>
    %12 = arith.addf %7, %11 : vector<224x256xf32>
    %c222_i32 = arith.constant 222 : i32
    %13 = tpu.dynamic_rotate %0 by %c222_i32 dim 0 : vector<224x28xf32>, i32 -> vector<224x28xf32>
    %c2 = arith.constant 2 : index
    %c0_9 = arith.constant 0 : index
    %c0_10 = arith.constant 0 : index
    %14 = vector.load %arg2[%c2, %c0_9, %c0_10] : memref<5x28x256xf32, #tpu.memory_space<vmem>>, vector<1x28x256xf32>
    %15 = vector.shape_cast %14 : vector<1x28x256xf32> to vector<28x256xf32>
    %cst_11 = arith.constant dense<0.000000e+00> : vector<224x256xf32>
    %16 = tpu.matmul %13, %15, %cst_11 {dimension_numbers = #tpu.dot_dimension_numbers<[1], [0], [0], [1], [0, 0, 1, 1], [], []>} : vector<224x28xf32>, vector<28x256xf32>, vector<224x256xf32> -> vector<224x256xf32>
    %17 = arith.addf %12, %16 : vector<224x256xf32>
    %c221_i32 = arith.constant 221 : i32
    %18 = tpu.dynamic_rotate %0 by %c221_i32 dim 0 : vector<224x28xf32>, i32 -> vector<224x28xf32>
    %c3 = arith.constant 3 : index
    %c0_12 = arith.constant 0 : index
    %c0_13 = arith.constant 0 : index
    %19 = vector.load %arg2[%c3, %c0_12, %c0_13] : memref<5x28x256xf32, #tpu.memory_space<vmem>>, vector<1x28x256xf32>
    %20 = vector.shape_cast %19 : vector<1x28x256xf32> to vector<28x256xf32>
    %cst_14 = arith.constant dense<0.000000e+00> : vector<224x256xf32>
    %21 = tpu.matmul %18, %20, %cst_14 {dimension_numbers = #tpu.dot_dimension_numbers<[1], [0], [0], [1], [0, 0, 1, 1], [], []>} : vector<224x28xf32>, vector<28x256xf32>, vector<224x256xf32> -> vector<224x256xf32>
    %22 = arith.addf %17, %21 : vector<224x256xf32>
    %c220_i32 = arith.constant 220 : i32
    %23 = tpu.dynamic_rotate %0 by %c220_i32 dim 0 : vector<224x28xf32>, i32 -> vector<224x28xf32>
    %c4 = arith.constant 4 : index
    %c0_15 = arith.constant 0 : index
    %c0_16 = arith.constant 0 : index
    %24 = vector.load %arg2[%c4, %c0_15, %c0_16] : memref<5x28x256xf32, #tpu.memory_space<vmem>>, vector<1x28x256xf32>
    %25 = vector.shape_cast %24 : vector<1x28x256xf32> to vector<28x256xf32>
    %cst_17 = arith.constant dense<0.000000e+00> : vector<224x256xf32>
    %26 = tpu.matmul %23, %25, %cst_17 {dimension_numbers = #tpu.dot_dimension_numbers<[1], [0], [0], [1], [0, 0, 1, 1], [], []>} : vector<224x28xf32>, vector<28x256xf32>, vector<224x256xf32> -> vector<224x256xf32>
    %27 = arith.addf %22, %26 : vector<224x256xf32>
    %cst_18 = arith.constant 5.000000e-01 : f32
    %28 = vector.broadcast %cst_18 : f32 to vector<224x256xf32>
    %29 = arith.mulf %28, %27 : vector<224x256xf32>
    %30 = math.tanh %29 : vector<224x256xf32>
    %cst_19 = arith.constant 1.000000e+00 : f32
    %31 = vector.broadcast %cst_19 : f32 to vector<224x256xf32>
    %32 = arith.addf %30, %31 : vector<224x256xf32>
    %cst_20 = arith.constant 5.000000e-01 : f32
    %33 = vector.broadcast %cst_20 : f32 to vector<224x256xf32>
    %34 = arith.mulf %33, %32 : vector<224x256xf32>
    %c1_i32 = arith.constant 1 : i32
    %35 = tpu.dynamic_rotate %34 by %c1_i32 dim 0 : vector<224x256xf32>, i32 -> vector<224x256xf32>
    %36 = arith.maximumf %34, %35 : vector<224x256xf32>
    %c1_i32_21 = arith.constant 1 : i32
    %37 = tpu.dynamic_rotate %36 by %c1_i32_21 dim 1 : vector<224x256xf32>, i32 -> vector<224x256xf32>
    %38 = arith.maximumf %36, %37 : vector<224x256xf32>
    %c0_22 = arith.constant 0 : index
    %c0_23 = arith.constant 0 : index
    %39 = vector.load %arg4[%c0_22, %c0_23] : memref<96x224xf32, #tpu.memory_space<vmem>>, vector<96x224xf32>
    %cst_24 = arith.constant dense<0.000000e+00> : vector<96x256xf32>
    %40 = tpu.matmul %39, %38, %cst_24 {dimension_numbers = #tpu.dot_dimension_numbers<[1], [0], [0], [1], [0, 0, 1, 1], [], []>} : vector<96x224xf32>, vector<224x256xf32>, vector<96x256xf32> -> vector<96x256xf32>
    %c0_25 = arith.constant 0 : index
    %c0_26 = arith.constant 0 : index
    %41 = vector.load %arg6[%c0_25, %c0_26] : memref<1x128xf32, #tpu.memory_space<vmem>>, vector<1x128xf32>
    %42 = vector.shape_cast %41 : vector<1x128xf32> to vector<1x128xf32>
    %43 = vector.broadcast %42 : vector<1x128xf32> to vector<64x128xf32>
    %44 = vector.extract_strided_slice %40 {offsets = [0, 0], sizes = [64, 256], strides = [1, 1]} : vector<96x256xf32> to vector<64x256xf32>
    %c0_27 = arith.constant 0 : index
    %c0_28 = arith.constant 0 : index
    %c0_29 = arith.constant 0 : index
    %45 = vector.load %arg5[%c0_27, %c0_28, %c0_29] : memref<5x256x128xf32, #tpu.memory_space<vmem>>, vector<1x256x128xf32>
    %46 = vector.shape_cast %45 : vector<1x256x128xf32> to vector<256x128xf32>
    %cst_30 = arith.constant dense<0.000000e+00> : vector<64x128xf32>
    %47 = tpu.matmul %44, %46, %cst_30 {dimension_numbers = #tpu.dot_dimension_numbers<[1], [0], [0], [1], [0, 0, 1, 1], [], []>} : vector<64x256xf32>, vector<256x128xf32>, vector<64x128xf32> -> vector<64x128xf32>
    %48 = arith.addf %43, %47 : vector<64x128xf32>
    %49 = vector.extract_strided_slice %40 {offsets = [8, 0], sizes = [64, 256], strides = [1, 1]} : vector<96x256xf32> to vector<64x256xf32>
    %c1_31 = arith.constant 1 : index
    %c0_32 = arith.constant 0 : index
    %c0_33 = arith.constant 0 : index
    %50 = vector.load %arg5[%c1_31, %c0_32, %c0_33] : memref<5x256x128xf32, #tpu.memory_space<vmem>>, vector<1x256x128xf32>
    %51 = vector.shape_cast %50 : vector<1x256x128xf32> to vector<256x128xf32>
    %cst_34 = arith.constant dense<0.000000e+00> : vector<64x128xf32>
    %52 = tpu.matmul %49, %51, %cst_34 {dimension_numbers = #tpu.dot_dimension_numbers<[1], [0], [0], [1], [0, 0, 1, 1], [], []>} : vector<64x256xf32>, vector<256x128xf32>, vector<64x128xf32> -> vector<64x128xf32>
    %53 = arith.addf %48, %52 : vector<64x128xf32>
    %54 = vector.extract_strided_slice %40 {offsets = [16, 0], sizes = [64, 256], strides = [1, 1]} : vector<96x256xf32> to vector<64x256xf32>
    %c2_35 = arith.constant 2 : index
    %c0_36 = arith.constant 0 : index
    %c0_37 = arith.constant 0 : index
    %55 = vector.load %arg5[%c2_35, %c0_36, %c0_37] : memref<5x256x128xf32, #tpu.memory_space<vmem>>, vector<1x256x128xf32>
    %56 = vector.shape_cast %55 : vector<1x256x128xf32> to vector<256x128xf32>
    %cst_38 = arith.constant dense<0.000000e+00> : vector<64x128xf32>
    %57 = tpu.matmul %54, %56, %cst_38 {dimension_numbers = #tpu.dot_dimension_numbers<[1], [0], [0], [1], [0, 0, 1, 1], [], []>} : vector<64x256xf32>, vector<256x128xf32>, vector<64x128xf32> -> vector<64x128xf32>
    %58 = arith.addf %53, %57 : vector<64x128xf32>
    %59 = vector.extract_strided_slice %40 {offsets = [24, 0], sizes = [64, 256], strides = [1, 1]} : vector<96x256xf32> to vector<64x256xf32>
    %c3_39 = arith.constant 3 : index
    %c0_40 = arith.constant 0 : index
    %c0_41 = arith.constant 0 : index
    %60 = vector.load %arg5[%c3_39, %c0_40, %c0_41] : memref<5x256x128xf32, #tpu.memory_space<vmem>>, vector<1x256x128xf32>
    %61 = vector.shape_cast %60 : vector<1x256x128xf32> to vector<256x128xf32>
    %cst_42 = arith.constant dense<0.000000e+00> : vector<64x128xf32>
    %62 = tpu.matmul %59, %61, %cst_42 {dimension_numbers = #tpu.dot_dimension_numbers<[1], [0], [0], [1], [0, 0, 1, 1], [], []>} : vector<64x256xf32>, vector<256x128xf32>, vector<64x128xf32> -> vector<64x128xf32>
    %63 = arith.addf %58, %62 : vector<64x128xf32>
    %64 = vector.extract_strided_slice %40 {offsets = [32, 0], sizes = [64, 256], strides = [1, 1]} : vector<96x256xf32> to vector<64x256xf32>
    %c4_43 = arith.constant 4 : index
    %c0_44 = arith.constant 0 : index
    %c0_45 = arith.constant 0 : index
    %65 = vector.load %arg5[%c4_43, %c0_44, %c0_45] : memref<5x256x128xf32, #tpu.memory_space<vmem>>, vector<1x256x128xf32>
    %66 = vector.shape_cast %65 : vector<1x256x128xf32> to vector<256x128xf32>
    %cst_46 = arith.constant dense<0.000000e+00> : vector<64x128xf32>
    %67 = tpu.matmul %64, %66, %cst_46 {dimension_numbers = #tpu.dot_dimension_numbers<[1], [0], [0], [1], [0, 0, 1, 1], [], []>} : vector<64x256xf32>, vector<256x128xf32>, vector<64x128xf32> -> vector<64x128xf32>
    %68 = arith.addf %63, %67 : vector<64x128xf32>
    %cst_47 = arith.constant 5.000000e-01 : f32
    %69 = vector.broadcast %cst_47 : f32 to vector<64x128xf32>
    %70 = arith.mulf %69, %68 : vector<64x128xf32>
    %71 = math.tanh %70 : vector<64x128xf32>
    %cst_48 = arith.constant 1.000000e+00 : f32
    %72 = vector.broadcast %cst_48 : f32 to vector<64x128xf32>
    %73 = arith.addf %71, %72 : vector<64x128xf32>
    %cst_49 = arith.constant 5.000000e-01 : f32
    %74 = vector.broadcast %cst_49 : f32 to vector<64x128xf32>
    %75 = arith.mulf %74, %73 : vector<64x128xf32>
    %c8_i32 = arith.constant 8 : i32
    %76 = tpu.dynamic_rotate %75 by %c8_i32 dim 0 : vector<64x128xf32>, i32 -> vector<64x128xf32>
    %77 = arith.maximumf %75, %76 : vector<64x128xf32>
    %c1_i32_50 = arith.constant 1 : i32
    %78 = tpu.dynamic_rotate %77 by %c1_i32_50 dim 1 : vector<64x128xf32>, i32 -> vector<64x128xf32>
    %79 = arith.maximumf %77, %78 : vector<64x128xf32>
    %c0_51 = arith.constant 0 : index
    %c0_52 = arith.constant 0 : index
    %80 = vector.load %arg7[%c0_51, %c0_52] : memref<32x64xf32, #tpu.memory_space<vmem>>, vector<32x64xf32>
    %cst_53 = arith.constant dense<0.000000e+00> : vector<32x128xf32>
    %81 = tpu.matmul %80, %79, %cst_53 {dimension_numbers = #tpu.dot_dimension_numbers<[1], [0], [0], [1], [0, 0, 1, 1], [], []>} : vector<32x64xf32>, vector<64x128xf32>, vector<32x128xf32> -> vector<32x128xf32>
    %c0_54 = arith.constant 0 : index
    %c0_55 = arith.constant 0 : index
    %82 = vector.load %arg9[%c0_54, %c0_55] : memref<1x128xf32, #tpu.memory_space<vmem>>, vector<1x128xf32>
    %83 = vector.shape_cast %82 : vector<1x128xf32> to vector<1x128xf32>
    %84 = vector.broadcast %83 : vector<1x128xf32> to vector<8x128xf32>
    %85 = vector.extract_strided_slice %81 {offsets = [0, 0], sizes = [8, 128], strides = [1, 1]} : vector<32x128xf32> to vector<8x128xf32>
    %c0_56 = arith.constant 0 : index
    %c0_57 = arith.constant 0 : index
    %c0_58 = arith.constant 0 : index
    %86 = vector.load %arg8[%c0_56, %c0_57, %c0_58] : memref<4x128x128xf32, #tpu.memory_space<vmem>>, vector<1x128x128xf32>
    %87 = vector.shape_cast %86 : vector<1x128x128xf32> to vector<128x128xf32>
    %cst_59 = arith.constant dense<0.000000e+00> : vector<8x128xf32>
    %88 = tpu.matmul %85, %87, %cst_59 {dimension_numbers = #tpu.dot_dimension_numbers<[1], [0], [0], [1], [0, 0, 1, 1], [], []>} : vector<8x128xf32>, vector<128x128xf32>, vector<8x128xf32> -> vector<8x128xf32>
    %89 = arith.addf %84, %88 : vector<8x128xf32>
    %90 = vector.extract_strided_slice %81 {offsets = [8, 0], sizes = [8, 128], strides = [1, 1]} : vector<32x128xf32> to vector<8x128xf32>
    %c1_60 = arith.constant 1 : index
    %c0_61 = arith.constant 0 : index
    %c0_62 = arith.constant 0 : index
    %91 = vector.load %arg8[%c1_60, %c0_61, %c0_62] : memref<4x128x128xf32, #tpu.memory_space<vmem>>, vector<1x128x128xf32>
    %92 = vector.shape_cast %91 : vector<1x128x128xf32> to vector<128x128xf32>
    %cst_63 = arith.constant dense<0.000000e+00> : vector<8x128xf32>
    %93 = tpu.matmul %90, %92, %cst_63 {dimension_numbers = #tpu.dot_dimension_numbers<[1], [0], [0], [1], [0, 0, 1, 1], [], []>} : vector<8x128xf32>, vector<128x128xf32>, vector<8x128xf32> -> vector<8x128xf32>
    %94 = arith.addf %89, %93 : vector<8x128xf32>
    %95 = vector.extract_strided_slice %81 {offsets = [16, 0], sizes = [8, 128], strides = [1, 1]} : vector<32x128xf32> to vector<8x128xf32>
    %c2_64 = arith.constant 2 : index
    %c0_65 = arith.constant 0 : index
    %c0_66 = arith.constant 0 : index
    %96 = vector.load %arg8[%c2_64, %c0_65, %c0_66] : memref<4x128x128xf32, #tpu.memory_space<vmem>>, vector<1x128x128xf32>
    %97 = vector.shape_cast %96 : vector<1x128x128xf32> to vector<128x128xf32>
    %cst_67 = arith.constant dense<0.000000e+00> : vector<8x128xf32>
    %98 = tpu.matmul %95, %97, %cst_67 {dimension_numbers = #tpu.dot_dimension_numbers<[1], [0], [0], [1], [0, 0, 1, 1], [], []>} : vector<8x128xf32>, vector<128x128xf32>, vector<8x128xf32> -> vector<8x128xf32>
    %99 = arith.addf %94, %98 : vector<8x128xf32>
    %100 = vector.extract_strided_slice %81 {offsets = [24, 0], sizes = [8, 128], strides = [1, 1]} : vector<32x128xf32> to vector<8x128xf32>
    %c3_68 = arith.constant 3 : index
    %c0_69 = arith.constant 0 : index
    %c0_70 = arith.constant 0 : index
    %101 = vector.load %arg8[%c3_68, %c0_69, %c0_70] : memref<4x128x128xf32, #tpu.memory_space<vmem>>, vector<1x128x128xf32>
    %102 = vector.shape_cast %101 : vector<1x128x128xf32> to vector<128x128xf32>
    %cst_71 = arith.constant dense<0.000000e+00> : vector<8x128xf32>
    %103 = tpu.matmul %100, %102, %cst_71 {dimension_numbers = #tpu.dot_dimension_numbers<[1], [0], [0], [1], [0, 0, 1, 1], [], []>} : vector<8x128xf32>, vector<128x128xf32>, vector<8x128xf32> -> vector<8x128xf32>
    %104 = arith.addf %99, %103 : vector<8x128xf32>
    %cst_72 = arith.constant 5.000000e-01 : f32
    %105 = vector.broadcast %cst_72 : f32 to vector<8x128xf32>
    %106 = arith.mulf %105, %104 : vector<8x128xf32>
    %107 = math.tanh %106 : vector<8x128xf32>
    %cst_73 = arith.constant 1.000000e+00 : f32
    %108 = vector.broadcast %cst_73 : f32 to vector<8x128xf32>
    %109 = arith.addf %107, %108 : vector<8x128xf32>
    %cst_74 = arith.constant 5.000000e-01 : f32
    %110 = vector.broadcast %cst_74 : f32 to vector<8x128xf32>
    %111 = arith.mulf %110, %109 : vector<8x128xf32>
    %c0_75 = arith.constant 0 : index
    %c0_76 = arith.constant 0 : index
    %112 = vector.load %arg10[%c0_75, %c0_76] : memref<128x128xf32, #tpu.memory_space<vmem>>, vector<128x128xf32>
    %cst_77 = arith.constant dense<0.000000e+00> : vector<8x128xf32>
    %113 = tpu.matmul %111, %112, %cst_77 {dimension_numbers = #tpu.dot_dimension_numbers<[1], [0], [0], [1], [0, 0, 1, 1], [], []>} : vector<8x128xf32>, vector<128x128xf32>, vector<8x128xf32> -> vector<8x128xf32>
    %c0_78 = arith.constant 0 : index
    %c0_79 = arith.constant 0 : index
    %114 = vector.load %arg11[%c0_78, %c0_79] : memref<1x128xf32, #tpu.memory_space<vmem>>, vector<1x128xf32>
    %115 = vector.broadcast %114 : vector<1x128xf32> to vector<8x128xf32>
    %116 = arith.addf %113, %115 : vector<8x128xf32>
    %cst_80 = arith.constant 5.000000e-01 : f32
    %117 = vector.broadcast %cst_80 : f32 to vector<8x128xf32>
    %118 = arith.mulf %117, %116 : vector<8x128xf32>
    %119 = math.tanh %118 : vector<8x128xf32>
    %cst_81 = arith.constant 1.000000e+00 : f32
    %120 = vector.broadcast %cst_81 : f32 to vector<8x128xf32>
    %121 = arith.addf %119, %120 : vector<8x128xf32>
    %cst_82 = arith.constant 5.000000e-01 : f32
    %122 = vector.broadcast %cst_82 : f32 to vector<8x128xf32>
    %123 = arith.mulf %122, %121 : vector<8x128xf32>
    %c0_83 = arith.constant 0 : index
    %c0_84 = arith.constant 0 : index
    %124 = vector.load %arg12[%c0_83, %c0_84] : memref<128x128xf32, #tpu.memory_space<vmem>>, vector<128x128xf32>
    %cst_85 = arith.constant dense<0.000000e+00> : vector<8x128xf32>
    %125 = tpu.matmul %123, %124, %cst_85 {dimension_numbers = #tpu.dot_dimension_numbers<[1], [0], [0], [1], [0, 0, 1, 1], [], []>} : vector<8x128xf32>, vector<128x128xf32>, vector<8x128xf32> -> vector<8x128xf32>
    %c0_86 = arith.constant 0 : index
    %c0_87 = arith.constant 0 : index
    %126 = vector.load %arg13[%c0_86, %c0_87] : memref<1x128xf32, #tpu.memory_space<vmem>>, vector<1x128xf32>
    %127 = vector.broadcast %126 : vector<1x128xf32> to vector<8x128xf32>
    %128 = arith.addf %125, %127 : vector<8x128xf32>
    %c0_88 = arith.constant 0 : index
    %c0_89 = arith.constant 0 : index
    %129 = vector.load %arg14[%c0_88, %c0_89] : memref<8x128xf32, #tpu.memory_space<vmem>>, vector<8x128xf32>
    tpu.vector_store %arg14[%c0_88, %c0_89], %128 {strides = array<i32>} : memref<8x128xf32, #tpu.memory_space<vmem>>, vector<8x128xf32>,
    return
  }
  func.func @transform_0(%arg0: i32) -> (i32, i32) {
    %c0_i32 = arith.constant 0 : i32
    %c0_i32_0 = arith.constant 0 : i32
    return %arg0, %c0_i32 : i32, i32
  }
  func.func @transform_1(%arg0: i32) -> (i32, i32, i32) {
    %c0_i32 = arith.constant 0 : i32
    %c0_i32_0 = arith.constant 0 : i32
    %c0_i32_1 = arith.constant 0 : i32
    %c0_i32_2 = arith.constant 0 : i32
    return %c0_i32, %c0_i32_0, %c0_i32_1 : i32, i32, i32
  }
  func.func @transform_2(%arg0: i32) -> (i32, i32) {
    %c0_i32 = arith.constant 0 : i32
    %c0_i32_0 = arith.constant 0 : i32
    %c0_i32_1 = arith.constant 0 : i32
    return %c0_i32, %c0_i32_0 : i32, i32
  }
  func.func @transform_3(%arg0: i32) -> (i32, i32) {
    %c0_i32 = arith.constant 0 : i32
    %c0_i32_0 = arith.constant 0 : i32
    %c0_i32_1 = arith.constant 0 : i32
    return %c0_i32, %c0_i32_0 : i32, i32
  }
  func.func @transform_4(%arg0: i32) -> (i32, i32, i32) {
    %c0_i32 = arith.constant 0 : i32
    %c0_i32_0 = arith.constant 0 : i32
    %c0_i32_1 = arith.constant 0 : i32
    %c0_i32_2 = arith.constant 0 : i32
    return %c0_i32, %c0_i32_0, %c0_i32_1 : i32, i32, i32
  }
  func.func @transform_5(%arg0: i32) -> (i32, i32) {
    %c0_i32 = arith.constant 0 : i32
    %c0_i32_0 = arith.constant 0 : i32
    %c0_i32_1 = arith.constant 0 : i32
    return %c0_i32, %c0_i32_0 : i32, i32
  }
  func.func @transform_6(%arg0: i32) -> (i32, i32) {
    %c0_i32 = arith.constant 0 : i32
    %c0_i32_0 = arith.constant 0 : i32
    %c0_i32_1 = arith.constant 0 : i32
    return %c0_i32, %c0_i32_0 : i32, i32
  }
  func.func @transform_7(%arg0: i32) -> (i32, i32, i32) {
    %c0_i32 = arith.constant 0 : i32
    %c0_i32_0 = arith.constant 0 : i32
    %c0_i32_1 = arith.constant 0 : i32
    %c0_i32_2 = arith.constant 0 : i32
    return %c0_i32, %c0_i32_0, %c0_i32_1 : i32, i32, i32
  }
  func.func @transform_8(%arg0: i32) -> (i32, i32) {
    %c0_i32 = arith.constant 0 : i32
    %c0_i32_0 = arith.constant 0 : i32
    %c0_i32_1 = arith.constant 0 : i32
    return %c0_i32, %c0_i32_0 : i32, i32
  }
  func.func @transform_9(%arg0: i32) -> (i32, i32) {
    %c0_i32 = arith.constant 0 : i32
    %c0_i32_0 = arith.constant 0 : i32
    %c0_i32_1 = arith.constant 0 : i32
    return %c0_i32, %c0_i32_0 : i32, i32
  }
  func.func @transform_10(%arg0: i32) -> (i32, i32) {
    %c0_i32 = arith.constant 0 : i32
    %c0_i32_0 = arith.constant 0 : i32
    %c0_i32_1 = arith.constant 0 : i32
    return %c0_i32, %c0_i32_0 : i32, i32
  }
  func.func @transform_11(%arg0: i32) -> (i32, i32) {
    %c0_i32 = arith.constant 0 : i32
    %c0_i32_0 = arith.constant 0 : i32
    %c0_i32_1 = arith.constant 0 : i32
    return %c0_i32, %c0_i32_0 : i32, i32
  }
  func.func @transform_12(%arg0: i32) -> (i32, i32) {
    %c0_i32 = arith.constant 0 : i32
    %c0_i32_0 = arith.constant 0 : i32
    %c0_i32_1 = arith.constant 0 : i32
    return %c0_i32, %c0_i32_0 : i32, i32
  }
  func.func @transform_13(%arg0: i32) -> (i32, i32) {
    %c0_i32 = arith.constant 0 : i32
    %c0_i32_0 = arith.constant 0 : i32
    return %arg0, %c0_i32 : i32, i32
  }
}

</mosaic_0001>

<llo_original>
// kernel: lenet_forward.1
$region0: #{lenet_forward.1}
  #allocation0 [shape = 'u32[]', space=smem, size = 0x4, offset = 0x4, fixed_abs, tag = 'smem constant byte address 0x4 - core index']
  #allocation1 [shape = 'u32[144,128]{1,0:T(1,128)}', space=vmem, size = 0x12000, scoped, tag = 'internal scratch']
  %s0 = inlined_call_operand.vmem [shape: f32[896,28], index: 0, kind: input, shape index: {}]
  %s1 = inlined_call_operand.vmem [shape: f32[5,28,256], index: 1, kind: input, shape index: {}]
  %s2 = inlined_call_operand.vmem [shape: f32[1,256], index: 2, kind: input, shape index: {}]
  %s3 = inlined_call_operand.vmem [shape: f32[96,224], index: 3, kind: input, shape index: {}]
  %s4 = inlined_call_operand.vmem [shape: f32[5,256,128], index: 4, kind: input, shape index: {}]
  %s5 = inlined_call_operand.vmem [shape: f32[1,128], index: 5, kind: input, shape index: {}]
  %s6 = inlined_call_operand.vmem [shape: f32[32,64], index: 6, kind: input, shape index: {}]
  %s7 = inlined_call_operand.vmem [shape: f32[4,128,128], index: 7, kind: input, shape index: {}]
  %s8 = inlined_call_operand.vmem [shape: f32[1,128], index: 8, kind: input, shape index: {}]
  %s9 = inlined_call_operand.vmem [shape: f32[128,128], index: 9, kind: input, shape index: {}]
  %s10 = inlined_call_operand.vmem [shape: f32[1,128], index: 10, kind: input, shape index: {}]
  %s11 = inlined_call_operand.vmem [shape: f32[128,128], index: 11, kind: input, shape index: {}]
  %s12 = inlined_call_operand.vmem [shape: f32[1,128], index: 12, kind: input, shape index: {}]
  %s13 = inlined_call_operand.vmem [shape: f32[32,128], index: 13, kind: output, shape index: {}]
  %s14 = sld [smem:[#allocation0]]
  $region85: #{lenet_forward.1} parent=0
    _
  %s16 = ssub.s32 1, %s14
  %s17 = scalar_select 0, %s16, %s14
  loop: start=0, step=1, limit=6
  $region2: #{lenet_forward.1} parent=0 // loop_pre_header
    _
  $region3: #{lenet_forward.1} parent=0 // loop_header
    %s19 = sphi 0, %s23
    %p20 = scmp.ge.s32.totalorder %s19, 6
    %s29 = sphi 0, %s31
    %s32 = sphi 0, %s29
    %s33 = sphi 0, %s32
    %s49 = sphi 0, %s33
    %s53 = sphi 0, %s53
    %s55 = sphi 0, %s53
    %s56 = sphi 0, %s55
    %s70 = sphi 0, %s56
    %s74 = sphi 0, %s74
    %s76 = sphi 0, %s74
    %s77 = sphi 0, %s76
    %s91 = sphi 0, %s77
    %s95 = sphi 0, %s95
    %s97 = sphi 0, %s95
    %s98 = sphi 0, %s97
    %s112 = sphi 0, %s98
    %s116 = sphi 0, %s116
    %s118 = sphi 0, %s116
    %s119 = sphi 0, %s118
    %s133 = sphi 0, %s119
    %s137 = sphi 0, %s137
    %s139 = sphi 0, %s137
    %s140 = sphi 0, %s139
    %s154 = sphi 0, %s140
    %s158 = sphi 0, %s158
    %s160 = sphi 0, %s158
    %s161 = sphi 0, %s160
    %s175 = sphi 0, %s161
    %s179 = sphi 0, %s179
    %s181 = sphi 0, %s179
    %s182 = sphi 0, %s181
    %s196 = sphi 0, %s182
    %s200 = sphi 0, %s200
    %s202 = sphi 0, %s200
    %s203 = sphi 0, %s202
    %s217 = sphi 0, %s203
    %s221 = sphi 0, %s221
    %s223 = sphi 0, %s221
    %s224 = sphi 0, %s223
    %s238 = sphi 0, %s224
    %s242 = sphi 0, %s242
    %s244 = sphi 0, %s242
    %s245 = sphi 0, %s244
    %s259 = sphi 0, %s245
    %s263 = sphi 0, %s263
    %s265 = sphi 0, %s263
    %s266 = sphi 0, %s265
    %s280 = sphi 0, %s266
    %s284 = sphi 0, %s284
    %s286 = sphi 0, %s284
    %s287 = sphi 0, %s286
    %s301 = sphi 0, %s287
    %s307 = sphi 0, %s309
    %s310 = sphi 0, %s307
    %s311 = sphi 0, %s310
    %s327 = sphi 0, %s311
  $region4: #{lenet_forward.1} parent=0 // loop_header_branch
    %22 = sbr.rel (%p20) target = $region8
  $region5: #{lenet_forward.1} parent=0 // loop_body
    %s24 = ssub.s32 %s19, 1
    %s25 = ssub.s32 %s19, 2
    %s26 = sadd.s32 %s19, 1
    %s27 = ssub.s32 %s19, %s26
    %p28 = scmp.eq.s32.totalorder %s27, 0
    %s30 = sadd.s32 %s29, 1
    %s31 = scalar_select %p28, %s29, %s30
    %p34 = pneg %p28
    %p35 = scmp.eq.s32.totalorder %s19, 3
    %p36 = por %p34, %p35
    %p37 = scmp.ne.s32.totalorder %s29, %s32
    %p38 = scmp.eq.s32.totalorder %s19, 0
    %p39 = por %p37, %p38
    %p40 = scmp.ne.s32.totalorder %s29, %s32
    %p41 = scmp.eq.s32.totalorder %s24, 3
    %p42 = por %p40, %p41
    %p43 = scmp.ne.s32.totalorder %s32, %s33
    %p44 = scmp.eq.s32.totalorder %s24, 0
    %p45 = por %p43, %p44
    %p46 = scmp.ne.s32.totalorder %s32, %s33
    %p47 = scmp.eq.s32.totalorder %s25, 3
    %p48 = por %p46, %p47
    %p50 = scmp.ne.s32.totalorder %s33, %s49
    %p51 = scmp.eq.s32.totalorder %s25, 0
    %p52 = por %p50, %p51
    %s54 = sadd.s32 %s53, 1
    %p57 = scmp.eq.s32.totalorder %s19, 3
    %p58 = scmp.ne.s32.totalorder %s53, %s55
    %p59 = scmp.eq.s32.totalorder %s19, 0
    %p60 = por %p58, %p59
    %p61 = scmp.ne.s32.totalorder %s53, %s55
    %p62 = scmp.eq.s32.totalorder %s24, 3
    %p63 = por %p61, %p62
    %p64 = scmp.ne.s32.totalorder %s55, %s56
    %p65 = scmp.eq.s32.totalorder %s24, 0
    %p66 = por %p64, %p65
    %p67 = scmp.ne.s32.totalorder %s55, %s56
    %p68 = scmp.eq.s32.totalorder %s25, 3
    %p69 = por %p67, %p68
    %p71 = scmp.ne.s32.totalorder %s56, %s70
    %p72 = scmp.eq.s32.totalorder %s25, 0
    %p73 = por %p71, %p72
    %s75 = sadd.s32 %s74, 1
    %p78 = scmp.eq.s32.totalorder %s19, 3
    %p79 = scmp.ne.s32.totalorder %s74, %s76
    %p80 = scmp.eq.s32.totalorder %s19, 0
    %p81 = por %p79, %p80
    %p82 = scmp.ne.s32.totalorder %s74, %s76
    %p83 = scmp.eq.s32.totalorder %s24, 3
    %p84 = por %p82, %p83
    %p85 = scmp.ne.s32.totalorder %s76, %s77
    %p86 = scmp.eq.s32.totalorder %s24, 0
    %p87 = por %p85, %p86
    %p88 = scmp.ne.s32.totalorder %s76, %s77
    %p89 = scmp.eq.s32.totalorder %s25, 3
    %p90 = por %p88, %p89
    %p92 = scmp.ne.s32.totalorder %s77, %s91
    %p93 = scmp.eq.s32.totalorder %s25, 0
    %p94 = por %p92, %p93
    %s96 = sadd.s32 %s95, 1
    %p99 = scmp.eq.s32.totalorder %s19, 3
    %p100 = scmp.ne.s32.totalorder %s95, %s97
    %p101 = scmp.eq.s32.totalorder %s19, 0
    %p102 = por %p100, %p101
    %p103 = scmp.ne.s32.totalorder %s95, %s97
    %p104 = scmp.eq.s32.totalorder %s24, 3
    %p105 = por %p103, %p104
    %p106 = scmp.ne.s32.totalorder %s97, %s98
    %p107 = scmp.eq.s32.totalorder %s24, 0
    %p108 = por %p106, %p107
    %p109 = scmp.ne.s32.totalorder %s97, %s98
    %p110 = scmp.eq.s32.totalorder %s25, 3
    %p111 = por %p109, %p110
    %p113 = scmp.ne.s32.totalorder %s98, %s112
    %p114 = scmp.eq.s32.totalorder %s25, 0
    %p115 = por %p113, %p114
    %s117 = sadd.s32 %s116, 1
    %p120 = scmp.eq.s32.totalorder %s19, 3
    %p121 = scmp.ne.s32.totalorder %s116, %s118
    %p122 = scmp.eq.s32.totalorder %s19, 0
    %p123 = por %p121, %p122
    %p124 = scmp.ne.s32.totalorder %s116, %s118
    %p125 = scmp.eq.s32.totalorder %s24, 3
    %p126 = por %p124, %p125
    %p127 = scmp.ne.s32.totalorder %s118, %s119
    %p128 = scmp.eq.s32.totalorder %s24, 0
    %p129 = por %p127, %p128
    %p130 = scmp.ne.s32.totalorder %s118, %s119
    %p131 = scmp.eq.s32.totalorder %s25, 3
    %p132 = por %p130, %p131
    %p134 = scmp.ne.s32.totalorder %s119, %s133
    %p135 = scmp.eq.s32.totalorder %s25, 0
    %p136 = por %p134, %p135
    %s138 = sadd.s32 %s137, 1
    %p141 = scmp.eq.s32.totalorder %s19, 3
    %p142 = scmp.ne.s32.totalorder %s137, %s139
    %p143 = scmp.eq.s32.totalorder %s19, 0
    %p144 = por %p142, %p143
    %p145 = scmp.ne.s32.totalorder %s137, %s139
    %p146 = scmp.eq.s32.totalorder %s24, 3
    %p147 = por %p145, %p146
    %p148 = scmp.ne.s32.totalorder %s139, %s140
    %p149 = scmp.eq.s32.totalorder %s24, 0
    %p150 = por %p148, %p149
    %p151 = scmp.ne.s32.totalorder %s139, %s140
    %p152 = scmp.eq.s32.totalorder %s25, 3
    %p153 = por %p151, %p152
    %p155 = scmp.ne.s32.totalorder %s140, %s154
    %p156 = scmp.eq.s32.totalorder %s25, 0
    %p157 = por %p155, %p156
    %s159 = sadd.s32 %s158, 1
    %p162 = scmp.eq.s32.totalorder %s19, 3
    %p163 = scmp.ne.s32.totalorder %s158, %s160
    %p164 = scmp.eq.s32.totalorder %s19, 0
    %p165 = por %p163, %p164
    %p166 = scmp.ne.s32.totalorder %s158, %s160
    %p167 = scmp.eq.s32.totalorder %s24, 3
    %p168 = por %p166, %p167
    %p169 = scmp.ne.s32.totalorder %s160, %s161
    %p170 = scmp.eq.s32.totalorder %s24, 0
    %p171 = por %p169, %p170
    %p172 = scmp.ne.s32.totalorder %s160, %s161
    %p173 = scmp.eq.s32.totalorder %s25, 3
    %p174 = por %p172, %p173
    %p176 = scmp.ne.s32.totalorder %s161, %s175
    %p177 = scmp.eq.s32.totalorder %s25, 0
    %p178 = por %p176, %p177
    %s180 = sadd.s32 %s179, 1
    %p183 = scmp.eq.s32.totalorder %s19, 3
    %p184 = scmp.ne.s32.totalorder %s179, %s181
    %p185 = scmp.eq.s32.totalorder %s19, 0
    %p186 = por %p184, %p185
    %p187 = scmp.ne.s32.totalorder %s179, %s181
    %p188 = scmp.eq.s32.totalorder %s24, 3
    %p189 = por %p187, %p188
    %p190 = scmp.ne.s32.totalorder %s181, %s182
    %p191 = scmp.eq.s32.totalorder %s24, 0
    %p192 = por %p190, %p191
    %p193 = scmp.ne.s32.totalorder %s181, %s182
    %p194 = scmp.eq.s32.totalorder %s25, 3
    %p195 = por %p193, %p194
    %p197 = scmp.ne.s32.totalorder %s182, %s196
    %p198 = scmp.eq.s32.totalorder %s25, 0
    %p199 = por %p197, %p198
    %s201 = sadd.s32 %s200, 1
    %p204 = scmp.eq.s32.totalorder %s19, 3
    %p205 = scmp.ne.s32.totalorder %s200, %s202
    %p206 = scmp.eq.s32.totalorder %s19, 0
    %p207 = por %p205, %p206
    %p208 = scmp.ne.s32.totalorder %s200, %s202
    %p209 = scmp.eq.s32.totalorder %s24, 3
    %p210 = por %p208, %p209
    %p211 = scmp.ne.s32.totalorder %s202, %s203
    %p212 = scmp.eq.s32.totalorder %s24, 0
    %p213 = por %p211, %p212
    %p214 = scmp.ne.s32.totalorder %s202, %s203
    %p215 = scmp.eq.s32.totalorder %s25, 3
    %p216 = por %p214, %p215
    %p218 = scmp.ne.s32.totalorder %s203, %s217
    %p219 = scmp.eq.s32.totalorder %s25, 0
    %p220 = por %p218, %p219
    %s222 = sadd.s32 %s221, 1
    %p225 = scmp.eq.s32.totalorder %s19, 3
    %p226 = scmp.ne.s32.totalorder %s221, %s223
    %p227 = scmp.eq.s32.totalorder %s19, 0
    %p228 = por %p226, %p227
    %p229 = scmp.ne.s32.totalorder %s221, %s223
    %p230 = scmp.eq.s32.totalorder %s24, 3
    %p231 = por %p229, %p230
    %p232 = scmp.ne.s32.totalorder %s223, %s224
    %p233 = scmp.eq.s32.totalorder %s24, 0
    %p234 = por %p232, %p233
    %p235 = scmp.ne.s32.totalorder %s223, %s224
    %p236 = scmp.eq.s32.totalorder %s25, 3
    %p237 = por %p235, %p236
    %p239 = scmp.ne.s32.totalorder %s224, %s238
    %p240 = scmp.eq.s32.totalorder %s25, 0
    %p241 = por %p239, %p240
    %s243 = sadd.s32 %s242, 1
    %p246 = scmp.eq.s32.totalorder %s19, 3
    %p247 = scmp.ne.s32.totalorder %s242, %s244
    %p248 = scmp.eq.s32.totalorder %s19, 0
    %p249 = por %p247, %p248
    %p250 = scmp.ne.s32.totalorder %s242, %s244
    %p251 = scmp.eq.s32.totalorder %s24, 3
    %p252 = por %p250, %p251
    %p253 = scmp.ne.s32.totalorder %s244, %s245
    %p254 = scmp.eq.s32.totalorder %s24, 0
    %p255 = por %p253, %p254
    %p256 = scmp.ne.s32.totalorder %s244, %s245
    %p257 = scmp.eq.s32.totalorder %s25, 3
    %p258 = por %p256, %p257
    %p260 = scmp.ne.s32.totalorder %s245, %s259
    %p261 = scmp.eq.s32.totalorder %s25, 0
    %p262 = por %p260, %p261
    %s264 = sadd.s32 %s263, 1
    %p267 = scmp.eq.s32.totalorder %s19, 3
    %p268 = scmp.ne.s32.totalorder %s263, %s265
    %p269 = scmp.eq.s32.totalorder %s19, 0
    %p270 = por %p268, %p269
    %p271 = scmp.ne.s32.totalorder %s263, %s265
    %p272 = scmp.eq.s32.totalorder %s24, 3
    %p273 = por %p271, %p272
    %p274 = scmp.ne.s32.totalorder %s265, %s266
    %p275 = scmp.eq.s32.totalorder %s24, 0
    %p276 = por %p274, %p275
    %p277 = scmp.ne.s32.totalorder %s265, %s266
    %p278 = scmp.eq.s32.totalorder %s25, 3
    %p279 = por %p277, %p278
    %p281 = scmp.ne.s32.totalorder %s266, %s280
    %p282 = scmp.eq.s32.totalorder %s25, 0
    %p283 = por %p281, %p282
    %s285 = sadd.s32 %s284, 1
    %p288 = scmp.eq.s32.totalorder %s19, 3
    %p289 = scmp.ne.s32.totalorder %s284, %s286
    %p290 = scmp.eq.s32.totalorder %s19, 0
    %p291 = por %p289, %p290
    %p292 = scmp.ne.s32.totalorder %s284, %s286
    %p293 = scmp.eq.s32.totalorder %s24, 3
    %p294 = por %p292, %p293
    %p295 = scmp.ne.s32.totalorder %s286, %s287
    %p296 = scmp.eq.s32.totalorder %s24, 0
    %p297 = por %p295, %p296
    %p298 = scmp.ne.s32.totalorder %s286, %s287
    %p299 = scmp.eq.s32.totalorder %s25, 3
    %p300 = por %p298, %p299
    %p302 = scmp.ne.s32.totalorder %s287, %s301
    %p303 = scmp.eq.s32.totalorder %s25, 0
    %p304 = por %p302, %p303
    %s305 = ssub.s32 %s19, %s26
    %p306 = scmp.eq.s32.totalorder %s305, 0
    %s308 = sadd.s32 %s307, 1
    %s309 = scalar_select %p306, %s307, %s308
    %p312 = pneg %p306
    %p313 = scmp.eq.s32.totalorder %s19, 3
    %p314 = por %p312, %p313
    %p315 = scmp.ne.s32.totalorder %s307, %s310
    %p316 = scmp.eq.s32.totalorder %s19, 0
    %p317 = por %p315, %p316
    %p318 = scmp.ne.s32.totalorder %s307, %s310
    %p319 = scmp.eq.s32.totalorder %s24, 3
    %p320 = por %p318, %p319
    %p321 = scmp.ne.s32.totalorder %s310, %s311
    %p322 = scmp.eq.s32.totalorder %s24, 0
    %p323 = por %p321, %p322
    %p324 = scmp.ne.s32.totalorder %s310, %s311
    %p325 = scmp.eq.s32.totalorder %s25, 3
    %p326 = por %p324, %p325
    %p328 = scmp.ne.s32.totalorder %s311, %s327
    %p329 = scmp.eq.s32.totalorder %s25, 0
    %p330 = por %p328, %p329
    %p331 = scmp.le.s32.totalorder 1, %s19
    %p332 = scmp.lt.s32.totalorder %s19, 5
    %p333 = pnand %p331, %p332
    %p334 = pneg %p333
    // Predicated region
    $region9: #{lenet_forward.1} parent=5 // pred_check
      _
    $region10: #{lenet_forward.1} parent=5 // pred_check_branch
      %336 = sbr.rel (%p333) target = $region12
    $region11: #{lenet_forward.1} parent=5 // pred_region
      %s337 = ssub.s32 %s19, 1
      // Predicated region
      $region13: #{lenet_forward.1} parent=11 // pred_check
        %p338 = pneg %p66
      $region14: #{lenet_forward.1} parent=11 // pred_check_branch
        %340 = sbr.rel (%p338) target = $region16
      $region15: #{lenet_forward.1} parent=11 // pred_region
        _
      $region16: #{lenet_forward.1} parent=11 // pred_fallthru
        _
      // Predicated region
      $region17: #{lenet_forward.1} parent=11 // pred_check
        %p341 = pneg %p87
      $region18: #{lenet_forward.1} parent=11 // pred_check_branch
        %343 = sbr.rel (%p341) target = $region20
      $region19: #{lenet_forward.1} parent=11 // pred_region
        _
      $region20: #{lenet_forward.1} parent=11 // pred_fallthru
        _
      // Predicated region
      $region21: #{lenet_forward.1} parent=11 // pred_check
        %p344 = pneg %p108
      $region22: #{lenet_forward.1} parent=11 // pred_check_branch
        %346 = sbr.rel (%p344) target = $region24
      $region23: #{lenet_forward.1} parent=11 // pred_region
        _
      $region24: #{lenet_forward.1} parent=11 // pred_fallthru
        _
      // Predicated region
      $region25: #{lenet_forward.1} parent=11 // pred_check
        %p347 = pneg %p129
      $region26: #{lenet_forward.1} parent=11 // pred_check_branch
        %349 = sbr.rel (%p347) target = $region28
      $region27: #{lenet_forward.1} parent=11 // pred_region
        _
      $region28: #{lenet_forward.1} parent=11 // pred_fallthru
        _
      // Predicated region
      $region29: #{lenet_forward.1} parent=11 // pred_check
        %p350 = pneg %p150
      $region30: #{lenet_forward.1} parent=11 // pred_check_branch
        %352 = sbr.rel (%p350) target = $region32
      $region31: #{lenet_forward.1} parent=11 // pred_region
        _
      $region32: #{lenet_forward.1} parent=11 // pred_fallthru
        _
      // Predicated region
      $region33: #{lenet_forward.1} parent=11 // pred_check
        %p353 = pneg %p171
      $region34: #{lenet_forward.1} parent=11 // pred_check_branch
        %355 = sbr.rel (%p353) target = $region36
      $region35: #{lenet_forward.1} parent=11 // pred_region
        _
      $region36: #{lenet_forward.1} parent=11 // pred_fallthru
        _
      // Predicated region
      $region37: #{lenet_forward.1} parent=11 // pred_check
        %p356 = pneg %p192
      $region38: #{lenet_forward.1} parent=11 // pred_check_branch
        %358 = sbr.rel (%p356) target = $region40
      $region39: #{lenet_forward.1} parent=11 // pred_region
        _
      $region40: #{lenet_forward.1} parent=11 // pred_fallthru
        _
      // Predicated region
      $region41: #{lenet_forward.1} parent=11 // pred_check
        %p359 = pneg %p213
      $region42: #{lenet_forward.1} parent=11 // pred_check_branch
        %361 = sbr.rel (%p359) target = $region44
      $region43: #{lenet_forward.1} parent=11 // pred_region
        _
      $region44: #{lenet_forward.1} parent=11 // pred_fallthru
        _
      // Predicated region
      $region45: #{lenet_forward.1} parent=11 // pred_check
        %p362 = pneg %p234
      $region46: #{lenet_forward.1} parent=11 // pred_check_branch
        %364 = sbr.rel (%p362) target = $region48
      $region47: #{lenet_forward.1} parent=11 // pred_region
        _
      $region48: #{lenet_forward.1} parent=11 // pred_fallthru
        _
      // Predicated region
      $region49: #{lenet_forward.1} parent=11 // pred_check
        %p365 = pneg %p255
      $region50: #{lenet_forward.1} parent=11 // pred_check_branch
        %367 = sbr.rel (%p365) target = $region52
      $region51: #{lenet_forward.1} parent=11 // pred_region
        _
      $region52: #{lenet_forward.1} parent=11 // pred_fallthru
        _
      // Predicated region
      $region53: #{lenet_forward.1} parent=11 // pred_check
        %p368 = pneg %p276
      $region54: #{lenet_forward.1} parent=11 // pred_check_branch
        %370 = sbr.rel (%p368) target = $region56
      $region55: #{lenet_forward.1} parent=11 // pred_region
        _
      $region56: #{lenet_forward.1} parent=11 // pred_fallthru
        _
      // Predicated region
      $region57: #{lenet_forward.1} parent=11 // pred_check
        %p371 = pneg %p297
      $region58: #{lenet_forward.1} parent=11 // pred_check_branch
        %373 = sbr.rel (%p371) target = $region60
      $region59: #{lenet_forward.1} parent=11 // pred_region
        _
      $region60: #{lenet_forward.1} parent=11 // pred_fallthru
        _
    $region12: #{lenet_forward.1} parent=5 // pred_fallthru
      _
    %p374 = scmp.lt.s32.totalorder %s19, 4
    // Predicated region
    $region61: #{lenet_forward.1} parent=5 // pred_check
      %p375 = pneg %p374
    $region62: #{lenet_forward.1} parent=5 // pred_check_branch
      %377 = sbr.rel (%p375) target = $region64
    $region63: #{lenet_forward.1} parent=5 // pred_region
      // Predicated region
      $region65: #{lenet_forward.1} parent=63 // pred_check
        %p378 = pneg %p39
      $region66: #{lenet_forward.1} parent=63 // pred_check_branch
        %380 = sbr.rel (%p378) target = $region68
      $region67: #{lenet_forward.1} parent=63 // pred_region
        %s381 = smul.u32 28, %s19
        %p382 = scmp.lt.s32.totalorder %s381, 111
        %s383 = scalar_select %p382, %s381, 111
        %s384 = smul.addr %s383, 8
        %s385 = scalar_lea.vmem %s0, %s384
        %s386 = smul.u32 28, %s19
      $region68: #{lenet_forward.1} parent=63 // pred_fallthru
        _
    $region64: #{lenet_forward.1} parent=5 // pred_fallthru
      _
    %p387 = scmp.le.s32.totalorder 1, %s19
    %p388 = scmp.lt.s32.totalorder %s19, 5
    %p389 = pnand %p387, %p388
    %p390 = pneg %p389
    // Predicated region
    $region69: #{lenet_forward.1} parent=5 // pred_check
      _
    $region70: #{lenet_forward.1} parent=5 // pred_check_branch
      %392 = sbr.rel (%p389) target = $region72
    $region71: #{lenet_forward.1} parent=5 // pred_region
      %s393 = ssub.s32 %s19, 1
      %s394 = smul.u32 28, %s24
      %p395 = scmp.lt.s32.totalorder %s394, 111
      %s396 = scalar_select %p395, %s394, 111
      %s397 = smul.addr %s396, 8
      %s398 = scalar_lea.vmem %s0, %s397
      %p399 = pneg %p45
      %p400 = pneg %p42
      %p401 = pneg %p66
      %p402 = pneg %p63
      %p403 = pneg %p87
      %p404 = pneg %p84
      %p405 = pneg %p108
      %p406 = pneg %p105
      %p407 = pneg %p129
      %p408 = pneg %p126
      %p409 = pneg %p150
      %p410 = pneg %p147
      %p411 = pneg %p171
      %p412 = pneg %p168
      %p413 = pneg %p192
      %p414 = pneg %p189
      %p415 = pneg %p213
      %p416 = pneg %p210
      %p417 = pneg %p234
      %p418 = pneg %p231
      %p419 = pneg %p255
      %p420 = pneg %p252
      %p421 = pneg %p276
      %p422 = pneg %p273
      %p423 = pneg %p297
      %p424 = pneg %p294
      %p425 = pneg %p323
      %p426 = pneg %p320
      %p427 = scmp.lt.s32.totalorder %s24, 3
      %s428 = scalar_select %p427, %s24, 3
      %s429 = smul.addr %s428, 8
      %s430 = scalar_lea.vmem %s13, %s429
      %s431 = smul.u32 28, %s24
      %p432 = scmp.lt.s32.totalorder %s431, 111
      %s433 = scalar_select %p432, %s431, 111
      %s434 = smul.addr %s433, 8
      %s435 = scalar_lea.vmem %s0, %s434
      %s436 = smul.u32 28, %s24
      %p437 = scmp.lt.s32.totalorder %s24, 3
      %s438 = scalar_select %p437, %s24, 3
      %s439 = smul.addr %s438, 8
      %s440 = scalar_lea.vmem %s13, %s439
      %v441 = vld [vmem:[%s435] sm:$0xff]
      %v442 = vld [vmem:[%s435 + $0x8] sm:$0xff]
      %v443 = vld [vmem:[%s435 + $0x10] sm:$0xff]
      %v444 = vld [vmem:[%s435 + $0x18] sm:$0xff]
      %v445 = vld [vmem:[%s435 + $0x20] sm:$0xff]
      %v446 = vld [vmem:[%s435 + $0x28] sm:$0xff]
      %v447 = vld [vmem:[%s435 + $0x30] sm:$0xff]
      %v448 = vld [vmem:[%s435 + $0x38] sm:$0xff]
      %v449 = vld [vmem:[%s435 + $0x40] sm:$0xff]
      %v450 = vld [vmem:[%s435 + $0x48] sm:$0xff]
      %v451 = vld [vmem:[%s435 + $0x50] sm:$0xff]
      %v452 = vld [vmem:[%s435 + $0x58] sm:$0xff]
      %v453 = vld [vmem:[%s435 + $0x60] sm:$0xff]
      %v454 = vld [vmem:[%s435 + $0x68] sm:$0xff]
      %v455 = vld [vmem:[%s435 + $0x70] sm:$0xff]
      %v456 = vld [vmem:[%s435 + $0x78] sm:$0xff]
      %v457 = vld [vmem:[%s435 + $0x80] sm:$0xff]
      %v458 = vld [vmem:[%s435 + $0x88] sm:$0xff]
      %v459 = vld [vmem:[%s435 + $0x90] sm:$0xff]
      %v460 = vld [vmem:[%s435 + $0x98] sm:$0xff]
      %v461 = vld [vmem:[%s435 + $0xa0] sm:$0xff]
      %v462 = vld [vmem:[%s435 + $0xa8] sm:$0xff]
      %v463 = vld [vmem:[%s435 + $0xb0] sm:$0xff]
      %v464 = vld [vmem:[%s435 + $0xb8] sm:$0xff]
      %v465 = vld [vmem:[%s435 + $0xc0] sm:$0xff]
      %v466 = vld [vmem:[%s435 + $0xc8] sm:$0xff]
      %v467 = vld [vmem:[%s435 + $0xd0] sm:$0xff]
      %v468 = vld [vmem:[%s435 + $0xd8] sm:$0xff]
      %v469 = vld [vmem:[%s2] sm:$0x3]
      %v471 = vlaneseq
      %v472 = vshrl.u32 %v471, 7
      %v473 = vsub.s32 0, %v472
      %v474 = vrot.slane %v469, %v473
      %v475 = vlaneseq
      %v476 = vshrl.u32 %v475, 7
      %v477 = vsub.s32 1, %v476
      %v478 = vrot.slane %v469, %v477
      %v481 = vld [vmem:[%s1] sm:$0xff]
      %v482 = vld [vmem:[%s1 + $0x8] sm:$0xff]
      %v483 = vld [vmem:[%s1 + $0x10] sm:$0xff]
      %v484 = vld [vmem:[%s1 + $0x18] sm:$0xff]
      %v485 = vld [vmem:[%s1 + $0x20] sm:$0xff]
      %v486 = vld [vmem:[%s1 + $0x28] sm:$0xff]
      %v487 = vld [vmem:[%s1 + $0x30] sm:$0xf]
      %v488 = vld [vmem:[%s1 + $0x38] sm:$0xf]
      %vm489 = vcmask 228352
      %v491 = vsel %vm489, %v441, 0
      %v494 = vsel %vm489, %v442, 0
      %v497 = vsel %vm489, %v443, 0
      %v500 = vsel %vm489, %v444, 0
      %v503 = vsel %vm489, %v445, 0
      %v506 = vsel %vm489, %v446, 0
      %v509 = vsel %vm489, %v447, 0
      %v512 = vsel %vm489, %v448, 0
      %v515 = vsel %vm489, %v449, 0
      %v518 = vsel %vm489, %v450, 0
      %v521 = vsel %vm489, %v451, 0
      %v524 = vsel %vm489, %v452, 0
      %v527 = vsel %vm489, %v453, 0
      %v530 = vsel %vm489, %v454, 0
      %v533 = vsel %vm489, %v455, 0
      %v536 = vsel %vm489, %v456, 0
      %v539 = vsel %vm489, %v457, 0
      %v542 = vsel %vm489, %v458, 0
      %v545 = vsel %vm489, %v459, 0
      %v548 = vsel %vm489, %v460, 0
      %v551 = vsel %vm489, %v461, 0
      %v554 = vsel %vm489, %v462, 0
      %v557 = vsel %vm489, %v463, 0
      %v560 = vsel %vm489, %v464, 0
      %v563 = vsel %vm489, %v465, 0
      %v566 = vsel %vm489, %v466, 0
      %v569 = vsel %vm489, %v467, 0
      %v572 = vsel %vm489, %v468, 0
      %vm574 = vcmask 1043456
      %v576 = vsel %vm574, %v487, 0
      %v579 = vsel %vm574, %v488, 0
      %581 = vmatprep.subr.mxu0 %v482
      %582 = vmatpush1.msra.mxu0 %v481
      %583 = vmatprep.subr.mxu0 %v484
      %584 = vmatpush1.msra.mxu0 %v483
      %585 = vmatprep.subr.mxu0 %v486
      %586 = vmatpush1.msra.mxu0 %v485
      %587 = vmatprep.subr.mxu0 %v579
      %588 = vmatpush1.msra.mxu0 %v576
      %589 = vmatprep.subr.mxu0 0.0
      %590 = vmatpush1.msra.mxu0 0.0
      %591 = vmatprep.subr.mxu0 0.0
      %592 = vmatpush1.msra.mxu0 0.0
      %593 = vmatprep.subr.mxu0 0.0
      %594 = vmatpush1.msra.mxu0 0.0
      %595 = vmatprep.subr.mxu0 0.0
      %596 = vmatpush1.msra.mxu0 0.0
      %597 = vmatprep.subr.mxu0 0.0
      %598 = vmatpush1.msra.mxu0 0.0
      %599 = vmatprep.subr.mxu0 0.0
      %600 = vmatpush1.msra.mxu0 0.0
      %601 = vmatprep.subr.mxu0 0.0
      %602 = vmatpush1.msra.mxu0 0.0
      %603 = vmatprep.subr.mxu0 0.0
      %604 = vmatpush1.msra.mxu0 0.0
      %605 = vmatprep.subr.mxu0 0.0
      %606 = vmatpush1.msra.mxu0 0.0
      %607 = vmatprep.subr.mxu0 0.0
      %608 = vmatpush1.msra.mxu0 0.0
      %609 = vmatprep.subr.mxu0 0.0
      %610 = vmatpush1.msra.mxu0 0.0
      %611 = vmatprep.subr.mxu0 0.0
      %612 = vmatpush1.msra.mxu0 0.0
      %613 = vmatprep.subr.mxu0 0.0
      %614 = vmatpush1.msra.mxu0 0.0
      %615 = vmatprep.subr.mxu0 0.0
      %616 = vmatpush1.msra.mxu0 0.0
      %617 = vmatprep.subr.mxu0 0.0
      %618 = vmatpush1.msra.mxu0 0.0
      %619 = vmatprep.subr.mxu0 0.0
      %620 = vmatpush1.msra.mxu0 0.0
      %621 = vmatprep.subr.mxu0 0.0
      %622 = vmatpush1.msra.mxu0 0.0
      %623 = vmatprep.subr.mxu0 0.0
      %624 = vmatpush1.msra.mxu0 0.0
      %625 = vmatprep.subr.mxu0 0.0
      %626 = vmatpush1.msra.mxu0 0.0
      %627 = vmatprep.subr.mxu0 0.0
      %628 = vmatpush1.msra.mxu0 0.0
      %629 = vmatprep.subr.mxu0 0.0
      %630 = vmatpush1.msra.mxu0 0.0
      %631 = vmatprep.subr.mxu0 0.0
      %632 = vmatpush1.msra.mxu0 0.0
      %633 = vmatprep.subr.mxu0 0.0
      %634 = vmatpush1.msra.mxu0 0.0
      %635 = vmatprep.subr.mxu0 0.0
      %636 = vmatpush1.msra.mxu0 0.0
      %637 = vmatprep.subr.mxu0 0.0
      %638 = vmatpush1.msra.mxu0 0.0
      %639 = vmatprep.subr.mxu0 0.0
      %640 = vmatpush1.msra.mxu0 0.0
      %641 = vmatprep.subr.mxu0 0.0
      %642 = vmatpush1.msra.mxu0 0.0
      %643 = vmatprep.subr.mxu0 0.0
      %644 = vmatpush1.msra.mxu0 0.0
      %645 = vmatprep.mubr.f32.mxu0 0.0
      %646 = vmatmul.mubr.f32.gmra.mrb[0].mxu0 %v491
      %v647 = vpop.f32.mrb[0].mxu0
      %v648 = vadd.f32 0.0, %v647
      %v649 = vpop.f32.mrb[0].mxu0
      %v650 = vadd.f32 0.0, %v649
      %651 = vmatprep.mubr.f32.mxu0 0.0
      %652 = vmatmul.mubr.f32.gmra.mrb[0].mxu0 %v494
      %v653 = vpop.f32.mrb[0].mxu0
      %v654 = vadd.f32 0.0, %v653
      %v655 = vpop.f32.mrb[0].mxu0
      %v656 = vadd.f32 0.0, %v655
      %657 = vmatprep.mubr.f32.mxu0 0.0
      %658 = vmatmul.mubr.f32.gmra.mrb[0].mxu0 %v497
      %v659 = vpop.f32.mrb[0].mxu0
      %v660 = vadd.f32 0.0, %v659
      %v661 = vpop.f32.mrb[0].mxu0
      %v662 = vadd.f32 0.0, %v661
      %663 = vmatprep.mubr.f32.mxu0 0.0
      %664 = vmatmul.mubr.f32.gmra.mrb[0].mxu0 %v500
      %v665 = vpop.f32.mrb[0].mxu0
      %v666 = vadd.f32 0.0, %v665
      %v667 = vpop.f32.mrb[0].mxu0
      %v668 = vadd.f32 0.0, %v667
      %669 = vmatprep.mubr.f32.mxu0 0.0
      %670 = vmatmul.mubr.f32.gmra.mrb[0].mxu0 %v503
      %v671 = vpop.f32.mrb[0].mxu0
      %v672 = vadd.f32 0.0, %v671
      %v673 = vpop.f32.mrb[0].mxu0
      %v674 = vadd.f32 0.0, %v673
      %675 = vmatprep.mubr.f32.mxu0 0.0
      %676 = vmatmul.mubr.f32.gmra.mrb[0].mxu0 %v506
      %v677 = vpop.f32.mrb[0].mxu0
      %v678 = vadd.f32 0.0, %v677
      %v679 = vpop.f32.mrb[0].mxu0
      %v680 = vadd.f32 0.0, %v679
      %681 = vmatprep.mubr.f32.mxu0 0.0
      %682 = vmatmul.mubr.f32.gmra.mrb[0].mxu0 %v509
      %v683 = vpop.f32.mrb[0].mxu0
      %v684 = vadd.f32 0.0, %v683
      %v685 = vpop.f32.mrb[0].mxu0
      %v686 = vadd.f32 0.0, %v685
      %687 = vmatprep.mubr.f32.mxu0 0.0
      %688 = vmatmul.mubr.f32.gmra.mrb[0].mxu0 %v512
      %v689 = vpop.f32.mrb[0].mxu0
      %v690 = vadd.f32 0.0, %v689
      %v691 = vpop.f32.mrb[0].mxu0
      %v692 = vadd.f32 0.0, %v691
      %693 = vmatprep.mubr.f32.mxu0 0.0
      %694 = vmatmul.mubr.f32.gmra.mrb[0].mxu0 %v515
      %v695 = vpop.f32.mrb[0].mxu0
      %v696 = vadd.f32 0.0, %v695
      %v697 = vpop.f32.mrb[0].mxu0
      %v698 = vadd.f32 0.0, %v697
      %699 = vmatprep.mubr.f32.mxu0 0.0
      %700 = vmatmul.mubr.f32.gmra.mrb[0].mxu0 %v518
      %v701 = vpop.f32.mrb[0].mxu0
      %v702 = vadd.f32 0.0, %v701
      %v703 = vpop.f32.mrb[0].mxu0
      %v704 = vadd.f32 0.0, %v703
      %705 = vmatprep.mubr.f32.mxu0 0.0
      %706 = vmatmul.mubr.f32.gmra.mrb[0].mxu0 %v521
      %v707 = vpop.f32.mrb[0].mxu0
      %v708 = vadd.f32 0.0, %v707
      %v709 = vpop.f32.mrb[0].mxu0
      %v710 = vadd.f32 0.0, %v709
      %711 = vmatprep.mubr.f32.mxu0 0.0
      %712 = vmatmul.mubr.f32.gmra.mrb[0].mxu0 %v524
      %v713 = vpop.f32.mrb[0].mxu0
      %v714 = vadd.f32 0.0, %v713
      %v715 = vpop.f32.mrb[0].mxu0
      %v716 = vadd.f32 0.0, %v715
      %717 = vmatprep.mubr.f32.mxu0 0.0
      %718 = vmatmul.mubr.f32.gmra.mrb[0].mxu0 %v527
      %v719 = vpop.f32.mrb[0].mxu0
      %v720 = vadd.f32 0.0, %v719
      %v721 = vpop.f32.mrb[0].mxu0
      %v722 = vadd.f32 0.0, %v721
      %723 = vmatprep.mubr.f32.mxu0 0.0
      %724 = vmatmul.mubr.f32.gmra.mrb[0].mxu0 %v530
      %v725 = vpop.f32.mrb[0].mxu0
      %v726 = vadd.f32 0.0, %v725
      %v727 = vpop.f32.mrb[0].mxu0
      %v728 = vadd.f32 0.0, %v727
      %729 = vmatprep.mubr.f32.mxu0 0.0
      %730 = vmatmul.mubr.f32.gmra.mrb[0].mxu0 %v533
      %v731 = vpop.f32.mrb[0].mxu0
      %v732 = vadd.f32 0.0, %v731
      %v733 = vpop.f32.mrb[0].mxu0
      %v734 = vadd.f32 0.0, %v733
      %735 = vmatprep.mubr.f32.mxu0 0.0
      %736 = vmatmul.mubr.f32.gmra.mrb[0].mxu0 %v536
      %v737 = vpop.f32.mrb[0].mxu0
      %v738 = vadd.f32 0.0, %v737
      %v739 = vpop.f32.mrb[0].mxu0
      %v740 = vadd.f32 0.0, %v739
      %741 = vmatprep.mubr.f32.mxu0 0.0
      %742 = vmatmul.mubr.f32.gmra.mrb[0].mxu0 %v539
      %v743 = vpop.f32.mrb[0].mxu0
      %v744 = vadd.f32 0.0, %v743
      %v745 = vpop.f32.mrb[0].mxu0
      %v746 = vadd.f32 0.0, %v745
      %747 = vmatprep.mubr.f32.mxu0 0.0
      %748 = vmatmul.mubr.f32.gmra.mrb[0].mxu0 %v542
      %v749 = vpop.f32.mrb[0].mxu0
      %v750 = vadd.f32 0.0, %v749
      %v751 = vpop.f32.mrb[0].mxu0
      %v752 = vadd.f32 0.0, %v751
      %753 = vmatprep.mubr.f32.mxu0 0.0
      %754 = vmatmul.mubr.f32.gmra.mrb[0].mxu0 %v545
      %v755 = vpop.f32.mrb[0].mxu0
      %v756 = vadd.f32 0.0, %v755
      %v757 = vpop.f32.mrb[0].mxu0
      %v758 = vadd.f32 0.0, %v757
      %759 = vmatprep.mubr.f32.mxu0 0.0
      %760 = vmatmul.mubr.f32.gmra.mrb[0].mxu0 %v548
      %v761 = vpop.f32.mrb[0].mxu0
      %v762 = vadd.f32 0.0, %v761
      %v763 = vpop.f32.mrb[0].mxu0
      %v764 = vadd.f32 0.0, %v763
      %765 = vmatprep.mubr.f32.mxu0 0.0
      %766 = vmatmul.mubr.f32.gmra.mrb[0].mxu0 %v551
      %v767 = vpop.f32.mrb[0].mxu0
      %v768 = vadd.f32 0.0, %v767
      %v769 = vpop.f32.mrb[0].mxu0
      %v770 = vadd.f32 0.0, %v769
      %771 = vmatprep.mubr.f32.mxu0 0.0
      %772 = vmatmul.mubr.f32.gmra.mrb[0].mxu0 %v554
      %v773 = vpop.f32.mrb[0].mxu0
      %v774 = vadd.f32 0.0, %v773
      %v775 = vpop.f32.mrb[0].mxu0
      %v776 = vadd.f32 0.0, %v775
      %777 = vmatprep.mubr.f32.mxu0 0.0
      %778 = vmatmul.mubr.f32.gmra.mrb[0].mxu0 %v557
      %v779 = vpop.f32.mrb[0].mxu0
      %v780 = vadd.f32 0.0, %v779
      %v781 = vpop.f32.mrb[0].mxu0
      %v782 = vadd.f32 0.0, %v781
      %783 = vmatprep.mubr.f32.mxu0 0.0
      %784 = vmatmul.mubr.f32.gmra.mrb[0].mxu0 %v560
      %v785 = vpop.f32.mrb[0].mxu0
      %v786 = vadd.f32 0.0, %v785
      %v787 = vpop.f32.mrb[0].mxu0
      %v788 = vadd.f32 0.0, %v787
      %789 = vmatprep.mubr.f32.mxu0 0.0
      %790 = vmatmul.mubr.f32.gmra.mrb[0].mxu0 %v563
      %v791 = vpop.f32.mrb[0].mxu0
      %v792 = vadd.f32 0.0, %v791
      %v793 = vpop.f32.mrb[0].mxu0
      %v794 = vadd.f32 0.0, %v793
      %795 = vmatprep.mubr.f32.mxu0 0.0
      %796 = vmatmul.mubr.f32.gmra.mrb[0].mxu0 %v566
      %v797 = vpop.f32.mrb[0].mxu0
      %v798 = vadd.f32 0.0, %v797
      %v799 = vpop.f32.mrb[0].mxu0
      %v800 = vadd.f32 0.0, %v799
      %801 = vmatprep.mubr.f32.mxu0 0.0
      %802 = vmatmul.mubr.f32.gmra.mrb[0].mxu0 %v569
      %v803 = vpop.f32.mrb[0].mxu0
      %v804 = vadd.f32 0.0, %v803
      %v805 = vpop.f32.mrb[0].mxu0
      %v806 = vadd.f32 0.0, %v805
      %807 = vmatprep.mubr.f32.mxu0 0.0
      %808 = vmatmul.mubr.f32.gmra.mrb[0].mxu0 %v572
      %v809 = vpop.f32.mrb[0].mxu0
      %v810 = vadd.f32 0.0, %v809
      %v811 = vpop.f32.mrb[0].mxu0
      %v812 = vadd.f32 0.0, %v811
      %813 = vdwg.mxu0
      %v814 = vadd.f32 %v474, %v648
      %v815 = vadd.f32 %v478, %v650
      %v816 = vadd.f32 %v474, %v654
      %v817 = vadd.f32 %v478, %v656
      %v818 = vadd.f32 %v474, %v660
      %v819 = vadd.f32 %v478, %v662
      %v820 = vadd.f32 %v474, %v666
      %v821 = vadd.f32 %v478, %v668
      %v822 = vadd.f32 %v474, %v672
      %v823 = vadd.f32 %v478, %v674
      %v824 = vadd.f32 %v474, %v678
      %v825 = vadd.f32 %v478, %v680
      %v826 = vadd.f32 %v474, %v684
      %v827 = vadd.f32 %v478, %v686
      %v828 = vadd.f32 %v474, %v690
      %v829 = vadd.f32 %v478, %v692
      %v830 = vadd.f32 %v474, %v696
      %v831 = vadd.f32 %v478, %v698
      %v832 = vadd.f32 %v474, %v702
      %v833 = vadd.f32 %v478, %v704
      %v834 = vadd.f32 %v474, %v708
      %v835 = vadd.f32 %v478, %v710
      %v836 = vadd.f32 %v474, %v714
      %v837 = vadd.f32 %v478, %v716
      %v838 = vadd.f32 %v474, %v720
      %v839 = vadd.f32 %v478, %v722
      %v840 = vadd.f32 %v474, %v726
      %v841 = vadd.f32 %v478, %v728
      %v842 = vadd.f32 %v474, %v732
      %v843 = vadd.f32 %v478, %v734
      %v844 = vadd.f32 %v474, %v738
      %v845 = vadd.f32 %v478, %v740
      %v846 = vadd.f32 %v474, %v744
      %v847 = vadd.f32 %v478, %v746
      %v848 = vadd.f32 %v474, %v750
      %v849 = vadd.f32 %v478, %v752
      %v850 = vadd.f32 %v474, %v756
      %v851 = vadd.f32 %v478, %v758
      %v852 = vadd.f32 %v474, %v762
      %v853 = vadd.f32 %v478, %v764
      %v854 = vadd.f32 %v474, %v768
      %v855 = vadd.f32 %v478, %v770
      %v856 = vadd.f32 %v474, %v774
      %v857 = vadd.f32 %v478, %v776
      %v858 = vadd.f32 %v474, %v780
      %v859 = vadd.f32 %v478, %v782
      %v860 = vadd.f32 %v474, %v786
      %v861 = vadd.f32 %v478, %v788
      %v862 = vadd.f32 %v474, %v792
      %v863 = vadd.f32 %v478, %v794
      %v864 = vadd.f32 %v474, %v798
      %v865 = vadd.f32 %v478, %v800
      %v866 = vadd.f32 %v474, %v804
      %v867 = vadd.f32 %v478, %v806
      %v868 = vadd.f32 %v474, %v810
      %v869 = vadd.f32 %v478, %v812
      %v870 = vrot.slane %v441, 1
      %v871 = vrot.slane %v442, 1
      %v872 = vrot.slane %v443, 1
      %v873 = vrot.slane %v444, 1
      %v874 = vrot.slane %v445, 1
      %v875 = vrot.slane %v446, 1
      %v876 = vrot.slane %v447, 1
      %v877 = vrot.slane %v448, 1
      %v878 = vrot.slane %v449, 1
      %v879 = vrot.slane %v450, 1
      %v880 = vrot.slane %v451, 1
      %v881 = vrot.slane %v452, 1
      %v882 = vrot.slane %v453, 1
      %v883 = vrot.slane %v454, 1
      %v884 = vrot.slane %v455, 1
      %v885 = vrot.slane %v456, 1
      %v886 = vrot.slane %v457, 1
      %v887 = vrot.slane %v458, 1
      %v888 = vrot.slane %v459, 1
      %v889 = vrot.slane %v460, 1
      %v890 = vrot.slane %v461, 1
      %v891 = vrot.slane %v462, 1
      %v892 = vrot.slane %v463, 1
      %v893 = vrot.slane %v464, 1
      %v894 = vrot.slane %v465, 1
      %v895 = vrot.slane %v466, 1
      %v896 = vrot.slane %v467, 1
      %v897 = vrot.slane %v468, 1
      %v898 = vlaneseq
      %v899 = vshrl.u32 %v898, 7
      %vm900 = vcmp.lt.s32.totalorder %v899, 7
      %v901 = vsel %vm900, %v896, %v897
      %v902 = vsel %vm900, %v895, %v896
      %v903 = vsel %vm900, %v894, %v895
      %v904 = vsel %vm900, %v893, %v894
      %v905 = vsel %vm900, %v892, %v893
      %v906 = vsel %vm900, %v891, %v892
      %v907 = vsel %vm900, %v890, %v891
      %v908 = vsel %vm900, %v889, %v890
      %v909 = vsel %vm900, %v888, %v889
      %v910 = vsel %vm900, %v887, %v888
      %v911 = vsel %vm900, %v886, %v887
      %v912 = vsel %vm900, %v885, %v886
      %v913 = vsel %vm900, %v884, %v885
      %v914 = vsel %vm900, %v883, %v884
      %v915 = vsel %vm900, %v882, %v883
      %v916 = vsel %vm900, %v881, %v882
      %v917 = vsel %vm900, %v880, %v881
      %v918 = vsel %vm900, %v879, %v880
      %v919 = vsel %vm900, %v878, %v879
      %v920 = vsel %vm900, %v877, %v878
      %v921 = vsel %vm900, %v876, %v877
      %v922 = vsel %vm900, %v875, %v876
      %v923 = vsel %vm900, %v874, %v875
      %v924 = vsel %vm900, %v873, %v874
      %v925 = vsel %vm900, %v872, %v873
      %v926 = vsel %vm900, %v871, %v872
      %v927 = vsel %vm900, %v870, %v871
      %v928 = vsel %vm900, %v897, %v870
      %s929 = scalar_lea.vmem %s1, 64
      %v930 = vld [vmem:[%s929] sm:$0xff]
      %v931 = vld [vmem:[%s929 + $0x8] sm:$0xff]
      %v932 = vld [vmem:[%s929 + $0x10] sm:$0xff]
      %v933 = vld [vmem:[%s929 + $0x18] sm:$0xff]
      %v934 = vld [vmem:[%s929 + $0x20] sm:$0xff]
      %v935 = vld [vmem:[%s929 + $0x28] sm:$0xff]
      %v936 = vld [vmem:[%s929 + $0x30] sm:$0xf]
      %v937 = vld [vmem:[%s929 + $0x38] sm:$0xf]
      %v939 = vsel %vm489, %v927, 0
      %v942 = vsel %vm489, %v926, 0
      %v945 = vsel %vm489, %v925, 0
      %v948 = vsel %vm489, %v924, 0
      %v951 = vsel %vm489, %v923, 0
      %v954 = vsel %vm489, %v922, 0
      %v957 = vsel %vm489, %v921, 0
      %v960 = vsel %vm489, %v920, 0
      %v963 = vsel %vm489, %v919, 0
      %v966 = vsel %vm489, %v918, 0
      %v969 = vsel %vm489, %v917, 0
      %v972 = vsel %vm489, %v916, 0
      %v975 = vsel %vm489, %v915, 0
      %v978 = vsel %vm489, %v914, 0
      %v981 = vsel %vm489, %v913, 0
      %v984 = vsel %vm489, %v912, 0
      %v987 = vsel %vm489, %v911, 0
      %v990 = vsel %vm489, %v910, 0
      %v993 = vsel %vm489, %v909, 0
      %v996 = vsel %vm489, %v908, 0
      %v999 = vsel %vm489, %v907, 0
      %v1002 = vsel %vm489, %v906, 0
      %v1005 = vsel %vm489, %v905, 0
      %v1008 = vsel %vm489, %v904, 0
      %v1011 = vsel %vm489, %v903, 0
      %v1014 = vsel %vm489, %v902, 0
      %v1017 = vsel %vm489, %v901, 0
      %v1020 = vsel %vm489, %v928, 0
      %v1023 = vsel %vm574, %v936, 0
      %v1026 = vsel %vm574, %v937, 0
      %1028 = vmatprep.subr.mxu0 %v931
      %1029 = vmatpush1.msra.mxu0 %v930
      %1030 = vmatprep.subr.mxu0 %v933
      %1031 = vmatpush1.msra.mxu0 %v932
      %1032 = vmatprep.subr.mxu0 %v935
      %1033 = vmatpush1.msra.mxu0 %v934
      %1034 = vmatprep.subr.mxu0 %v1026
      %1035 = vmatpush1.msra.mxu0 %v1023
      %1036 = vmatprep.subr.mxu0 0.0
      %1037 = vmatpush1.msra.mxu0 0.0
      %1038 = vmatprep.subr.mxu0 0.0
      %1039 = vmatpush1.msra.mxu0 0.0
      %1040 = vmatprep.subr.mxu0 0.0
      %1041 = vmatpush1.msra.mxu0 0.0
      %1042 = vmatprep.subr.mxu0 0.0
      %1043 = vmatpush1.msra.mxu0 0.0
      %1044 = vmatprep.subr.mxu0 0.0
      %1045 = vmatpush1.msra.mxu0 0.0
      %1046 = vmatprep.subr.mxu0 0.0
      %1047 = vmatpush1.msra.mxu0 0.0
      %1048 = vmatprep.subr.mxu0 0.0
      %1049 = vmatpush1.msra.mxu0 0.0
      %1050 = vmatprep.subr.mxu0 0.0
      %1051 = vmatpush1.msra.mxu0 0.0
      %1052 = vmatprep.subr.mxu0 0.0
      %1053 = vmatpush1.msra.mxu0 0.0
      %1054 = vmatprep.subr.mxu0 0.0
      %1055 = vmatpush1.msra.mxu0 0.0
      %1056 = vmatprep.subr.mxu0 0.0
      %1057 = vmatpush1.msra.mxu0 0.0
      %1058 = vmatprep.subr.mxu0 0.0
      %1059 = vmatpush1.msra.mxu0 0.0
      %1060 = vmatprep.subr.mxu0 0.0
      %1061 = vmatpush1.msra.mxu0 0.0
      %1062 = vmatprep.subr.mxu0 0.0
      %1063 = vmatpush1.msra.mxu0 0.0
      %1064 = vmatprep.subr.mxu0 0.0
      %1065 = vmatpush1.msra.mxu0 0.0
      %1066 = vmatprep.subr.mxu0 0.0
      %1067 = vmatpush1.msra.mxu0 0.0
      %1068 = vmatprep.subr.mxu0 0.0
      %1069 = vmatpush1.msra.mxu0 0.0
      %1070 = vmatprep.subr.mxu0 0.0
      %1071 = vmatpush1.msra.mxu0 0.0
      %1072 = vmatprep.subr.mxu0 0.0
      %1073 = vmatpush1.msra.mxu0 0.0
      %1074 = vmatprep.subr.mxu0 0.0
      %1075 = vmatpush1.msra.mxu0 0.0
      %1076 = vmatprep.subr.mxu0 0.0
      %1077 = vmatpush1.msra.mxu0 0.0
      %1078 = vmatprep.subr.mxu0 0.0
      %1079 = vmatpush1.msra.mxu0 0.0
      %1080 = vmatprep.subr.mxu0 0.0
      %1081 = vmatpush1.msra.mxu0 0.0
      %1082 = vmatprep.subr.mxu0 0.0
      %1083 = vmatpush1.msra.mxu0 0.0
      %1084 = vmatprep.subr.mxu0 0.0
      %1085 = vmatpush1.msra.mxu0 0.0
      %1086 = vmatprep.subr.mxu0 0.0
      %1087 = vmatpush1.msra.mxu0 0.0
      %1088 = vmatprep.subr.mxu0 0.0
      %1089 = vmatpush1.msra.mxu0 0.0
      %1090 = vmatprep.subr.mxu0 0.0
      %1091 = vmatpush1.msra.mxu0 0.0
      %1092 = vmatprep.mubr.f32.mxu0 0.0
      %1093 = vmatmul.mubr.f32.gmra.mrb[0].mxu0 %v939
      %v1094 = vpop.f32.mrb[0].mxu0
      %v1095 = vadd.f32 0.0, %v1094
      %v1096 = vpop.f32.mrb[0].mxu0
      %v1097 = vadd.f32 0.0, %v1096
      %1098 = vmatprep.mubr.f32.mxu0 0.0
      %1099 = vmatmul.mubr.f32.gmra.mrb[0].mxu0 %v942
      %v1100 = vpop.f32.mrb[0].mxu0
      %v1101 = vadd.f32 0.0, %v1100
      %v1102 = vpop.f32.mrb[0].mxu0
      %v1103 = vadd.f32 0.0, %v1102
      %1104 = vmatprep.mubr.f32.mxu0 0.0
      %1105 = vmatmul.mubr.f32.gmra.mrb[0].mxu0 %v945
      %v1106 = vpop.f32.mrb[0].mxu0
      %v1107 = vadd.f32 0.0, %v1106
      %v1108 = vpop.f32.mrb[0].mxu0
      %v1109 = vadd.f32 0.0, %v1108
      %1110 = vmatprep.mubr.f32.mxu0 0.0
      %1111 = vmatmul.mubr.f32.gmra.mrb[0].mxu0 %v948
      %v1112 = vpop.f32.mrb[0].mxu0
      %v1113 = vadd.f32 0.0, %v1112
      %v1114 = vpop.f32.mrb[0].mxu0
      %v1115 = vadd.f32 0.0, %v1114
      %1116 = vmatprep.mubr.f32.mxu0 0.0
      %1117 = vmatmul.mubr.f32.gmra.mrb[0].mxu0 %v951
      %v1118 = vpop.f32.mrb[0].mxu0
      %v1119 = vadd.f32 0.0, %v1118
      %v1120 = vpop.f32.mrb[0].mxu0
      %v1121 = vadd.f32 0.0, %v1120
      %1122 = vmatprep.mubr.f32.mxu0 0.0
      %1123 = vmatmul.mubr.f32.gmra.mrb[0].mxu0 %v954
      %v1124 = vpop.f32.mrb[0].mxu0
      %v1125 = vadd.f32 0.0, %v1124
      %v1126 = vpop.f32.mrb[0].mxu0
      %v1127 = vadd.f32 0.0, %v1126
      %1128 = vmatprep.mubr.f32.mxu0 0.0
      %1129 = vmatmul.mubr.f32.gmra.mrb[0].mxu0 %v957
      %v1130 = vpop.f32.mrb[0].mxu0
      %v1131 = vadd.f32 0.0, %v1130
      %v1132 = vpop.f32.mrb[0].mxu0
      %v1133 = vadd.f32 0.0, %v1132
      %1134 = vmatprep.mubr.f32.mxu0 0.0
      %1135 = vmatmul.mubr.f32.gmra.mrb[0].mxu0 %v960
      %v1136 = vpop.f32.mrb[0].mxu0
      %v1137 = vadd.f32 0.0, %v1136
      %v1138 = vpop.f32.mrb[0].mxu0
      %v1139 = vadd.f32 0.0, %v1138
      %1140 = vmatprep.mubr.f32.mxu0 0.0
      %1141 = vmatmul.mubr.f32.gmra.mrb[0].mxu0 %v963
      %v1142 = vpop.f32.mrb[0].mxu0
      %v1143 = vadd.f32 0.0, %v1142
      %v1144 = vpop.f32.mrb[0].mxu0
      %v1145 = vadd.f32 0.0, %v1144
      %1146 = vmatprep.mubr.f32.mxu0 0.0
      %1147 = vmatmul.mubr.f32.gmra.mrb[0].mxu0 %v966
      %v1148 = vpop.f32.mrb[0].mxu0
      %v1149 = vadd.f32 0.0, %v1148
      %v1150 = vpop.f32.mrb[0].mxu0
      %v1151 = vadd.f32 0.0, %v1150
      %1152 = vmatprep.mubr.f32.mxu0 0.0
      %1153 = vmatmul.mubr.f32.gmra.mrb[0].mxu0 %v969
      %v1154 = vpop.f32.mrb[0].mxu0
      %v1155 = vadd.f32 0.0, %v1154
      %v1156 = vpop.f32.mrb[0].mxu0
      %v1157 = vadd.f32 0.0, %v1156
      %1158 = vmatprep.mubr.f32.mxu0 0.0
      %1159 = vmatmul.mubr.f32.gmra.mrb[0].mxu0 %v972
      %v1160 = vpop.f32.mrb[0].mxu0
      %v1161 = vadd.f32 0.0, %v1160
      %v1162 = vpop.f32.mrb[0].mxu0
      %v1163 = vadd.f32 0.0, %v1162
      %1164 = vmatprep.mubr.f32.mxu0 0.0
      %1165 = vmatmul.mubr.f32.gmra.mrb[0].mxu0 %v975
      %v1166 = vpop.f32.mrb[0].mxu0
      %v1167 = vadd.f32 0.0, %v1166
      %v1168 = vpop.f32.mrb[0].mxu0
      %v1169 = vadd.f32 0.0, %v1168
      %1170 = vmatprep.mubr.f32.mxu0 0.0
      %1171 = vmatmul.mubr.f32.gmra.mrb[0].mxu0 %v978
      %v1172 = vpop.f32.mrb[0].mxu0
      %v1173 = vadd.f32 0.0, %v1172
      %v1174 = vpop.f32.mrb[0].mxu0
      %v1175 = vadd.f32 0.0, %v1174
      %1176 = vmatprep.mubr.f32.mxu0 0.0
      %1177 = vmatmul.mubr.f32.gmra.mrb[0].mxu0 %v981
      %v1178 = vpop.f32.mrb[0].mxu0
      %v1179 = vadd.f32 0.0, %v1178
      %v1180 = vpop.f32.mrb[0].mxu0
      %v1181 = vadd.f32 0.0, %v1180
      %1182 = vmatprep.mubr.f32.mxu0 0.0
      %1183 = vmatmul.mubr.f32.gmra.mrb[0].mxu0 %v984
      %v1184 = vpop.f32.mrb[0].mxu0
      %v1185 = vadd.f32 0.0, %v1184
      %v1186 = vpop.f32.mrb[0].mxu0
      %v1187 = vadd.f32 0.0, %v1186
      %1188 = vmatprep.mubr.f32.mxu0 0.0
      %1189 = vmatmul.mubr.f32.gmra.mrb[0].mxu0 %v987
      %v1190 = vpop.f32.mrb[0].mxu0
      %v1191 = vadd.f32 0.0, %v1190
      %v1192 = vpop.f32.mrb[0].mxu0
      %v1193 = vadd.f32 0.0, %v1192
      %1194 = vmatprep.mubr.f32.mxu0 0.0
      %1195 = vmatmul.mubr.f32.gmra.mrb[0].mxu0 %v990
      %v1196 = vpop.f32.mrb[0].mxu0
      %v1197 = vadd.f32 0.0, %v1196
      %v1198 = vpop.f32.mrb[0].mxu0
      %v1199 = vadd.f32 0.0, %v1198
      %1200 = vmatprep.mubr.f32.mxu0 0.0
      %1201 = vmatmul.mubr.f32.gmra.mrb[0].mxu0 %v993
      %v1202 = vpop.f32.mrb[0].mxu0
      %v1203 = vadd.f32 0.0, %v1202
      %v1204 = vpop.f32.mrb[0].mxu0
      %v1205 = vadd.f32 0.0, %v1204
      %1206 = vmatprep.mubr.f32.mxu0 0.0
      %1207 = vmatmul.mubr.f32.gmra.mrb[0].mxu0 %v996
      %v1208 = vpop.f32.mrb[0].mxu0
      %v1209 = vadd.f32 0.0, %v1208
      %v1210 = vpop.f32.mrb[0].mxu0
      %v1211 = vadd.f32 0.0, %v1210
      %1212 = vmatprep.mubr.f32.mxu0 0.0
      %1213 = vmatmul.mubr.f32.gmra.mrb[0].mxu0 %v999
      %v1214 = vpop.f32.mrb[0].mxu0
      %v1215 = vadd.f32 0.0, %v1214
      %v1216 = vpop.f32.mrb[0].mxu0
      %v1217 = vadd.f32 0.0, %v1216
      %1218 = vmatprep.mubr.f32.mxu0 0.0
      %1219 = vmatmul.mubr.f32.gmra.mrb[0].mxu0 %v1002
      %v1220 = vpop.f32.mrb[0].mxu0
      %v1221 = vadd.f32 0.0, %v1220
      %v1222 = vpop.f32.mrb[0].mxu0
      %v1223 = vadd.f32 0.0, %v1222
      %1224 = vmatprep.mubr.f32.mxu0 0.0
      %1225 = vmatmul.mubr.f32.gmra.mrb[0].mxu0 %v1005
      %v1226 = vpop.f32.mrb[0].mxu0
      %v1227 = vadd.f32 0.0, %v1226
      %v1228 = vpop.f32.mrb[0].mxu0
      %v1229 = vadd.f32 0.0, %v1228
      %1230 = vmatprep.mubr.f32.mxu0 0.0
      %1231 = vmatmul.mubr.f32.gmra.mrb[0].mxu0 %v1008
      %v1232 = vpop.f32.mrb[0].mxu0
      %v1233 = vadd.f32 0.0, %v1232
      %v1234 = vpop.f32.mrb[0].mxu0
      %v1235 = vadd.f32 0.0, %v1234
      %1236 = vmatprep.mubr.f32.mxu0 0.0
      %1237 = vmatmul.mubr.f32.gmra.mrb[0].mxu0 %v1011
      %v1238 = vpop.f32.mrb[0].mxu0
      %v1239 = vadd.f32 0.0, %v1238
      %v1240 = vpop.f32.mrb[0].mxu0
      %v1241 = vadd.f32 0.0, %v1240
      %1242 = vmatprep.mubr.f32.mxu0 0.0
      %1243 = vmatmul.mubr.f32.gmra.mrb[0].mxu0 %v1014
      %v1244 = vpop.f32.mrb[0].mxu0
      %v1245 = vadd.f32 0.0, %v1244
      %v1246 = vpop.f32.mrb[0].mxu0
      %v1247 = vadd.f32 0.0, %v1246
      %1248 = vmatprep.mubr.f32.mxu0 0.0
      %1249 = vmatmul.mubr.f32.gmra.mrb[0].mxu0 %v1017
      %v1250 = vpop.f32.mrb[0].mxu0
      %v1251 = vadd.f32 0.0, %v1250
      %v1252 = vpop.f32.mrb[0].mxu0
      %v1253 = vadd.f32 0.0, %v1252
      %1254 = vmatprep.mubr.f32.mxu0 0.0
      %1255 = vmatmul.mubr.f32.gmra.mrb[0].mxu0 %v1020
      %v1256 = vpop.f32.mrb[0].mxu0
      %v1257 = vadd.f32 0.0, %v1256
      %v1258 = vpop.f32.mrb[0].mxu0
      %v1259 = vadd.f32 0.0, %v1258
      %1260 = vdwg.mxu0
      %v1261 = vadd.f32 %v814, %v1095
      %v1262 = vadd.f32 %v815, %v1097
      %v1263 = vadd.f32 %v816, %v1101
      %v1264 = vadd.f32 %v817, %v1103
      %v1265 = vadd.f32 %v818, %v1107
      %v1266 = vadd.f32 %v819, %v1109
      %v1267 = vadd.f32 %v820, %v1113
      %v1268 = vadd.f32 %v821, %v1115
      %v1269 = vadd.f32 %v822, %v1119
      %v1270 = vadd.f32 %v823, %v1121
      %v1271 = vadd.f32 %v824, %v1125
      %v1272 = vadd.f32 %v825, %v1127
      %v1273 = vadd.f32 %v826, %v1131
      %v1274 = vadd.f32 %v827, %v1133
      %v1275 = vadd.f32 %v828, %v1137
      %v1276 = vadd.f32 %v829, %v1139
      %v1277 = vadd.f32 %v830, %v1143
      %v1278 = vadd.f32 %v831, %v1145
      %v1279 = vadd.f32 %v832, %v1149
      %v1280 = vadd.f32 %v833, %v1151
      %v1281 = vadd.f32 %v834, %v1155
      %v1282 = vadd.f32 %v835, %v1157
      %v1283 = vadd.f32 %v836, %v1161
      %v1284 = vadd.f32 %v837, %v1163
      %v1285 = vadd.f32 %v838, %v1167
      %v1286 = vadd.f32 %v839, %v1169
      %v1287 = vadd.f32 %v840, %v1173
      %v1288 = vadd.f32 %v841, %v1175
      %v1289 = vadd.f32 %v842, %v1179
      %v1290 = vadd.f32 %v843, %v1181
      %v1291 = vadd.f32 %v844, %v1185
      %v1292 = vadd.f32 %v845, %v1187
      %v1293 = vadd.f32 %v846, %v1191
      %v1294 = vadd.f32 %v847, %v1193
      %v1295 = vadd.f32 %v848, %v1197
      %v1296 = vadd.f32 %v849, %v1199
      %v1297 = vadd.f32 %v850, %v1203
      %v1298 = vadd.f32 %v851, %v1205
      %v1299 = vadd.f32 %v852, %v1209
      %v1300 = vadd.f32 %v853, %v1211
      %v1301 = vadd.f32 %v854, %v1215
      %v1302 = vadd.f32 %v855, %v1217
      %v1303 = vadd.f32 %v856, %v1221
      %v1304 = vadd.f32 %v857, %v1223
      %v1305 = vadd.f32 %v858, %v1227
      %v1306 = vadd.f32 %v859, %v1229
      %v1307 = vadd.f32 %v860, %v1233
      %v1308 = vadd.f32 %v861, %v1235
      %v1309 = vadd.f32 %v862, %v1239
      %v1310 = vadd.f32 %v863, %v1241
      %v1311 = vadd.f32 %v864, %v1245
      %v1312 = vadd.f32 %v865, %v1247
      %v1313 = vadd.f32 %v866, %v1251
      %v1314 = vadd.f32 %v867, %v1253
      %v1315 = vadd.f32 %v868, %v1257
      %v1316 = vadd.f32 %v869, %v1259
      %v1317 = vrot.slane %v441, 2
      %v1318 = vrot.slane %v442, 2
      %v1319 = vrot.slane %v443, 2
      %v1320 = vrot.slane %v444, 2
      %v1321 = vrot.slane %v445, 2
      %v1322 = vrot.slane %v446, 2
      %v1323 = vrot.slane %v447, 2
      %v1324 = vrot.slane %v448, 2
      %v1325 = vrot.slane %v449, 2
      %v1326 = vrot.slane %v450, 2
      %v1327 = vrot.slane %v451, 2
      %v1328 = vrot.slane %v452, 2
      %v1329 = vrot.slane %v453, 2
      %v1330 = vrot.slane %v454, 2
      %v1331 = vrot.slane %v455, 2
      %v1332 = vrot.slane %v456, 2
      %v1333 = vrot.slane %v457, 2
      %v1334 = vrot.slane %v458, 2
      %v1335 = vrot.slane %v459, 2
      %v1336 = vrot.slane %v460, 2
      %v1337 = vrot.slane %v461, 2
      %v1338 = vrot.slane %v462, 2
      %v1339 = vrot.slane %v463, 2
      %v1340 = vrot.slane %v464, 2
      %v1341 = vrot.slane %v465, 2
      %v1342 = vrot.slane %v466, 2
      %v1343 = vrot.slane %v467, 2
      %v1344 = vrot.slane %v468, 2
      %vm1345 = vcmp.lt.s32.totalorder %v899, 6
      %v1346 = vsel %vm1345, %v1343, %v1344
      %v1347 = vsel %vm1345, %v1342, %v1343
      %v1348 = vsel %vm1345, %v1341, %v1342
      %v1349 = vsel %vm1345, %v1340, %v1341
      %v1350 = vsel %vm1345, %v1339, %v1340
      %v1351 = vsel %vm1345, %v1338, %v1339
      %v1352 = vsel %vm1345, %v1337, %v1338
      %v1353 = vsel %vm1345, %v1336, %v1337
      %v1354 = vsel %vm1345, %v1335, %v1336
      %v1355 = vsel %vm1345, %v1334, %v1335
      %v1356 = vsel %vm1345, %v1333, %v1334
      %v1357 = vsel %vm1345, %v1332, %v1333
      %v1358 = vsel %vm1345, %v1331, %v1332
      %v1359 = vsel %vm1345, %v1330, %v1331
      %v1360 = vsel %vm1345, %v1329, %v1330
      %v1361 = vsel %vm1345, %v1328, %v1329
      %v1362 = vsel %vm1345, %v1327, %v1328
      %v1363 = vsel %vm1345, %v1326, %v1327
      %v1364 = vsel %vm1345, %v1325, %v1326
      %v1365 = vsel %vm1345, %v1324, %v1325
      %v1366 = vsel %vm1345, %v1323, %v1324
      %v1367 = vsel %vm1345, %v1322, %v1323
      %v1368 = vsel %vm1345, %v1321, %v1322
      %v1369 = vsel %vm1345, %v1320, %v1321
      %v1370 = vsel %vm1345, %v1319, %v1320
      %v1371 = vsel %vm1345, %v1318, %v1319
      %v1372 = vsel %vm1345, %v1317, %v1318
      %v1373 = vsel %vm1345, %v1344, %v1317
      %s1374 = scalar_lea.vmem %s1, 128
      %v1375 = vld [vmem:[%s1374] sm:$0xff]
      %v1376 = vld [vmem:[%s1374 + $0x8] sm:$0xff]
      %v1377 = vld [vmem:[%s1374 + $0x10] sm:$0xff]
      %v1378 = vld [vmem:[%s1374 + $0x18] sm:$0xff]
      %v1379 = vld [vmem:[%s1374 + $0x20] sm:$0xff]
      %v1380 = vld [vmem:[%s1374 + $0x28] sm:$0xff]
      %v1381 = vld [vmem:[%s1374 + $0x30] sm:$0xf]
      %v1382 = vld [vmem:[%s1374 + $0x38] sm:$0xf]
      %v1384 = vsel %vm489, %v1372, 0
      %v1387 = vsel %vm489, %v1371, 0
      %v1390 = vsel %vm489, %v1370, 0
      %v1393 = vsel %vm489, %v1369, 0
      %v1396 = vsel %vm489, %v1368, 0
      %v1399 = vsel %vm489, %v1367, 0
      %v1402 = vsel %vm489, %v1366, 0
      %v1405 = vsel %vm489, %v1365, 0
      %v1408 = vsel %vm489, %v1364, 0
      %v1411 = vsel %vm489, %v1363, 0
      %v1414 = vsel %vm489, %v1362, 0
      %v1417 = vsel %vm489, %v1361, 0
      %v1420 = vsel %vm489, %v1360, 0
      %v1423 = vsel %vm489, %v1359, 0
      %v1426 = vsel %vm489, %v1358, 0
      %v1429 = vsel %vm489, %v1357, 0
      %v1432 = vsel %vm489, %v1356, 0
      %v1435 = vsel %vm489, %v1355, 0
      %v1438 = vsel %vm489, %v1354, 0
      %v1441 = vsel %vm489, %v1353, 0
      %v1444 = vsel %vm489, %v1352, 0
      %v1447 = vsel %vm489, %v1351, 0
      %v1450 = vsel %vm489, %v1350, 0
      %v1453 = vsel %vm489, %v1349, 0
      %v1456 = vsel %vm489, %v1348, 0
      %v1459 = vsel %vm489, %v1347, 0
      %v1462 = vsel %vm489, %v1346, 0
      %v1465 = vsel %vm489, %v1373, 0
      %v1468 = vsel %vm574, %v1381, 0
      %v1471 = vsel %vm574, %v1382, 0
      %1473 = vmatprep.subr.mxu0 %v1376
      %1474 = vmatpush1.msra.mxu0 %v1375
      %1475 = vmatprep.subr.mxu0 %v1378
      %1476 = vmatpush1.msra.mxu0 %v1377
      %1477 = vmatprep.subr.mxu0 %v1380
      %1478 = vmatpush1.msra.mxu0 %v1379
      %1479 = vmatprep.subr.mxu0 %v1471
      %1480 = vmatpush1.msra.mxu0 %v1468
      %1481 = vmatprep.subr.mxu0 0.0
      %1482 = vmatpush1.msra.mxu0 0.0
      %1483 = vmatprep.subr.mxu0 0.0
      %1484 = vmatpush1.msra.mxu0 0.0
      %1485 = vmatprep.subr.mxu0 0.0
      %1486 = vmatpush1.msra.mxu0 0.0
      %1487 = vmatprep.subr.mxu0 0.0
      %1488 = vmatpush1.msra.mxu0 0.0
      %1489 = vmatprep.subr.mxu0 0.0
      %1490 = vmatpush1.msra.mxu0 0.0
      %1491 = vmatprep.subr.mxu0 0.0
      %1492 = vmatpush1.msra.mxu0 0.0
      %1493 = vmatprep.subr.mxu0 0.0
      %1494 = vmatpush1.msra.mxu0 0.0
      %1495 = vmatprep.subr.mxu0 0.0
      %1496 = vmatpush1.msra.mxu0 0.0
      %1497 = vmatprep.subr.mxu0 0.0
      %1498 = vmatpush1.msra.mxu0 0.0
      %1499 = vmatprep.subr.mxu0 0.0
      %1500 = vmatpush1.msra.mxu0 0.0
      %1501 = vmatprep.subr.mxu0 0.0
      %1502 = vmatpush1.msra.mxu0 0.0
      %1503 = vmatprep.subr.mxu0 0.0
      %1504 = vmatpush1.msra.mxu0 0.0
      %1505 = vmatprep.subr.mxu0 0.0
      %1506 = vmatpush1.msra.mxu0 0.0
      %1507 = vmatprep.subr.mxu0 0.0
      %1508 = vmatpush1.msra.mxu0 0.0
      %1509 = vmatprep.subr.mxu0 0.0
      %1510 = vmatpush1.msra.mxu0 0.0
      %1511 = vmatprep.subr.mxu0 0.0
      %1512 = vmatpush1.msra.mxu0 0.0
      %1513 = vmatprep.subr.mxu0 0.0
      %1514 = vmatpush1.msra.mxu0 0.0
      %1515 = vmatprep.subr.mxu0 0.0
      %1516 = vmatpush1.msra.mxu0 0.0
      %1517 = vmatprep.subr.mxu0 0.0
      %1518 = vmatpush1.msra.mxu0 0.0
      %1519 = vmatprep.subr.mxu0 0.0
      %1520 = vmatpush1.msra.mxu0 0.0
      %1521 = vmatprep.subr.mxu0 0.0
      %1522 = vmatpush1.msra.mxu0 0.0
      %1523 = vmatprep.subr.mxu0 0.0
      %1524 = vmatpush1.msra.mxu0 0.0
      %1525 = vmatprep.subr.mxu0 0.0
      %1526 = vmatpush1.msra.mxu0 0.0
      %1527 = vmatprep.subr.mxu0 0.0
      %1528 = vmatpush1.msra.mxu0 0.0
      %1529 = vmatprep.subr.mxu0 0.0
      %1530 = vmatpush1.msra.mxu0 0.0
      %1531 = vmatprep.subr.mxu0 0.0
      %1532 = vmatpush1.msra.mxu0 0.0
      %1533 = vmatprep.subr.mxu0 0.0
      %1534 = vmatpush1.msra.mxu0 0.0
      %1535 = vmatprep.subr.mxu0 0.0
      %1536 = vmatpush1.msra.mxu0 0.0
      %1537 = vmatprep.mubr.f32.mxu0 0.0
      %1538 = vmatmul.mubr.f32.gmra.mrb[0].mxu0 %v1384
      %v1539 = vpop.f32.mrb[0].mxu0
      %v1540 = vadd.f32 0.0, %v1539
      %v1541 = vpop.f32.mrb[0].mxu0
      %v1542 = vadd.f32 0.0, %v1541
      %1543 = vmatprep.mubr.f32.mxu0 0.0
      %1544 = vmatmul.mubr.f32.gmra.mrb[0].mxu0 %v1387
      %v1545 = vpop.f32.mrb[0].mxu0
      %v1546 = vadd.f32 0.0, %v1545
      %v1547 = vpop.f32.mrb[0].mxu0
      %v1548 = vadd.f32 0.0, %v1547
      %1549 = vmatprep.mubr.f32.mxu0 0.0
      %1550 = vmatmul.mubr.f32.gmra.mrb[0].mxu0 %v1390
      %v1551 = vpop.f32.mrb[0].mxu0
      %v1552 = vadd.f32 0.0, %v1551
      %v1553 = vpop.f32.mrb[0].mxu0
      %v1554 = vadd.f32 0.0, %v1553
      %1555 = vmatprep.mubr.f32.mxu0 0.0
      %1556 = vmatmul.mubr.f32.gmra.mrb[0].mxu0 %v1393
      %v1557 = vpop.f32.mrb[0].mxu0
      %v1558 = vadd.f32 0.0, %v1557
      %v1559 = vpop.f32.mrb[0].mxu0
      %v1560 = vadd.f32 0.0, %v1559
      %1561 = vmatprep.mubr.f32.mxu0 0.0
      %1562 = vmatmul.mubr.f32.gmra.mrb[0].mxu0 %v1396
      %v1563 = vpop.f32.mrb[0].mxu0
      %v1564 = vadd.f32 0.0, %v1563
      %v1565 = vpop.f32.mrb[0].mxu0
      %v1566 = vadd.f32 0.0, %v1565
      %1567 = vmatprep.mubr.f32.mxu0 0.0
      %1568 = vmatmul.mubr.f32.gmra.mrb[0].mxu0 %v1399
      %v1569 = vpop.f32.mrb[0].mxu0
      %v1570 = vadd.f32 0.0, %v1569
      %v1571 = vpop.f32.mrb[0].mxu0
      %v1572 = vadd.f32 0.0, %v1571
      %1573 = vmatprep.mubr.f32.mxu0 0.0
      %1574 = vmatmul.mubr.f32.gmra.mrb[0].mxu0 %v1402
      %v1575 = vpop.f32.mrb[0].mxu0
      %v1576 = vadd.f32 0.0, %v1575
      %v1577 = vpop.f32.mrb[0].mxu0
      %v1578 = vadd.f32 0.0, %v1577
      %1579 = vmatprep.mubr.f32.mxu0 0.0
      %1580 = vmatmul.mubr.f32.gmra.mrb[0].mxu0 %v1405
      %v1581 = vpop.f32.mrb[0].mxu0
      %v1582 = vadd.f32 0.0, %v1581
      %v1583 = vpop.f32.mrb[0].mxu0
      %v1584 = vadd.f32 0.0, %v1583
      %1585 = vmatprep.mubr.f32.mxu0 0.0
      %1586 = vmatmul.mubr.f32.gmra.mrb[0].mxu0 %v1408
      %v1587 = vpop.f32.mrb[0].mxu0
      %v1588 = vadd.f32 0.0, %v1587
      %v1589 = vpop.f32.mrb[0].mxu0
      %v1590 = vadd.f32 0.0, %v1589
      %1591 = vmatprep.mubr.f32.mxu0 0.0
      %1592 = vmatmul.mubr.f32.gmra.mrb[0].mxu0 %v1411
      %v1593 = vpop.f32.mrb[0].mxu0
      %v1594 = vadd.f32 0.0, %v1593
      %v1595 = vpop.f32.mrb[0].mxu0
      %v1596 = vadd.f32 0.0, %v1595
      %1597 = vmatprep.mubr.f32.mxu0 0.0
      %1598 = vmatmul.mubr.f32.gmra.mrb[0].mxu0 %v1414
      %v1599 = vpop.f32.mrb[0].mxu0
      %v1600 = vadd.f32 0.0, %v1599
      %v1601 = vpop.f32.mrb[0].mxu0
      %v1602 = vadd.f32 0.0, %v1601
      %1603 = vmatprep.mubr.f32.mxu0 0.0
      %1604 = vmatmul.mubr.f32.gmra.mrb[0].mxu0 %v1417
      %v1605 = vpop.f32.mrb[0].mxu0
      %v1606 = vadd.f32 0.0, %v1605
      %v1607 = vpop.f32.mrb[0].mxu0
      %v1608 = vadd.f32 0.0, %v1607
      %1609 = vmatprep.mubr.f32.mxu0 0.0
      %1610 = vmatmul.mubr.f32.gmra.mrb[0].mxu0 %v1420
      %v1611 = vpop.f32.mrb[0].mxu0
      %v1612 = vadd.f32 0.0, %v1611
      %v1613 = vpop.f32.mrb[0].mxu0
      %v1614 = vadd.f32 0.0, %v1613
      %1615 = vmatprep.mubr.f32.mxu0 0.0
      %1616 = vmatmul.mubr.f32.gmra.mrb[0].mxu0 %v1423
      %v1617 = vpop.f32.mrb[0].mxu0
      %v1618 = vadd.f32 0.0, %v1617
      %v1619 = vpop.f32.mrb[0].mxu0
      %v1620 = vadd.f32 0.0, %v1619
      %1621 = vmatprep.mubr.f32.mxu0 0.0
      %1622 = vmatmul.mubr.f32.gmra.mrb[0].mxu0 %v1426
      %v1623 = vpop.f32.mrb[0].mxu0
      %v1624 = vadd.f32 0.0, %v1623
      %v1625 = vpop.f32.mrb[0].mxu0
      %v1626 = vadd.f32 0.0, %v1625
      %1627 = vmatprep.mubr.f32.mxu0 0.0
      %1628 = vmatmul.mubr.f32.gmra.mrb[0].mxu0 %v1429
      %v1629 = vpop.f32.mrb[0].mxu0
      %v1630 = vadd.f32 0.0, %v1629
      %v1631 = vpop.f32.mrb[0].mxu0
      %v1632 = vadd.f32 0.0, %v1631
      %1633 = vmatprep.mubr.f32.mxu0 0.0
      %1634 = vmatmul.mubr.f32.gmra.mrb[0].mxu0 %v1432
      %v1635 = vpop.f32.mrb[0].mxu0
      %v1636 = vadd.f32 0.0, %v1635
      %v1637 = vpop.f32.mrb[0].mxu0
      %v1638 = vadd.f32 0.0, %v1637
      %1639 = vmatprep.mubr.f32.mxu0 0.0
      %1640 = vmatmul.mubr.f32.gmra.mrb[0].mxu0 %v1435
      %v1641 = vpop.f32.mrb[0].mxu0
      %v1642 = vadd.f32 0.0, %v1641
      %v1643 = vpop.f32.mrb[0].mxu0
      %v1644 = vadd.f32 0.0, %v1643
      %1645 = vmatprep.mubr.f32.mxu0 0.0
      %1646 = vmatmul.mubr.f32.gmra.mrb[0].mxu0 %v1438
      %v1647 = vpop.f32.mrb[0].mxu0
      %v1648 = vadd.f32 0.0, %v1647
      %v1649 = vpop.f32.mrb[0].mxu0
      %v1650 = vadd.f32 0.0, %v1649
      %1651 = vmatprep.mubr.f32.mxu0 0.0
      %1652 = vmatmul.mubr.f32.gmra.mrb[0].mxu0 %v1441
      %v1653 = vpop.f32.mrb[0].mxu0
      %v1654 = vadd.f32 0.0, %v1653
      %v1655 = vpop.f32.mrb[0].mxu0
      %v1656 = vadd.f32 0.0, %v1655
      %1657 = vmatprep.mubr.f32.mxu0 0.0
      %1658 = vmatmul.mubr.f32.gmra.mrb[0].mxu0 %v1444
      %v1659 = vpop.f32.mrb[0].mxu0
      %v1660 = vadd.f32 0.0, %v1659
      %v1661 = vpop.f32.mrb[0].mxu0
      %v1662 = vadd.f32 0.0, %v1661
      %1663 = vmatprep.mubr.f32.mxu0 0.0
      %1664 = vmatmul.mubr.f32.gmra.mrb[0].mxu0 %v1447
      %v1665 = vpop.f32.mrb[0].mxu0
      %v1666 = vadd.f32 0.0, %v1665
      %v1667 = vpop.f32.mrb[0].mxu0
      %v1668 = vadd.f32 0.0, %v1667
      %1669 = vmatprep.mubr.f32.mxu0 0.0
      %1670 = vmatmul.mubr.f32.gmra.mrb[0].mxu0 %v1450
      %v1671 = vpop.f32.mrb[0].mxu0
      %v1672 = vadd.f32 0.0, %v1671
      %v1673 = vpop.f32.mrb[0].mxu0
      %v1674 = vadd.f32 0.0, %v1673
      %1675 = vmatprep.mubr.f32.mxu0 0.0
      %1676 = vmatmul.mubr.f32.gmra.mrb[0].mxu0 %v1453
      %v1677 = vpop.f32.mrb[0].mxu0
      %v1678 = vadd.f32 0.0, %v1677
      %v1679 = vpop.f32.mrb[0].mxu0
      %v1680 = vadd.f32 0.0, %v1679
      %1681 = vmatprep.mubr.f32.mxu0 0.0
      %1682 = vmatmul.mubr.f32.gmra.mrb[0].mxu0 %v1456
      %v1683 = vpop.f32.mrb[0].mxu0
      %v1684 = vadd.f32 0.0, %v1683
      %v1685 = vpop.f32.mrb[0].mxu0
      %v1686 = vadd.f32 0.0, %v1685
      %1687 = vmatprep.mubr.f32.mxu0 0.0
      %1688 = vmatmul.mubr.f32.gmra.mrb[0].mxu0 %v1459
      %v1689 = vpop.f32.mrb[0].mxu0
      %v1690 = vadd.f32 0.0, %v1689
      %v1691 = vpop.f32.mrb[0].mxu0
      %v1692 = vadd.f32 0.0, %v1691
      %1693 = vmatprep.mubr.f32.mxu0 0.0
      %1694 = vmatmul.mubr.f32.gmra.mrb[0].mxu0 %v1462
      %v1695 = vpop.f32.mrb[0].mxu0
      %v1696 = vadd.f32 0.0, %v1695
      %v1697 = vpop.f32.mrb[0].mxu0
      %v1698 = vadd.f32 0.0, %v1697
      %1699 = vmatprep.mubr.f32.mxu0 0.0
      %1700 = vmatmul.mubr.f32.gmra.mrb[0].mxu0 %v1465
      %v1701 = vpop.f32.mrb[0].mxu0
      %v1702 = vadd.f32 0.0, %v1701
      %v1703 = vpop.f32.mrb[0].mxu0
      %v1704 = vadd.f32 0.0, %v1703
      %1705 = vdwg.mxu0
      %v1706 = vadd.f32 %v1261, %v1540
      %v1707 = vadd.f32 %v1262, %v1542
      %v1708 = vadd.f32 %v1263, %v1546
      %v1709 = vadd.f32 %v1264, %v1548
      %v1710 = vadd.f32 %v1265, %v1552
      %v1711 = vadd.f32 %v1266, %v1554
      %v1712 = vadd.f32 %v1267, %v1558
      %v1713 = vadd.f32 %v1268, %v1560
      %v1714 = vadd.f32 %v1269, %v1564
      %v1715 = vadd.f32 %v1270, %v1566
      %v1716 = vadd.f32 %v1271, %v1570
      %v1717 = vadd.f32 %v1272, %v1572
      %v1718 = vadd.f32 %v1273, %v1576
      %v1719 = vadd.f32 %v1274, %v1578
      %v1720 = vadd.f32 %v1275, %v1582
      %v1721 = vadd.f32 %v1276, %v1584
      %v1722 = vadd.f32 %v1277, %v1588
      %v1723 = vadd.f32 %v1278, %v1590
      %v1724 = vadd.f32 %v1279, %v1594
      %v1725 = vadd.f32 %v1280, %v1596
      %v1726 = vadd.f32 %v1281, %v1600
      %v1727 = vadd.f32 %v1282, %v1602
      %v1728 = vadd.f32 %v1283, %v1606
      %v1729 = vadd.f32 %v1284, %v1608
      %v1730 = vadd.f32 %v1285, %v1612
      %v1731 = vadd.f32 %v1286, %v1614
      %v1732 = vadd.f32 %v1287, %v1618
      %v1733 = vadd.f32 %v1288, %v1620
      %v1734 = vadd.f32 %v1289, %v1624
      %v1735 = vadd.f32 %v1290, %v1626
      %v1736 = vadd.f32 %v1291, %v1630
      %v1737 = vadd.f32 %v1292, %v1632
      %v1738 = vadd.f32 %v1293, %v1636
      %v1739 = vadd.f32 %v1294, %v1638
      %v1740 = vadd.f32 %v1295, %v1642
      %v1741 = vadd.f32 %v1296, %v1644
      %v1742 = vadd.f32 %v1297, %v1648
      %v1743 = vadd.f32 %v1298, %v1650
      %v1744 = vadd.f32 %v1299, %v1654
      %v1745 = vadd.f32 %v1300, %v1656
      %v1746 = vadd.f32 %v1301, %v1660
      %v1747 = vadd.f32 %v1302, %v1662
      %v1748 = vadd.f32 %v1303, %v1666
      %v1749 = vadd.f32 %v1304, %v1668
      %v1750 = vadd.f32 %v1305, %v1672
      %v1751 = vadd.f32 %v1306, %v1674
      %v1752 = vadd.f32 %v1307, %v1678
      %v1753 = vadd.f32 %v1308, %v1680
      %v1754 = vadd.f32 %v1309, %v1684
      %v1755 = vadd.f32 %v1310, %v1686
      %v1756 = vadd.f32 %v1311, %v1690
      %v1757 = vadd.f32 %v1312, %v1692
      %v1758 = vadd.f32 %v1313, %v1696
      %v1759 = vadd.f32 %v1314, %v1698
      %v1760 = vadd.f32 %v1315, %v1702
      %v1761 = vadd.f32 %v1316, %v1704
      %v1762 = vrot.slane %v441, 3
      %v1763 = vrot.slane %v442, 3
      %v1764 = vrot.slane %v443, 3
      %v1765 = vrot.slane %v444, 3
      %v1766 = vrot.slane %v445, 3
      %v1767 = vrot.slane %v446, 3
      %v1768 = vrot.slane %v447, 3
      %v1769 = vrot.slane %v448, 3
      %v1770 = vrot.slane %v449, 3
      %v1771 = vrot.slane %v450, 3
      %v1772 = vrot.slane %v451, 3
      %v1773 = vrot.slane %v452, 3
      %v1774 = vrot.slane %v453, 3
      %v1775 = vrot.slane %v454, 3
      %v1776 = vrot.slane %v455, 3
      %v1777 = vrot.slane %v456, 3
      %v1778 = vrot.slane %v457, 3
      %v1779 = vrot.slane %v458, 3
      %v1780 = vrot.slane %v459, 3
      %v1781 = vrot.slane %v460, 3
      %v1782 = vrot.slane %v461, 3
      %v1783 = vrot.slane %v462, 3
      %v1784 = vrot.slane %v463, 3
      %v1785 = vrot.slane %v464, 3
      %v1786 = vrot.slane %v465, 3
      %v1787 = vrot.slane %v466, 3
      %v1788 = vrot.slane %v467, 3
      %v1789 = vrot.slane %v468, 3
      %vm1790 = vcmp.lt.s32.totalorder %v899, 5
      %v1791 = vsel %vm1790, %v1788, %v1789
      %v1792 = vsel %vm1790, %v1787, %v1788
      %v1793 = vsel %vm1790, %v1786, %v1787
      %v1794 = vsel %vm1790, %v1785, %v1786
      %v1795 = vsel %vm1790, %v1784, %v1785
      %v1796 = vsel %vm1790, %v1783, %v1784
      %v1797 = vsel %vm1790, %v1782, %v1783
      %v1798 = vsel %vm1790, %v1781, %v1782
      %v1799 = vsel %vm1790, %v1780, %v1781
      %v1800 = vsel %vm1790, %v1779, %v1780
      %v1801 = vsel %vm1790, %v1778, %v1779
      %v1802 = vsel %vm1790, %v1777, %v1778
      %v1803 = vsel %vm1790, %v1776, %v1777
      %v1804 = vsel %vm1790, %v1775, %v1776
      %v1805 = vsel %vm1790, %v1774, %v1775
      %v1806 = vsel %vm1790, %v1773, %v1774
      %v1807 = vsel %vm1790, %v1772, %v1773
      %v1808 = vsel %vm1790, %v1771, %v1772
      %v1809 = vsel %vm1790, %v1770, %v1771
      %v1810 = vsel %vm1790, %v1769, %v1770
      %v1811 = vsel %vm1790, %v1768, %v1769
      %v1812 = vsel %vm1790, %v1767, %v1768
      %v1813 = vsel %vm1790, %v1766, %v1767
      %v1814 = vsel %vm1790, %v1765, %v1766
      %v1815 = vsel %vm1790, %v1764, %v1765
      %v1816 = vsel %vm1790, %v1763, %v1764
      %v1817 = vsel %vm1790, %v1762, %v1763
      %v1818 = vsel %vm1790, %v1789, %v1762
      %s1819 = scalar_lea.vmem %s1, 192
      %v1820 = vld [vmem:[%s1819] sm:$0xff]
      %v1821 = vld [vmem:[%s1819 + $0x8] sm:$0xff]
      %v1822 = vld [vmem:[%s1819 + $0x10] sm:$0xff]
      %v1823 = vld [vmem:[%s1819 + $0x18] sm:$0xff]
      %v1824 = vld [vmem:[%s1819 + $0x20] sm:$0xff]
      %v1825 = vld [vmem:[%s1819 + $0x28] sm:$0xff]
      %v1826 = vld [vmem:[%s1819 + $0x30] sm:$0xf]
      %v1827 = vld [vmem:[%s1819 + $0x38] sm:$0xf]
      %v1829 = vsel %vm489, %v1817, 0
      %v1832 = vsel %vm489, %v1816, 0
      %v1835 = vsel %vm489, %v1815, 0
      %v1838 = vsel %vm489, %v1814, 0
      %v1841 = vsel %vm489, %v1813, 0
      %v1844 = vsel %vm489, %v1812, 0
      %v1847 = vsel %vm489, %v1811, 0
      %v1850 = vsel %vm489, %v1810, 0
      %v1853 = vsel %vm489, %v1809, 0
      %v1856 = vsel %vm489, %v1808, 0
      %v1859 = vsel %vm489, %v1807, 0
      %v1862 = vsel %vm489, %v1806, 0
      %v1865 = vsel %vm489, %v1805, 0
      %v1868 = vsel %vm489, %v1804, 0
      %v1871 = vsel %vm489, %v1803, 0
      %v1874 = vsel %vm489, %v1802, 0
      %v1877 = vsel %vm489, %v1801, 0
      %v1880 = vsel %vm489, %v1800, 0
      %v1883 = vsel %vm489, %v1799, 0
      %v1886 = vsel %vm489, %v1798, 0
      %v1889 = vsel %vm489, %v1797, 0
      %v1892 = vsel %vm489, %v1796, 0
      %v1895 = vsel %vm489, %v1795, 0
      %v1898 = vsel %vm489, %v1794, 0
      %v1901 = vsel %vm489, %v1793, 0
      %v1904 = vsel %vm489, %v1792, 0
      %v1907 = vsel %vm489, %v1791, 0
      %v1910 = vsel %vm489, %v1818, 0
      %v1913 = vsel %vm574, %v1826, 0
      %v1916 = vsel %vm574, %v1827, 0
      %1918 = vmatprep.subr.mxu0 %v1821
      %1919 = vmatpush1.msra.mxu0 %v1820
      %1920 = vmatprep.subr.mxu0 %v1823
      %1921 = vmatpush1.msra.mxu0 %v1822
      %1922 = vmatprep.subr.mxu0 %v1825
      %1923 = vmatpush1.msra.mxu0 %v1824
      %1924 = vmatprep.subr.mxu0 %v1916
      %1925 = vmatpush1.msra.mxu0 %v1913
      %1926 = vmatprep.subr.mxu0 0.0
      %1927 = vmatpush1.msra.mxu0 0.0
      %1928 = vmatprep.subr.mxu0 0.0
      %1929 = vmatpush1.msra.mxu0 0.0
      %1930 = vmatprep.subr.mxu0 0.0
      %1931 = vmatpush1.msra.mxu0 0.0
      %1932 = vmatprep.subr.mxu0 0.0
      %1933 = vmatpush1.msra.mxu0 0.0
      %1934 = vmatprep.subr.mxu0 0.0
      %1935 = vmatpush1.msra.mxu0 0.0
      %1936 = vmatprep.subr.mxu0 0.0
      %1937 = vmatpush1.msra.mxu0 0.0
      %1938 = vmatprep.subr.mxu0 0.0
      %1939 = vmatpush1.msra.mxu0 0.0
      %1940 = vmatprep.subr.mxu0 0.0
      %1941 = vmatpush1.msra.mxu0 0.0
      %1942 = vmatprep.subr.mxu0 0.0
      %1943 = vmatpush1.msra.mxu0 0.0
      %1944 = vmatprep.subr.mxu0 0.0
      %1945 = vmatpush1.msra.mxu0 0.0
      %1946 = vmatprep.subr.mxu0 0.0
      %1947 = vmatpush1.msra.mxu0 0.0
      %1948 = vmatprep.subr.mxu0 0.0
      %1949 = vmatpush1.msra.mxu0 0.0
      %1950 = vmatprep.subr.mxu0 0.0
      %1951 = vmatpush1.msra.mxu0 0.0
      %1952 = vmatprep.subr.mxu0 0.0
      %1953 = vmatpush1.msra.mxu0 0.0
      %1954 = vmatprep.subr.mxu0 0.0
      %1955 = vmatpush1.msra.mxu0 0.0
      %1956 = vmatprep.subr.mxu0 0.0
      %1957 = vmatpush1.msra.mxu0 0.0
      %1958 = vmatprep.subr.mxu0 0.0
      %1959 = vmatpush1.msra.mxu0 0.0
      %1960 = vmatprep.subr.mxu0 0.0
      %1961 = vmatpush1.msra.mxu0 0.0
      %1962 = vmatprep.subr.mxu0 0.0
      %1963 = vmatpush1.msra.mxu0 0.0
      %1964 = vmatprep.subr.mxu0 0.0
      %1965 = vmatpush1.msra.mxu0 0.0
      %1966 = vmatprep.subr.mxu0 0.0
      %1967 = vmatpush1.msra.mxu0 0.0
      %1968 = vmatprep.subr.mxu0 0.0
      %1969 = vmatpush1.msra.mxu0 0.0
      %1970 = vmatprep.subr.mxu0 0.0
      %1971 = vmatpush1.msra.mxu0 0.0
      %1972 = vmatprep.subr.mxu0 0.0
      %1973 = vmatpush1.msra.mxu0 0.0
      %1974 = vmatprep.subr.mxu0 0.0
      %1975 = vmatpush1.msra.mxu0 0.0
      %1976 = vmatprep.subr.mxu0 0.0
      %1977 = vmatpush1.msra.mxu0 0.0
      %1978 = vmatprep.subr.mxu0 0.0
      %1979 = vmatpush1.msra.mxu0 0.0
      %1980 = vmatprep.subr.mxu0 0.0
      %1981 = vmatpush1.msra.mxu0 0.0
      %1982 = vmatprep.mubr.f32.mxu0 0.0
      %1983 = vmatmul.mubr.f32.gmra.mrb[0].mxu0 %v1829
      %v1984 = vpop.f32.mrb[0].mxu0
      %v1985 = vadd.f32 0.0, %v1984
      %v1986 = vpop.f32.mrb[0].mxu0
      %v1987 = vadd.f32 0.0, %v1986
      %1988 = vmatprep.mubr.f32.mxu0 0.0
      %1989 = vmatmul.mubr.f32.gmra.mrb[0].mxu0 %v1832
      %v1990 = vpop.f32.mrb[0].mxu0
      %v1991 = vadd.f32 0.0, %v1990
      %v1992 = vpop.f32.mrb[0].mxu0
      %v1993 = vadd.f32 0.0, %v1992
      %1994 = vmatprep.mubr.f32.mxu0 0.0
      %1995 = vmatmul.mubr.f32.gmra.mrb[0].mxu0 %v1835
      %v1996 = vpop.f32.mrb[0].mxu0
      %v1997 = vadd.f32 0.0, %v1996
      %v1998 = vpop.f32.mrb[0].mxu0
      %v1999 = vadd.f32 0.0, %v1998
      %2000 = vmatprep.mubr.f32.mxu0 0.0
      %2001 = vmatmul.mubr.f32.gmra.mrb[0].mxu0 %v1838
      %v2002 = vpop.f32.mrb[0].mxu0
      %v2003 = vadd.f32 0.0, %v2002
      %v2004 = vpop.f32.mrb[0].mxu0
      %v2005 = vadd.f32 0.0, %v2004
      %2006 = vmatprep.mubr.f32.mxu0 0.0
      %2007 = vmatmul.mubr.f32.gmra.mrb[0].mxu0 %v1841
      %v2008 = vpop.f32.mrb[0].mxu0
      %v2009 = vadd.f32 0.0, %v2008
      %v2010 = vpop.f32.mrb[0].mxu0
      %v2011 = vadd.f32 0.0, %v2010
      %2012 = vmatprep.mubr.f32.mxu0 0.0
      %2013 = vmatmul.mubr.f32.gmra.mrb[0].mxu0 %v1844
      %v2014 = vpop.f32.mrb[0].mxu0
      %v2015 = vadd.f32 0.0, %v2014
      %v2016 = vpop.f32.mrb[0].mxu0
      %v2017 = vadd.f32 0.0, %v2016
      %2018 = vmatprep.mubr.f32.mxu0 0.0
      %2019 = vmatmul.mubr.f32.gmra.mrb[0].mxu0 %v1847
      %v2020 = vpop.f32.mrb[0].mxu0
      %v2021 = vadd.f32 0.0, %v2020
      %v2022 = vpop.f32.mrb[0].mxu0
      %v2023 = vadd.f32 0.0, %v2022
      %2024 = vmatprep.mubr.f32.mxu0 0.0
      %2025 = vmatmul.mubr.f32.gmra.mrb[0].mxu0 %v1850
      %v2026 = vpop.f32.mrb[0].mxu0
      %v2027 = vadd.f32 0.0, %v2026
      %v2028 = vpop.f32.mrb[0].mxu0
      %v2029 = vadd.f32 0.0, %v2028
      %2030 = vmatprep.mubr.f32.mxu0 0.0
      %2031 = vmatmul.mubr.f32.gmra.mrb[0].mxu0 %v1853
      %v2032 = vpop.f32.mrb[0].mxu0
      %v2033 = vadd.f32 0.0, %v2032
      %v2034 = vpop.f32.mrb[0].mxu0
      %v2035 = vadd.f32 0.0, %v2034
      %2036 = vmatprep.mubr.f32.mxu0 0.0
      %2037 = vmatmul.mubr.f32.gmra.mrb[0].mxu0 %v1856
      %v2038 = vpop.f32.mrb[0].mxu0
      %v2039 = vadd.f32 0.0, %v2038
      %v2040 = vpop.f32.mrb[0].mxu0
      %v2041 = vadd.f32 0.0, %v2040
      %2042 = vmatprep.mubr.f32.mxu0 0.0
      %2043 = vmatmul.mubr.f32.gmra.mrb[0].mxu0 %v1859
      %v2044 = vpop.f32.mrb[0].mxu0
      %v2045 = vadd.f32 0.0, %v2044
      %v2046 = vpop.f32.mrb[0].mxu0
      %v2047 = vadd.f32 0.0, %v2046
      %2048 = vmatprep.mubr.f32.mxu0 0.0
      %2049 = vmatmul.mubr.f32.gmra.mrb[0].mxu0 %v1862
      %v2050 = vpop.f32.mrb[0].mxu0
      %v2051 = vadd.f32 0.0, %v2050
      %v2052 = vpop.f32.mrb[0].mxu0
      %v2053 = vadd.f32 0.0, %v2052
      %2054 = vmatprep.mubr.f32.mxu0 0.0
      %2055 = vmatmul.mubr.f32.gmra.mrb[0].mxu0 %v1865
      %v2056 = vpop.f32.mrb[0].mxu0
      %v2057 = vadd.f32 0.0, %v2056
      %v2058 = vpop.f32.mrb[0].mxu0
      %v2059 = vadd.f32 0.0, %v2058
      %2060 = vmatprep.mubr.f32.mxu0 0.0
      %2061 = vmatmul.mubr.f32.gmra.mrb[0].mxu0 %v1868
      %v2062 = vpop.f32.mrb[0].mxu0
      %v2063 = vadd.f32 0.0, %v2062
      %v2064 = vpop.f32.mrb[0].mxu0
      %v2065 = vadd.f32 0.0, %v2064
      %2066 = vmatprep.mubr.f32.mxu0 0.0
      %2067 = vmatmul.mubr.f32.gmra.mrb[0].mxu0 %v1871
      %v2068 = vpop.f32.mrb[0].mxu0
      %v2069 = vadd.f32 0.0, %v2068
      %v2070 = vpop.f32.mrb[0].mxu0
      %v2071 = vadd.f32 0.0, %v2070
      %2072 = vmatprep.mubr.f32.mxu0 0.0
      %2073 = vmatmul.mubr.f32.gmra.mrb[0].mxu0 %v1874
      %v2074 = vpop.f32.mrb[0].mxu0
      %v2075 = vadd.f32 0.0, %v2074
      %v2076 = vpop.f32.mrb[0].mxu0
      %v2077 = vadd.f32 0.0, %v2076
      %2078 = vmatprep.mubr.f32.mxu0 0.0
      %2079 = vmatmul.mubr.f32.gmra.mrb[0].mxu0 %v1877
      %v2080 = vpop.f32.mrb[0].mxu0
      %v2081 = vadd.f32 0.0, %v2080
      %v2082 = vpop.f32.mrb[0].mxu0
      %v2083 = vadd.f32 0.0, %v2082
      %2084 = vmatprep.mubr.f32.mxu0 0.0
      %2085 = vmatmul.mubr.f32.gmra.mrb[0].mxu0 %v1880
      %v2086 = vpop.f32.mrb[0].mxu0
      %v2087 = vadd.f32 0.0, %v2086
      %v2088 = vpop.f32.mrb[0].mxu0
      %v2089 = vadd.f32 0.0, %v2088
      %2090 = vmatprep.mubr.f32.mxu0 0.0
      %2091 = vmatmul.mubr.f32.gmra.mrb[0].mxu0 %v1883
      %v2092 = vpop.f32.mrb[0].mxu0
      %v2093 = vadd.f32 0.0, %v2092
      %v2094 = vpop.f32.mrb[0].mxu0
      %v2095 = vadd.f32 0.0, %v2094
      %2096 = vmatprep.mubr.f32.mxu0 0.0
      %2097 = vmatmul.mubr.f32.gmra.mrb[0].mxu0 %v1886
      %v2098 = vpop.f32.mrb[0].mxu0
      %v2099 = vadd.f32 0.0, %v2098
      %v2100 = vpop.f32.mrb[0].mxu0
      %v2101 = vadd.f32 0.0, %v2100
      %2102 = vmatprep.mubr.f32.mxu0 0.0
      %2103 = vmatmul.mubr.f32.gmra.mrb[0].mxu0 %v1889
      %v2104 = vpop.f32.mrb[0].mxu0
      %v2105 = vadd.f32 0.0, %v2104
      %v2106 = vpop.f32.mrb[0].mxu0
      %v2107 = vadd.f32 0.0, %v2106
      %2108 = vmatprep.mubr.f32.mxu0 0.0
      %2109 = vmatmul.mubr.f32.gmra.mrb[0].mxu0 %v1892
      %v2110 = vpop.f32.mrb[0].mxu0
      %v2111 = vadd.f32 0.0, %v2110
      %v2112 = vpop.f32.mrb[0].mxu0
      %v2113 = vadd.f32 0.0, %v2112
      %2114 = vmatprep.mubr.f32.mxu0 0.0
      %2115 = vmatmul.mubr.f32.gmra.mrb[0].mxu0 %v1895
      %v2116 = vpop.f32.mrb[0].mxu0
      %v2117 = vadd.f32 0.0, %v2116
      %v2118 = vpop.f32.mrb[0].mxu0
      %v2119 = vadd.f32 0.0, %v2118
      %2120 = vmatprep.mubr.f32.mxu0 0.0
      %2121 = vmatmul.mubr.f32.gmra.mrb[0].mxu0 %v1898
      %v2122 = vpop.f32.mrb[0].mxu0
      %v2123 = vadd.f32 0.0, %v2122
      %v2124 = vpop.f32.mrb[0].mxu0
      %v2125 = vadd.f32 0.0, %v2124
      %2126 = vmatprep.mubr.f32.mxu0 0.0
      %2127 = vmatmul.mubr.f32.gmra.mrb[0].mxu0 %v1901
      %v2128 = vpop.f32.mrb[0].mxu0
      %v2129 = vadd.f32 0.0, %v2128
      %v2130 = vpop.f32.mrb[0].mxu0
      %v2131 = vadd.f32 0.0, %v2130
      %2132 = vmatprep.mubr.f32.mxu0 0.0
      %2133 = vmatmul.mubr.f32.gmra.mrb[0].mxu0 %v1904
      %v2134 = vpop.f32.mrb[0].mxu0
      %v2135 = vadd.f32 0.0, %v2134
      %v2136 = vpop.f32.mrb[0].mxu0
      %v2137 = vadd.f32 0.0, %v2136
      %2138 = vmatprep.mubr.f32.mxu0 0.0
      %2139 = vmatmul.mubr.f32.gmra.mrb[0].mxu0 %v1907
      %v2140 = vpop.f32.mrb[0].mxu0
      %v2141 = vadd.f32 0.0, %v2140
      %v2142 = vpop.f32.mrb[0].mxu0
      %v2143 = vadd.f32 0.0, %v2142
      %2144 = vmatprep.mubr.f32.mxu0 0.0
      %2145 = vmatmul.mubr.f32.gmra.mrb[0].mxu0 %v1910
      %v2146 = vpop.f32.mrb[0].mxu0
      %v2147 = vadd.f32 0.0, %v2146
      %v2148 = vpop.f32.mrb[0].mxu0
      %v2149 = vadd.f32 0.0, %v2148
      %2150 = vdwg.mxu0
      %v2151 = vadd.f32 %v1706, %v1985
      %v2152 = vadd.f32 %v1707, %v1987
      %v2153 = vadd.f32 %v1708, %v1991
      %v2154 = vadd.f32 %v1709, %v1993
      %v2155 = vadd.f32 %v1710, %v1997
      %v2156 = vadd.f32 %v1711, %v1999
      %v2157 = vadd.f32 %v1712, %v2003
      %v2158 = vadd.f32 %v1713, %v2005
      %v2159 = vadd.f32 %v1714, %v2009
      %v2160 = vadd.f32 %v1715, %v2011
      %v2161 = vadd.f32 %v1716, %v2015
      %v2162 = vadd.f32 %v1717, %v2017
      %v2163 = vadd.f32 %v1718, %v2021
      %v2164 = vadd.f32 %v1719, %v2023
      %v2165 = vadd.f32 %v1720, %v2027
      %v2166 = vadd.f32 %v1721, %v2029
      %v2167 = vadd.f32 %v1722, %v2033
      %v2168 = vadd.f32 %v1723, %v2035
      %v2169 = vadd.f32 %v1724, %v2039
      %v2170 = vadd.f32 %v1725, %v2041
      %v2171 = vadd.f32 %v1726, %v2045
      %v2172 = vadd.f32 %v1727, %v2047
      %v2173 = vadd.f32 %v1728, %v2051
      %v2174 = vadd.f32 %v1729, %v2053
      %v2175 = vadd.f32 %v1730, %v2057
      %v2176 = vadd.f32 %v1731, %v2059
      %v2177 = vadd.f32 %v1732, %v2063
      %v2178 = vadd.f32 %v1733, %v2065
      %v2179 = vadd.f32 %v1734, %v2069
      %v2180 = vadd.f32 %v1735, %v2071
      %v2181 = vadd.f32 %v1736, %v2075
      %v2182 = vadd.f32 %v1737, %v2077
      %v2183 = vadd.f32 %v1738, %v2081
      %v2184 = vadd.f32 %v1739, %v2083
      %v2185 = vadd.f32 %v1740, %v2087
      %v2186 = vadd.f32 %v1741, %v2089
      %v2187 = vadd.f32 %v1742, %v2093
      %v2188 = vadd.f32 %v1743, %v2095
      %v2189 = vadd.f32 %v1744, %v2099
      %v2190 = vadd.f32 %v1745, %v2101
      %v2191 = vadd.f32 %v1746, %v2105
      %v2192 = vadd.f32 %v1747, %v2107
      %v2193 = vadd.f32 %v1748, %v2111
      %v2194 = vadd.f32 %v1749, %v2113
      %v2195 = vadd.f32 %v1750, %v2117
      %v2196 = vadd.f32 %v1751, %v2119
      %v2197 = vadd.f32 %v1752, %v2123
      %v2198 = vadd.f32 %v1753, %v2125
      %v2199 = vadd.f32 %v1754, %v2129
      %v2200 = vadd.f32 %v1755, %v2131
      %v2201 = vadd.f32 %v1756, %v2135
      %v2202 = vadd.f32 %v1757, %v2137
      %v2203 = vadd.f32 %v1758, %v2141
      %v2204 = vadd.f32 %v1759, %v2143
      %v2205 = vadd.f32 %v1760, %v2147
      %v2206 = vadd.f32 %v1761, %v2149
      %v2207 = vrot.slane %v441, 4
      %v2208 = vrot.slane %v442, 4
      %v2209 = vrot.slane %v443, 4
      %v2210 = vrot.slane %v444, 4
      %v2211 = vrot.slane %v445, 4
      %v2212 = vrot.slane %v446, 4
      %v2213 = vrot.slane %v447, 4
      %v2214 = vrot.slane %v448, 4
      %v2215 = vrot.slane %v449, 4
      %v2216 = vrot.slane %v450, 4
      %v2217 = vrot.slane %v451, 4
      %v2218 = vrot.slane %v452, 4
      %v2219 = vrot.slane %v453, 4
      %v2220 = vrot.slane %v454, 4
      %v2221 = vrot.slane %v455, 4
      %v2222 = vrot.slane %v456, 4
      %v2223 = vrot.slane %v457, 4
      %v2224 = vrot.slane %v458, 4
      %v2225 = vrot.slane %v459, 4
      %v2226 = vrot.slane %v460, 4
      %v2227 = vrot.slane %v461, 4
      %v2228 = vrot.slane %v462, 4
      %v2229 = vrot.slane %v463, 4
      %v2230 = vrot.slane %v464, 4
      %v2231 = vrot.slane %v465, 4
      %v2232 = vrot.slane %v466, 4
      %v2233 = vrot.slane %v467, 4
      %v2234 = vrot.slane %v468, 4
      %vm2235 = vcmp.lt.s32.totalorder %v899, 4
      %v2236 = vsel %vm2235, %v2233, %v2234
      %v2237 = vsel %vm2235, %v2232, %v2233
      %v2238 = vsel %vm2235, %v2231, %v2232
      %v2239 = vsel %vm2235, %v2230, %v2231
      %v2240 = vsel %vm2235, %v2229, %v2230
      %v2241 = vsel %vm2235, %v2228, %v2229
      %v2242 = vsel %vm2235, %v2227, %v2228
      %v2243 = vsel %vm2235, %v2226, %v2227
      %v2244 = vsel %vm2235, %v2225, %v2226
      %v2245 = vsel %vm2235, %v2224, %v2225
      %v2246 = vsel %vm2235, %v2223, %v2224
      %v2247 = vsel %vm2235, %v2222, %v2223
      %v2248 = vsel %vm2235, %v2221, %v2222
      %v2249 = vsel %vm2235, %v2220, %v2221
      %v2250 = vsel %vm2235, %v2219, %v2220
      %v2251 = vsel %vm2235, %v2218, %v2219
      %v2252 = vsel %vm2235, %v2217, %v2218
      %v2253 = vsel %vm2235, %v2216, %v2217
      %v2254 = vsel %vm2235, %v2215, %v2216
      %v2255 = vsel %vm2235, %v2214, %v2215
      %v2256 = vsel %vm2235, %v2213, %v2214
      %v2257 = vsel %vm2235, %v2212, %v2213
      %v2258 = vsel %vm2235, %v2211, %v2212
      %v2259 = vsel %vm2235, %v2210, %v2211
      %v2260 = vsel %vm2235, %v2209, %v2210
      %v2261 = vsel %vm2235, %v2208, %v2209
      %v2262 = vsel %vm2235, %v2207, %v2208
      %v2263 = vsel %vm2235, %v2234, %v2207
      %s2264 = scalar_lea.vmem %s1, 256
      %v2265 = vld [vmem:[%s2264] sm:$0xff]
      %v2266 = vld [vmem:[%s2264 + $0x8] sm:$0xff]
      %v2267 = vld [vmem:[%s2264 + $0x10] sm:$0xff]
      %v2268 = vld [vmem:[%s2264 + $0x18] sm:$0xff]
      %v2269 = vld [vmem:[%s2264 + $0x20] sm:$0xff]
      %v2270 = vld [vmem:[%s2264 + $0x28] sm:$0xff]
      %v2271 = vld [vmem:[%s2264 + $0x30] sm:$0xf]
      %v2272 = vld [vmem:[%s2264 + $0x38] sm:$0xf]
      %v2274 = vsel %vm489, %v2262, 0
      %v2277 = vsel %vm489, %v2261, 0
      %v2280 = vsel %vm489, %v2260, 0
      %v2283 = vsel %vm489, %v2259, 0
      %v2286 = vsel %vm489, %v2258, 0
      %v2289 = vsel %vm489, %v2257, 0
      %v2292 = vsel %vm489, %v2256, 0
      %v2295 = vsel %vm489, %v2255, 0
      %v2298 = vsel %vm489, %v2254, 0
      %v2301 = vsel %vm489, %v2253, 0
      %v2304 = vsel %vm489, %v2252, 0
      %v2307 = vsel %vm489, %v2251, 0
      %v2310 = vsel %vm489, %v2250, 0
      %v2313 = vsel %vm489, %v2249, 0
      %v2316 = vsel %vm489, %v2248, 0
      %v2319 = vsel %vm489, %v2247, 0
      %v2322 = vsel %vm489, %v2246, 0
      %v2325 = vsel %vm489, %v2245, 0
      %v2328 = vsel %vm489, %v2244, 0
      %v2331 = vsel %vm489, %v2243, 0
      %v2334 = vsel %vm489, %v2242, 0
      %v2337 = vsel %vm489, %v2241, 0
      %v2340 = vsel %vm489, %v2240, 0
      %v2343 = vsel %vm489, %v2239, 0
      %v2346 = vsel %vm489, %v2238, 0
      %v2349 = vsel %vm489, %v2237, 0
      %v2352 = vsel %vm489, %v2236, 0
      %v2355 = vsel %vm489, %v2263, 0
      %v2358 = vsel %vm574, %v2271, 0
      %v2361 = vsel %vm574, %v2272, 0
      %2363 = vmatprep.subr.mxu0 %v2266
      %2364 = vmatpush1.msra.mxu0 %v2265
      %2365 = vmatprep.subr.mxu0 %v2268
      %2366 = vmatpush1.msra.mxu0 %v2267
      %2367 = vmatprep.subr.mxu0 %v2270
      %2368 = vmatpush1.msra.mxu0 %v2269
      %2369 = vmatprep.subr.mxu0 %v2361
      %2370 = vmatpush1.msra.mxu0 %v2358
      %2371 = vmatprep.subr.mxu0 0.0
      %2372 = vmatpush1.msra.mxu0 0.0
      %2373 = vmatprep.subr.mxu0 0.0
      %2374 = vmatpush1.msra.mxu0 0.0
      %2375 = vmatprep.subr.mxu0 0.0
      %2376 = vmatpush1.msra.mxu0 0.0
      %2377 = vmatprep.subr.mxu0 0.0
      %2378 = vmatpush1.msra.mxu0 0.0
      %2379 = vmatprep.subr.mxu0 0.0
      %2380 = vmatpush1.msra.mxu0 0.0
      %2381 = vmatprep.subr.mxu0 0.0
      %2382 = vmatpush1.msra.mxu0 0.0
      %2383 = vmatprep.subr.mxu0 0.0
      %2384 = vmatpush1.msra.mxu0 0.0
      %2385 = vmatprep.subr.mxu0 0.0
      %2386 = vmatpush1.msra.mxu0 0.0
      %2387 = vmatprep.subr.mxu0 0.0
      %2388 = vmatpush1.msra.mxu0 0.0
      %2389 = vmatprep.subr.mxu0 0.0
      %2390 = vmatpush1.msra.mxu0 0.0
      %2391 = vmatprep.subr.mxu0 0.0
      %2392 = vmatpush1.msra.mxu0 0.0
      %2393 = vmatprep.subr.mxu0 0.0
      %2394 = vmatpush1.msra.mxu0 0.0
      %2395 = vmatprep.subr.mxu0 0.0
      %2396 = vmatpush1.msra.mxu0 0.0
      %2397 = vmatprep.subr.mxu0 0.0
      %2398 = vmatpush1.msra.mxu0 0.0
      %2399 = vmatprep.subr.mxu0 0.0
      %2400 = vmatpush1.msra.mxu0 0.0
      %2401 = vmatprep.subr.mxu0 0.0
      %2402 = vmatpush1.msra.mxu0 0.0
      %2403 = vmatprep.subr.mxu0 0.0
      %2404 = vmatpush1.msra.mxu0 0.0
      %2405 = vmatprep.subr.mxu0 0.0
      %2406 = vmatpush1.msra.mxu0 0.0
      %2407 = vmatprep.subr.mxu0 0.0
      %2408 = vmatpush1.msra.mxu0 0.0
      %2409 = vmatprep.subr.mxu0 0.0
      %2410 = vmatpush1.msra.mxu0 0.0
      %2411 = vmatprep.subr.mxu0 0.0
      %2412 = vmatpush1.msra.mxu0 0.0
      %2413 = vmatprep.subr.mxu0 0.0
      %2414 = vmatpush1.msra.mxu0 0.0
      %2415 = vmatprep.subr.mxu0 0.0
      %2416 = vmatpush1.msra.mxu0 0.0
      %2417 = vmatprep.subr.mxu0 0.0
      %2418 = vmatpush1.msra.mxu0 0.0
      %2419 = vmatprep.subr.mxu0 0.0
      %2420 = vmatpush1.msra.mxu0 0.0
      %2421 = vmatprep.subr.mxu0 0.0
      %2422 = vmatpush1.msra.mxu0 0.0
      %2423 = vmatprep.subr.mxu0 0.0
      %2424 = vmatpush1.msra.mxu0 0.0
      %2425 = vmatprep.subr.mxu0 0.0
      %2426 = vmatpush1.msra.mxu0 0.0
      %2427 = vmatprep.mubr.f32.mxu0 0.0
      %2428 = vmatmul.mubr.f32.gmra.mrb[0].mxu0 %v2274
      %v2429 = vpop.f32.mrb[0].mxu0
      %v2430 = vadd.f32 0.0, %v2429
      %v2431 = vpop.f32.mrb[0].mxu0
      %v2432 = vadd.f32 0.0, %v2431
      %2433 = vmatprep.mubr.f32.mxu0 0.0
      %2434 = vmatmul.mubr.f32.gmra.mrb[0].mxu0 %v2277
      %v2435 = vpop.f32.mrb[0].mxu0
      %v2436 = vadd.f32 0.0, %v2435
      %v2437 = vpop.f32.mrb[0].mxu0
      %v2438 = vadd.f32 0.0, %v2437
      %2439 = vmatprep.mubr.f32.mxu0 0.0
      %2440 = vmatmul.mubr.f32.gmra.mrb[0].mxu0 %v2280
      %v2441 = vpop.f32.mrb[0].mxu0
      %v2442 = vadd.f32 0.0, %v2441
      %v2443 = vpop.f32.mrb[0].mxu0
      %v2444 = vadd.f32 0.0, %v2443
      %2445 = vmatprep.mubr.f32.mxu0 0.0
      %2446 = vmatmul.mubr.f32.gmra.mrb[0].mxu0 %v2283
      %v2447 = vpop.f32.mrb[0].mxu0
      %v2448 = vadd.f32 0.0, %v2447
      %v2449 = vpop.f32.mrb[0].mxu0
      %v2450 = vadd.f32 0.0, %v2449
      %2451 = vmatprep.mubr.f32.mxu0 0.0
      %2452 = vmatmul.mubr.f32.gmra.mrb[0].mxu0 %v2286
      %v2453 = vpop.f32.mrb[0].mxu0
      %v2454 = vadd.f32 0.0, %v2453
      %v2455 = vpop.f32.mrb[0].mxu0
      %v2456 = vadd.f32 0.0, %v2455
      %2457 = vmatprep.mubr.f32.mxu0 0.0
      %2458 = vmatmul.mubr.f32.gmra.mrb[0].mxu0 %v2289
      %v2459 = vpop.f32.mrb[0].mxu0
      %v2460 = vadd.f32 0.0, %v2459
      %v2461 = vpop.f32.mrb[0].mxu0
      %v2462 = vadd.f32 0.0, %v2461
      %2463 = vmatprep.mubr.f32.mxu0 0.0
      %2464 = vmatmul.mubr.f32.gmra.mrb[0].mxu0 %v2292
      %v2465 = vpop.f32.mrb[0].mxu0
      %v2466 = vadd.f32 0.0, %v2465
      %v2467 = vpop.f32.mrb[0].mxu0
      %v2468 = vadd.f32 0.0, %v2467
      %2469 = vmatprep.mubr.f32.mxu0 0.0
      %2470 = vmatmul.mubr.f32.gmra.mrb[0].mxu0 %v2295
      %v2471 = vpop.f32.mrb[0].mxu0
      %v2472 = vadd.f32 0.0, %v2471
      %v2473 = vpop.f32.mrb[0].mxu0
      %v2474 = vadd.f32 0.0, %v2473
      %2475 = vmatprep.mubr.f32.mxu0 0.0
      %2476 = vmatmul.mubr.f32.gmra.mrb[0].mxu0 %v2298
      %v2477 = vpop.f32.mrb[0].mxu0
      %v2478 = vadd.f32 0.0, %v2477
      %v2479 = vpop.f32.mrb[0].mxu0
      %v2480 = vadd.f32 0.0, %v2479
      %2481 = vmatprep.mubr.f32.mxu0 0.0
      %2482 = vmatmul.mubr.f32.gmra.mrb[0].mxu0 %v2301
      %v2483 = vpop.f32.mrb[0].mxu0
      %v2484 = vadd.f32 0.0, %v2483
      %v2485 = vpop.f32.mrb[0].mxu0
      %v2486 = vadd.f32 0.0, %v2485
      %2487 = vmatprep.mubr.f32.mxu0 0.0
      %2488 = vmatmul.mubr.f32.gmra.mrb[0].mxu0 %v2304
      %v2489 = vpop.f32.mrb[0].mxu0
      %v2490 = vadd.f32 0.0, %v2489
      %v2491 = vpop.f32.mrb[0].mxu0
      %v2492 = vadd.f32 0.0, %v2491
      %2493 = vmatprep.mubr.f32.mxu0 0.0
      %2494 = vmatmul.mubr.f32.gmra.mrb[0].mxu0 %v2307
      %v2495 = vpop.f32.mrb[0].mxu0
      %v2496 = vadd.f32 0.0, %v2495
      %v2497 = vpop.f32.mrb[0].mxu0
      %v2498 = vadd.f32 0.0, %v2497
      %2499 = vmatprep.mubr.f32.mxu0 0.0
      %2500 = vmatmul.mubr.f32.gmra.mrb[0].mxu0 %v2310
      %v2501 = vpop.f32.mrb[0].mxu0
      %v2502 = vadd.f32 0.0, %v2501
      %v2503 = vpop.f32.mrb[0].mxu0
      %v2504 = vadd.f32 0.0, %v2503
      %2505 = vmatprep.mubr.f32.mxu0 0.0
      %2506 = vmatmul.mubr.f32.gmra.mrb[0].mxu0 %v2313
      %v2507 = vpop.f32.mrb[0].mxu0
      %v2508 = vadd.f32 0.0, %v2507
      %v2509 = vpop.f32.mrb[0].mxu0
      %v2510 = vadd.f32 0.0, %v2509
      %2511 = vmatprep.mubr.f32.mxu0 0.0
      %2512 = vmatmul.mubr.f32.gmra.mrb[0].mxu0 %v2316
      %v2513 = vpop.f32.mrb[0].mxu0
      %v2514 = vadd.f32 0.0, %v2513
      %v2515 = vpop.f32.mrb[0].mxu0
      %v2516 = vadd.f32 0.0, %v2515
      %2517 = vmatprep.mubr.f32.mxu0 0.0
      %2518 = vmatmul.mubr.f32.gmra.mrb[0].mxu0 %v2319
      %v2519 = vpop.f32.mrb[0].mxu0
      %v2520 = vadd.f32 0.0, %v2519
      %v2521 = vpop.f32.mrb[0].mxu0
      %v2522 = vadd.f32 0.0, %v2521
      %2523 = vmatprep.mubr.f32.mxu0 0.0
      %2524 = vmatmul.mubr.f32.gmra.mrb[0].mxu0 %v2322
      %v2525 = vpop.f32.mrb[0].mxu0
      %v2526 = vadd.f32 0.0, %v2525
      %v2527 = vpop.f32.mrb[0].mxu0
      %v2528 = vadd.f32 0.0, %v2527
      %2529 = vmatprep.mubr.f32.mxu0 0.0
      %2530 = vmatmul.mubr.f32.gmra.mrb[0].mxu0 %v2325
      %v2531 = vpop.f32.mrb[0].mxu0
      %v2532 = vadd.f32 0.0, %v2531
      %v2533 = vpop.f32.mrb[0].mxu0
      %v2534 = vadd.f32 0.0, %v2533
      %2535 = vmatprep.mubr.f32.mxu0 0.0
      %2536 = vmatmul.mubr.f32.gmra.mrb[0].mxu0 %v2328
      %v2537 = vpop.f32.mrb[0].mxu0
      %v2538 = vadd.f32 0.0, %v2537
      %v2539 = vpop.f32.mrb[0].mxu0
      %v2540 = vadd.f32 0.0, %v2539
      %2541 = vmatprep.mubr.f32.mxu0 0.0
      %2542 = vmatmul.mubr.f32.gmra.mrb[0].mxu0 %v2331
      %v2543 = vpop.f32.mrb[0].mxu0
      %v2544 = vadd.f32 0.0, %v2543
      %v2545 = vpop.f32.mrb[0].mxu0
      %v2546 = vadd.f32 0.0, %v2545
      %2547 = vmatprep.mubr.f32.mxu0 0.0
      %2548 = vmatmul.mubr.f32.gmra.mrb[0].mxu0 %v2334
      %v2549 = vpop.f32.mrb[0].mxu0
      %v2550 = vadd.f32 0.0, %v2549
      %v2551 = vpop.f32.mrb[0].mxu0
      %v2552 = vadd.f32 0.0, %v2551
      %2553 = vmatprep.mubr.f32.mxu0 0.0
      %2554 = vmatmul.mubr.f32.gmra.mrb[0].mxu0 %v2337
      %v2555 = vpop.f32.mrb[0].mxu0
      %v2556 = vadd.f32 0.0, %v2555
      %v2557 = vpop.f32.mrb[0].mxu0
      %v2558 = vadd.f32 0.0, %v2557
      %2559 = vmatprep.mubr.f32.mxu0 0.0
      %2560 = vmatmul.mubr.f32.gmra.mrb[0].mxu0 %v2340
      %v2561 = vpop.f32.mrb[0].mxu0
      %v2562 = vadd.f32 0.0, %v2561
      %v2563 = vpop.f32.mrb[0].mxu0
      %v2564 = vadd.f32 0.0, %v2563
      %2565 = vmatprep.mubr.f32.mxu0 0.0
      %2566 = vmatmul.mubr.f32.gmra.mrb[0].mxu0 %v2343
      %v2567 = vpop.f32.mrb[0].mxu0
      %v2568 = vadd.f32 0.0, %v2567
      %v2569 = vpop.f32.mrb[0].mxu0
      %v2570 = vadd.f32 0.0, %v2569
      %2571 = vmatprep.mubr.f32.mxu0 0.0
      %2572 = vmatmul.mubr.f32.gmra.mrb[0].mxu0 %v2346
      %v2573 = vpop.f32.mrb[0].mxu0
      %v2574 = vadd.f32 0.0, %v2573
      %v2575 = vpop.f32.mrb[0].mxu0
      %v2576 = vadd.f32 0.0, %v2575
      %2577 = vmatprep.mubr.f32.mxu0 0.0
      %2578 = vmatmul.mubr.f32.gmra.mrb[0].mxu0 %v2349
      %v2579 = vpop.f32.mrb[0].mxu0
      %v2580 = vadd.f32 0.0, %v2579
      %v2581 = vpop.f32.mrb[0].mxu0
      %v2582 = vadd.f32 0.0, %v2581
      %2583 = vmatprep.mubr.f32.mxu0 0.0
      %2584 = vmatmul.mubr.f32.gmra.mrb[0].mxu0 %v2352
      %v2585 = vpop.f32.mrb[0].mxu0
      %v2586 = vadd.f32 0.0, %v2585
      %v2587 = vpop.f32.mrb[0].mxu0
      %v2588 = vadd.f32 0.0, %v2587
      %2589 = vmatprep.mubr.f32.mxu0 0.0
      %2590 = vmatmul.mubr.f32.gmra.mrb[0].mxu0 %v2355
      %v2591 = vpop.f32.mrb[0].mxu0
      %v2592 = vadd.f32 0.0, %v2591
      %v2593 = vpop.f32.mrb[0].mxu0
      %v2594 = vadd.f32 0.0, %v2593
      %2595 = vdwg.mxu0
      %v2596 = vadd.f32 %v2151, %v2430
      %v2597 = vadd.f32 %v2152, %v2432
      %v2598 = vadd.f32 %v2153, %v2436
      %v2599 = vadd.f32 %v2154, %v2438
      %v2600 = vadd.f32 %v2155, %v2442
      %v2601 = vadd.f32 %v2156, %v2444
      %v2602 = vadd.f32 %v2157, %v2448
      %v2603 = vadd.f32 %v2158, %v2450
      %v2604 = vadd.f32 %v2159, %v2454
      %v2605 = vadd.f32 %v2160, %v2456
      %v2606 = vadd.f32 %v2161, %v2460
      %v2607 = vadd.f32 %v2162, %v2462
      %v2608 = vadd.f32 %v2163, %v2466
      %v2609 = vadd.f32 %v2164, %v2468
      %v2610 = vadd.f32 %v2165, %v2472
      %v2611 = vadd.f32 %v2166, %v2474
      %v2612 = vadd.f32 %v2167, %v2478
      %v2613 = vadd.f32 %v2168, %v2480
      %v2614 = vadd.f32 %v2169, %v2484
      %v2615 = vadd.f32 %v2170, %v2486
      %v2616 = vadd.f32 %v2171, %v2490
      %v2617 = vadd.f32 %v2172, %v2492
      %v2618 = vadd.f32 %v2173, %v2496
      %v2619 = vadd.f32 %v2174, %v2498
      %v2620 = vadd.f32 %v2175, %v2502
      %v2621 = vadd.f32 %v2176, %v2504
      %v2622 = vadd.f32 %v2177, %v2508
      %v2623 = vadd.f32 %v2178, %v2510
      %v2624 = vadd.f32 %v2179, %v2514
      %v2625 = vadd.f32 %v2180, %v2516
      %v2626 = vadd.f32 %v2181, %v2520
      %v2627 = vadd.f32 %v2182, %v2522
      %v2628 = vadd.f32 %v2183, %v2526
      %v2629 = vadd.f32 %v2184, %v2528
      %v2630 = vadd.f32 %v2185, %v2532
      %v2631 = vadd.f32 %v2186, %v2534
      %v2632 = vadd.f32 %v2187, %v2538
      %v2633 = vadd.f32 %v2188, %v2540
      %v2634 = vadd.f32 %v2189, %v2544
      %v2635 = vadd.f32 %v2190, %v2546
      %v2636 = vadd.f32 %v2191, %v2550
      %v2637 = vadd.f32 %v2192, %v2552
      %v2638 = vadd.f32 %v2193, %v2556
      %v2639 = vadd.f32 %v2194, %v2558
      %v2640 = vadd.f32 %v2195, %v2562
      %v2641 = vadd.f32 %v2196, %v2564
      %v2642 = vadd.f32 %v2197, %v2568
      %v2643 = vadd.f32 %v2198, %v2570
      %v2644 = vadd.f32 %v2199, %v2574
      %v2645 = vadd.f32 %v2200, %v2576
      %v2646 = vadd.f32 %v2201, %v2580
      %v2647 = vadd.f32 %v2202, %v2582
      %v2648 = vadd.f32 %v2203, %v2586
      %v2649 = vadd.f32 %v2204, %v2588
      %v2650 = vadd.f32 %v2205, %v2592
      %v2651 = vadd.f32 %v2206, %v2594
      %v2652 = vmul.f32 %v2596, 0.5
      %v2653 = vmul.f32 %v2597, 0.5
      %v2654 = vmul.f32 %v2598, 0.5
      %v2655 = vmul.f32 %v2599, 0.5
      %v2656 = vmul.f32 %v2600, 0.5
      %v2657 = vmul.f32 %v2601, 0.5
      %v2658 = vmul.f32 %v2602, 0.5
      %v2659 = vmul.f32 %v2603, 0.5
      %v2660 = vmul.f32 %v2604, 0.5
      %v2661 = vmul.f32 %v2605, 0.5
      %v2662 = vmul.f32 %v2606, 0.5
      %v2663 = vmul.f32 %v2607, 0.5
      %v2664 = vmul.f32 %v2608, 0.5
      %v2665 = vmul.f32 %v2609, 0.5
      %v2666 = vmul.f32 %v2610, 0.5
      %v2667 = vmul.f32 %v2611, 0.5
      %v2668 = vmul.f32 %v2612, 0.5
      %v2669 = vmul.f32 %v2613, 0.5
      %v2670 = vmul.f32 %v2614, 0.5
      %v2671 = vmul.f32 %v2615, 0.5
      %v2672 = vmul.f32 %v2616, 0.5
      %v2673 = vmul.f32 %v2617, 0.5
      %v2674 = vmul.f32 %v2618, 0.5
      %v2675 = vmul.f32 %v2619, 0.5
      %v2676 = vmul.f32 %v2620, 0.5
      %v2677 = vmul.f32 %v2621, 0.5
      %v2678 = vmul.f32 %v2622, 0.5
      %v2679 = vmul.f32 %v2623, 0.5
      %v2680 = vmul.f32 %v2624, 0.5
      %v2681 = vmul.f32 %v2625, 0.5
      %v2682 = vmul.f32 %v2626, 0.5
      %v2683 = vmul.f32 %v2627, 0.5
      %v2684 = vmul.f32 %v2628, 0.5
      %v2685 = vmul.f32 %v2629, 0.5
      %v2686 = vmul.f32 %v2630, 0.5
      %v2687 = vmul.f32 %v2631, 0.5
      %v2688 = vmul.f32 %v2632, 0.5
      %v2689 = vmul.f32 %v2633, 0.5
      %v2690 = vmul.f32 %v2634, 0.5
      %v2691 = vmul.f32 %v2635, 0.5
      %v2692 = vmul.f32 %v2636, 0.5
      %v2693 = vmul.f32 %v2637, 0.5
      %v2694 = vmul.f32 %v2638, 0.5
      %v2695 = vmul.f32 %v2639, 0.5
      %v2696 = vmul.f32 %v2640, 0.5
      %v2697 = vmul.f32 %v2641, 0.5
      %v2698 = vmul.f32 %v2642, 0.5
      %v2699 = vmul.f32 %v2643, 0.5
      %v2700 = vmul.f32 %v2644, 0.5
      %v2701 = vmul.f32 %v2645, 0.5
      %v2702 = vmul.f32 %v2646, 0.5
      %v2703 = vmul.f32 %v2647, 0.5
      %v2704 = vmul.f32 %v2648, 0.5
      %v2705 = vmul.f32 %v2649, 0.5
      %v2706 = vmul.f32 %v2650, 0.5
      %v2707 = vmul.f32 %v2651, 0.5
      %v2708 = vtanh.pop %v2652
      %v2709 = vtanh.pop %v2653
      %v2710 = vtanh.pop %v2654
      %v2711 = vtanh.pop %v2655
      %v2712 = vtanh.pop %v2656
      %v2713 = vtanh.pop %v2657
      %v2714 = vtanh.pop %v2658
      %v2715 = vtanh.pop %v2659
      %v2716 = vtanh.pop %v2660
      %v2717 = vtanh.pop %v2661
      %v2718 = vtanh.pop %v2662
      %v2719 = vtanh.pop %v2663
      %v2720 = vtanh.pop %v2664
      %v2721 = vtanh.pop %v2665
      %v2722 = vtanh.pop %v2666
      %v2723 = vtanh.pop %v2667
      %v2724 = vtanh.pop %v2668
      %v2725 = vtanh.pop %v2669
      %v2726 = vtanh.pop %v2670
      %v2727 = vtanh.pop %v2671
      %v2728 = vtanh.pop %v2672
      %v2729 = vtanh.pop %v2673
      %v2730 = vtanh.pop %v2674
      %v2731 = vtanh.pop %v2675
      %v2732 = vtanh.pop %v2676
      %v2733 = vtanh.pop %v2677
      %v2734 = vtanh.pop %v2678
      %v2735 = vtanh.pop %v2679
      %v2736 = vtanh.pop %v2680
      %v2737 = vtanh.pop %v2681
      %v2738 = vtanh.pop %v2682
      %v2739 = vtanh.pop %v2683
      %v2740 = vtanh.pop %v2684
      %v2741 = vtanh.pop %v2685
      %v2742 = vtanh.pop %v2686
      %v2743 = vtanh.pop %v2687
      %v2744 = vtanh.pop %v2688
      %v2745 = vtanh.pop %v2689
      %v2746 = vtanh.pop %v2690
      %v2747 = vtanh.pop %v2691
      %v2748 = vtanh.pop %v2692
      %v2749 = vtanh.pop %v2693
      %v2750 = vtanh.pop %v2694
      %v2751 = vtanh.pop %v2695
      %v2752 = vtanh.pop %v2696
      %v2753 = vtanh.pop %v2697
      %v2754 = vtanh.pop %v2698
      %v2755 = vtanh.pop %v2699
      %v2756 = vtanh.pop %v2700
      %v2757 = vtanh.pop %v2701
      %v2758 = vtanh.pop %v2702
      %v2759 = vtanh.pop %v2703
      %v2760 = vtanh.pop %v2704
      %v2761 = vtanh.pop %v2705
      %v2762 = vtanh.pop %v2706
      %v2763 = vtanh.pop %v2707
      %v2764 = vadd.f32 %v2708, 1.0
      %v2765 = vadd.f32 %v2709, 1.0
      %v2766 = vadd.f32 %v2710, 1.0
      %v2767 = vadd.f32 %v2711, 1.0
      %v2768 = vadd.f32 %v2712, 1.0
      %v2769 = vadd.f32 %v2713, 1.0
      %v2770 = vadd.f32 %v2714, 1.0
      %v2771 = vadd.f32 %v2715, 1.0
      %v2772 = vadd.f32 %v2716, 1.0
      %v2773 = vadd.f32 %v2717, 1.0
      %v2774 = vadd.f32 %v2718, 1.0
      %v2775 = vadd.f32 %v2719, 1.0
      %v2776 = vadd.f32 %v2720, 1.0
      %v2777 = vadd.f32 %v2721, 1.0
      %v2778 = vadd.f32 %v2722, 1.0
      %v2779 = vadd.f32 %v2723, 1.0
      %v2780 = vadd.f32 %v2724, 1.0
      %v2781 = vadd.f32 %v2725, 1.0
      %v2782 = vadd.f32 %v2726, 1.0
      %v2783 = vadd.f32 %v2727, 1.0
      %v2784 = vadd.f32 %v2728, 1.0
      %v2785 = vadd.f32 %v2729, 1.0
      %v2786 = vadd.f32 %v2730, 1.0
      %v2787 = vadd.f32 %v2731, 1.0
      %v2788 = vadd.f32 %v2732, 1.0
      %v2789 = vadd.f32 %v2733, 1.0
      %v2790 = vadd.f32 %v2734, 1.0
      %v2791 = vadd.f32 %v2735, 1.0
      %v2792 = vadd.f32 %v2736, 1.0
      %v2793 = vadd.f32 %v2737, 1.0
      %v2794 = vadd.f32 %v2738, 1.0
      %v2795 = vadd.f32 %v2739, 1.0
      %v2796 = vadd.f32 %v2740, 1.0
      %v2797 = vadd.f32 %v2741, 1.0
      %v2798 = vadd.f32 %v2742, 1.0
      %v2799 = vadd.f32 %v2743, 1.0
      %v2800 = vadd.f32 %v2744, 1.0
      %v2801 = vadd.f32 %v2745, 1.0
      %v2802 = vadd.f32 %v2746, 1.0
      %v2803 = vadd.f32 %v2747, 1.0
      %v2804 = vadd.f32 %v2748, 1.0
      %v2805 = vadd.f32 %v2749, 1.0
      %v2806 = vadd.f32 %v2750, 1.0
      %v2807 = vadd.f32 %v2751, 1.0
      %v2808 = vadd.f32 %v2752, 1.0
      %v2809 = vadd.f32 %v2753, 1.0
      %v2810 = vadd.f32 %v2754, 1.0
      %v2811 = vadd.f32 %v2755, 1.0
      %v2812 = vadd.f32 %v2756, 1.0
      %v2813 = vadd.f32 %v2757, 1.0
      %v2814 = vadd.f32 %v2758, 1.0
      %v2815 = vadd.f32 %v2759, 1.0
      %v2816 = vadd.f32 %v2760, 1.0
      %v2817 = vadd.f32 %v2761, 1.0
      %v2818 = vadd.f32 %v2762, 1.0
      %v2819 = vadd.f32 %v2763, 1.0
      %v2820 = vmul.f32 %v2764, 0.5
      %v2821 = vmul.f32 %v2765, 0.5
      %v2822 = vmul.f32 %v2766, 0.5
      %v2823 = vmul.f32 %v2767, 0.5
      %v2824 = vmul.f32 %v2768, 0.5
      %v2825 = vmul.f32 %v2769, 0.5
      %v2826 = vmul.f32 %v2770, 0.5
      %v2827 = vmul.f32 %v2771, 0.5
      %v2828 = vmul.f32 %v2772, 0.5
      %v2829 = vmul.f32 %v2773, 0.5
      %v2830 = vmul.f32 %v2774, 0.5
      %v2831 = vmul.f32 %v2775, 0.5
      %v2832 = vmul.f32 %v2776, 0.5
      %v2833 = vmul.f32 %v2777, 0.5
      %v2834 = vmul.f32 %v2778, 0.5
      %v2835 = vmul.f32 %v2779, 0.5
      %v2836 = vmul.f32 %v2780, 0.5
      %v2837 = vmul.f32 %v2781, 0.5
      %v2838 = vmul.f32 %v2782, 0.5
      %v2839 = vmul.f32 %v2783, 0.5
      %v2840 = vmul.f32 %v2784, 0.5
      %v2841 = vmul.f32 %v2785, 0.5
      %v2842 = vmul.f32 %v2786, 0.5
      %v2843 = vmul.f32 %v2787, 0.5
      %v2844 = vmul.f32 %v2788, 0.5
      %v2845 = vmul.f32 %v2789, 0.5
      %v2846 = vmul.f32 %v2790, 0.5
      %v2847 = vmul.f32 %v2791, 0.5
      %v2848 = vmul.f32 %v2792, 0.5
      %v2849 = vmul.f32 %v2793, 0.5
      %v2850 = vmul.f32 %v2794, 0.5
      %v2851 = vmul.f32 %v2795, 0.5
      %v2852 = vmul.f32 %v2796, 0.5
      %v2853 = vmul.f32 %v2797, 0.5
      %v2854 = vmul.f32 %v2798, 0.5
      %v2855 = vmul.f32 %v2799, 0.5
      %v2856 = vmul.f32 %v2800, 0.5
      %v2857 = vmul.f32 %v2801, 0.5
      %v2858 = vmul.f32 %v2802, 0.5
      %v2859 = vmul.f32 %v2803, 0.5
      %v2860 = vmul.f32 %v2804, 0.5
      %v2861 = vmul.f32 %v2805, 0.5
      %v2862 = vmul.f32 %v2806, 0.5
      %v2863 = vmul.f32 %v2807, 0.5
      %v2864 = vmul.f32 %v2808, 0.5
      %v2865 = vmul.f32 %v2809, 0.5
      %v2866 = vmul.f32 %v2810, 0.5
      %v2867 = vmul.f32 %v2811, 0.5
      %v2868 = vmul.f32 %v2812, 0.5
      %v2869 = vmul.f32 %v2813, 0.5
      %v2870 = vmul.f32 %v2814, 0.5
      %v2871 = vmul.f32 %v2815, 0.5
      %v2872 = vmul.f32 %v2816, 0.5
      %v2873 = vmul.f32 %v2817, 0.5
      %v2874 = vmul.f32 %v2818, 0.5
      %v2875 = vmul.f32 %v2819, 0.5
      %v2876 = vrot.slane %v2820, 7
      %v2877 = vrot.slane %v2821, 7
      %v2878 = vrot.slane %v2822, 7
      %v2879 = vrot.slane %v2823, 7
      %v2880 = vrot.slane %v2824, 7
      %v2881 = vrot.slane %v2825, 7
      %v2882 = vrot.slane %v2826, 7
      %v2883 = vrot.slane %v2827, 7
      %v2884 = vrot.slane %v2828, 7
      %v2885 = vrot.slane %v2829, 7
      %v2886 = vrot.slane %v2830, 7
      %v2887 = vrot.slane %v2831, 7
      %v2888 = vrot.slane %v2832, 7
      %v2889 = vrot.slane %v2833, 7
      %v2890 = vrot.slane %v2834, 7
      %v2891 = vrot.slane %v2835, 7
      %v2892 = vrot.slane %v2836, 7
      %v2893 = vrot.slane %v2837, 7
      %v2894 = vrot.slane %v2838, 7
      %v2895 = vrot.slane %v2839, 7
      %v2896 = vrot.slane %v2840, 7
      %v2897 = vrot.slane %v2841, 7
      %v2898 = vrot.slane %v2842, 7
      %v2899 = vrot.slane %v2843, 7
      %v2900 = vrot.slane %v2844, 7
      %v2901 = vrot.slane %v2845, 7
      %v2902 = vrot.slane %v2846, 7
      %v2903 = vrot.slane %v2847, 7
      %v2904 = vrot.slane %v2848, 7
      %v2905 = vrot.slane %v2849, 7
      %v2906 = vrot.slane %v2850, 7
      %v2907 = vrot.slane %v2851, 7
      %v2908 = vrot.slane %v2852, 7
      %v2909 = vrot.slane %v2853, 7
      %v2910 = vrot.slane %v2854, 7
      %v2911 = vrot.slane %v2855, 7
      %v2912 = vrot.slane %v2856, 7
      %v2913 = vrot.slane %v2857, 7
      %v2914 = vrot.slane %v2858, 7
      %v2915 = vrot.slane %v2859, 7
      %v2916 = vrot.slane %v2860, 7
      %v2917 = vrot.slane %v2861, 7
      %v2918 = vrot.slane %v2862, 7
      %v2919 = vrot.slane %v2863, 7
      %v2920 = vrot.slane %v2864, 7
      %v2921 = vrot.slane %v2865, 7
      %v2922 = vrot.slane %v2866, 7
      %v2923 = vrot.slane %v2867, 7
      %v2924 = vrot.slane %v2868, 7
      %v2925 = vrot.slane %v2869, 7
      %v2926 = vrot.slane %v2870, 7
      %v2927 = vrot.slane %v2871, 7
      %v2928 = vrot.slane %v2872, 7
      %v2929 = vrot.slane %v2873, 7
      %v2930 = vrot.slane %v2874, 7
      %v2931 = vrot.slane %v2875, 7
      %vm2932 = vcmp.lt.s32.totalorder %v899, 1
      %v2933 = vsel %vm2932, %v2928, %v2930
      %v2934 = vsel %vm2932, %v2929, %v2931
      %v2935 = vsel %vm2932, %v2926, %v2928
      %v2936 = vsel %vm2932, %v2927, %v2929
      %v2937 = vsel %vm2932, %v2924, %v2926
      %v2938 = vsel %vm2932, %v2925, %v2927
      %v2939 = vsel %vm2932, %v2922, %v2924
      %v2940 = vsel %vm2932, %v2923, %v2925
      %v2941 = vsel %vm2932, %v2920, %v2922
      %v2942 = vsel %vm2932, %v2921, %v2923
      %v2943 = vsel %vm2932, %v2918, %v2920
      %v2944 = vsel %vm2932, %v2919, %v2921
      %v2945 = vsel %vm2932, %v2916, %v2918
      %v2946 = vsel %vm2932, %v2917, %v2919
      %v2947 = vsel %vm2932, %v2914, %v2916
      %v2948 = vsel %vm2932, %v2915, %v2917
      %v2949 = vsel %vm2932, %v2912, %v2914
      %v2950 = vsel %vm2932, %v2913, %v2915
      %v2951 = vsel %vm2932, %v2910, %v2912
      %v2952 = vsel %vm2932, %v2911, %v2913
      %v2953 = vsel %vm2932, %v2908, %v2910
      %v2954 = vsel %vm2932, %v2909, %v2911
      %v2955 = vsel %vm2932, %v2906, %v2908
      %v2956 = vsel %vm2932, %v2907, %v2909
      %v2957 = vsel %vm2932, %v2904, %v2906
      %v2958 = vsel %vm2932, %v2905, %v2907
      %v2959 = vsel %vm2932, %v2902, %v2904
      %v2960 = vsel %vm2932, %v2903, %v2905
      %v2961 = vsel %vm2932, %v2900, %v2902
      %v2962 = vsel %vm2932, %v2901, %v2903
      %v2963 = vsel %vm2932, %v2898, %v2900
      %v2964 = vsel %vm2932, %v2899, %v2901
      %v2965 = vsel %vm2932, %v2896, %v2898
      %v2966 = vsel %vm2932, %v2897, %v2899
      %v2967 = vsel %vm2932, %v2894, %v2896
      %v2968 = vsel %vm2932, %v2895, %v2897
      %v2969 = vsel %vm2932, %v2892, %v2894
      %v2970 = vsel %vm2932, %v2893, %v2895
      %v2971 = vsel %vm2932, %v2890, %v2892
      %v2972 = vsel %vm2932, %v2891, %v2893
      %v2973 = vsel %vm2932, %v2888, %v2890
      %v2974 = vsel %vm2932, %v2889, %v2891
      %v2975 = vsel %vm2932, %v2886, %v2888
      %v2976 = vsel %vm2932, %v2887, %v2889
      %v2977 = vsel %vm2932, %v2884, %v2886
      %v2978 = vsel %vm2932, %v2885, %v2887
      %v2979 = vsel %vm2932, %v2882, %v2884
      %v2980 = vsel %vm2932, %v2883, %v2885
      %v2981 = vsel %vm2932, %v2880, %v2882
      %v2982 = vsel %vm2932, %v2881, %v2883
      %v2983 = vsel %vm2932, %v2878, %v2880
      %v2984 = vsel %vm2932, %v2879, %v2881
      %v2985 = vsel %vm2932, %v2876, %v2878
      %v2986 = vsel %vm2932, %v2877, %v2879
      %v2987 = vsel %vm2932, %v2930, %v2876
      %v2988 = vsel %vm2932, %v2931, %v2877
      %v2989 = vmax.f32 %v2820, %v2987
      %v2990 = vmax.f32 %v2821, %v2988
      %v2991 = vmax.f32 %v2822, %v2985
      %v2992 = vmax.f32 %v2823, %v2986
      %v2993 = vmax.f32 %v2824, %v2983
      %v2994 = vmax.f32 %v2825, %v2984
      %v2995 = vmax.f32 %v2826, %v2981
      %v2996 = vmax.f32 %v2827, %v2982
      %v2997 = vmax.f32 %v2828, %v2979
      %v2998 = vmax.f32 %v2829, %v2980
      %v2999 = vmax.f32 %v2830, %v2977
      %v3000 = vmax.f32 %v2831, %v2978
      %v3001 = vmax.f32 %v2832, %v2975
      %v3002 = vmax.f32 %v2833, %v2976
      %v3003 = vmax.f32 %v2834, %v2973
      %v3004 = vmax.f32 %v2835, %v2974
      %v3005 = vmax.f32 %v2836, %v2971
      %v3006 = vmax.f32 %v2837, %v2972
      %v3007 = vmax.f32 %v2838, %v2969
      %v3008 = vmax.f32 %v2839, %v2970
      %v3009 = vmax.f32 %v2840, %v2967
      %v3010 = vmax.f32 %v2841, %v2968
      %v3011 = vmax.f32 %v2842, %v2965
      %v3012 = vmax.f32 %v2843, %v2966
      %v3013 = vmax.f32 %v2844, %v2963
      %v3014 = vmax.f32 %v2845, %v2964
      %v3015 = vmax.f32 %v2846, %v2961
      %v3016 = vmax.f32 %v2847, %v2962
      %v3017 = vmax.f32 %v2848, %v2959
      %v3018 = vmax.f32 %v2849, %v2960
      %v3019 = vmax.f32 %v2850, %v2957
      %v3020 = vmax.f32 %v2851, %v2958
      %v3021 = vmax.f32 %v2852, %v2955
      %v3022 = vmax.f32 %v2853, %v2956
      %v3023 = vmax.f32 %v2854, %v2953
      %v3024 = vmax.f32 %v2855, %v2954
      %v3025 = vmax.f32 %v2856, %v2951
      %v3026 = vmax.f32 %v2857, %v2952
      %v3027 = vmax.f32 %v2858, %v2949
      %v3028 = vmax.f32 %v2859, %v2950
      %v3029 = vmax.f32 %v2860, %v2947
      %v3030 = vmax.f32 %v2861, %v2948
      %v3031 = vmax.f32 %v2862, %v2945
      %v3032 = vmax.f32 %v2863, %v2946
      %v3033 = vmax.f32 %v2864, %v2943
      %v3034 = vmax.f32 %v2865, %v2944
      %v3035 = vmax.f32 %v2866, %v2941
      %v3036 = vmax.f32 %v2867, %v2942
      %v3037 = vmax.f32 %v2868, %v2939
      %v3038 = vmax.f32 %v2869, %v2940
      %v3039 = vmax.f32 %v2870, %v2937
      %v3040 = vmax.f32 %v2871, %v2938
      %v3041 = vmax.f32 %v2872, %v2935
      %v3042 = vmax.f32 %v2873, %v2936
      %v3043 = vmax.f32 %v2874, %v2933
      %v3044 = vmax.f32 %v2875, %v2934
      %3045 = vrot.lane.b32.xlu0 %v2989, 1
      %v3046 = vpop.permute.xlu0 %3045
      %3047 = vrot.lane.b32.xlu0 %v2991, 1
      %v3048 = vpop.permute.xlu0 %3047
      %3049 = vrot.lane.b32.xlu0 %v2993, 1
      %v3050 = vpop.permute.xlu0 %3049
      %3051 = vrot.lane.b32.xlu0 %v2995, 1
      %v3052 = vpop.permute.xlu0 %3051
      %3053 = vrot.lane.b32.xlu0 %v2997, 1
      %v3054 = vpop.permute.xlu0 %3053
      %3055 = vrot.lane.b32.xlu0 %v2999, 1
      %v3056 = vpop.permute.xlu0 %3055
      %3057 = vrot.lane.b32.xlu0 %v3001, 1
      %v3058 = vpop.permute.xlu0 %3057
      %3059 = vrot.lane.b32.xlu0 %v3003, 1
      %v3060 = vpop.permute.xlu0 %3059
      %3061 = vrot.lane.b32.xlu0 %v3005, 1
      %v3062 = vpop.permute.xlu0 %3061
      %3063 = vrot.lane.b32.xlu0 %v3007, 1
      %v3064 = vpop.permute.xlu0 %3063
      %3065 = vrot.lane.b32.xlu0 %v3009, 1
      %v3066 = vpop.permute.xlu0 %3065
      %3067 = vrot.lane.b32.xlu0 %v3011, 1
      %v3068 = vpop.permute.xlu0 %3067
      %3069 = vrot.lane.b32.xlu0 %v3013, 1
      %v3070 = vpop.permute.xlu0 %3069
      %3071 = vrot.lane.b32.xlu0 %v3015, 1
      %v3072 = vpop.permute.xlu0 %3071
      %3073 = vrot.lane.b32.xlu0 %v3017, 1
      %v3074 = vpop.permute.xlu0 %3073
      %3075 = vrot.lane.b32.xlu0 %v3019, 1
      %v3076 = vpop.permute.xlu0 %3075
      %3077 = vrot.lane.b32.xlu0 %v3021, 1
      %v3078 = vpop.permute.xlu0 %3077
      %3079 = vrot.lane.b32.xlu0 %v3023, 1
      %v3080 = vpop.permute.xlu0 %3079
      %3081 = vrot.lane.b32.xlu0 %v3025, 1
      %v3082 = vpop.permute.xlu0 %3081
      %3083 = vrot.lane.b32.xlu0 %v3027, 1
      %v3084 = vpop.permute.xlu0 %3083
      %3085 = vrot.lane.b32.xlu0 %v3029, 1
      %v3086 = vpop.permute.xlu0 %3085
      %3087 = vrot.lane.b32.xlu0 %v3031, 1
      %v3088 = vpop.permute.xlu0 %3087
      %3089 = vrot.lane.b32.xlu0 %v3033, 1
      %v3090 = vpop.permute.xlu0 %3089
      %3091 = vrot.lane.b32.xlu0 %v3035, 1
      %v3092 = vpop.permute.xlu0 %3091
      %3093 = vrot.lane.b32.xlu0 %v3037, 1
      %v3094 = vpop.permute.xlu0 %3093
      %3095 = vrot.lane.b32.xlu0 %v3039, 1
      %v3096 = vpop.permute.xlu0 %3095
      %3097 = vrot.lane.b32.xlu0 %v3041, 1
      %v3098 = vpop.permute.xlu0 %3097
      %3099 = vrot.lane.b32.xlu0 %v3043, 1
      %v3100 = vpop.permute.xlu0 %3099
      %3101 = vrot.lane.b32.xlu0 %v2990, 1
      %v3102 = vpop.permute.xlu0 %3101
      %3103 = vrot.lane.b32.xlu0 %v2992, 1
      %v3104 = vpop.permute.xlu0 %3103
      %3105 = vrot.lane.b32.xlu0 %v2994, 1
      %v3106 = vpop.permute.xlu0 %3105
      %3107 = vrot.lane.b32.xlu0 %v2996, 1
      %v3108 = vpop.permute.xlu0 %3107
      %3109 = vrot.lane.b32.xlu0 %v2998, 1
      %v3110 = vpop.permute.xlu0 %3109
      %3111 = vrot.lane.b32.xlu0 %v3000, 1
      %v3112 = vpop.permute.xlu0 %3111
      %3113 = vrot.lane.b32.xlu0 %v3002, 1
      %v3114 = vpop.permute.xlu0 %3113
      %3115 = vrot.lane.b32.xlu0 %v3004, 1
      %v3116 = vpop.permute.xlu0 %3115
      %3117 = vrot.lane.b32.xlu0 %v3006, 1
      %v3118 = vpop.permute.xlu0 %3117
      %3119 = vrot.lane.b32.xlu0 %v3008, 1
      %v3120 = vpop.permute.xlu0 %3119
      %3121 = vrot.lane.b32.xlu0 %v3010, 1
      %v3122 = vpop.permute.xlu0 %3121
      %3123 = vrot.lane.b32.xlu0 %v3012, 1
      %v3124 = vpop.permute.xlu0 %3123
      %3125 = vrot.lane.b32.xlu0 %v3014, 1
      %v3126 = vpop.permute.xlu0 %3125
      %3127 = vrot.lane.b32.xlu0 %v3016, 1
      %v3128 = vpop.permute.xlu0 %3127
      %3129 = vrot.lane.b32.xlu0 %v3018, 1
      %v3130 = vpop.permute.xlu0 %3129
      %3131 = vrot.lane.b32.xlu0 %v3020, 1
      %v3132 = vpop.permute.xlu0 %3131
      %3133 = vrot.lane.b32.xlu0 %v3022, 1
      %v3134 = vpop.permute.xlu0 %3133
      %3135 = vrot.lane.b32.xlu0 %v3024, 1
      %v3136 = vpop.permute.xlu0 %3135
      %3137 = vrot.lane.b32.xlu0 %v3026, 1
      %v3138 = vpop.permute.xlu0 %3137
      %3139 = vrot.lane.b32.xlu0 %v3028, 1
      %v3140 = vpop.permute.xlu0 %3139
      %3141 = vrot.lane.b32.xlu0 %v3030, 1
      %v3142 = vpop.permute.xlu0 %3141
      %3143 = vrot.lane.b32.xlu0 %v3032, 1
      %v3144 = vpop.permute.xlu0 %3143
      %3145 = vrot.lane.b32.xlu0 %v3034, 1
      %v3146 = vpop.permute.xlu0 %3145
      %3147 = vrot.lane.b32.xlu0 %v3036, 1
      %v3148 = vpop.permute.xlu0 %3147
      %3149 = vrot.lane.b32.xlu0 %v3038, 1
      %v3150 = vpop.permute.xlu0 %3149
      %3151 = vrot.lane.b32.xlu0 %v3040, 1
      %v3152 = vpop.permute.xlu0 %3151
      %3153 = vrot.lane.b32.xlu0 %v3042, 1
      %v3154 = vpop.permute.xlu0 %3153
      %3155 = vrot.lane.b32.xlu0 %v3044, 1
      %v3156 = vpop.permute.xlu0 %3155
      %v3157 = vlaneseq
      %v3158 = vand.u32 %v3157, 127
      %vm3159 = vcmp.lt.s32.totalorder %v3158, 1
      %v3160 = vsel %vm3159, %v3046, %v3102
      %v3161 = vsel %vm3159, %v3048, %v3104
      %v3162 = vsel %vm3159, %v3050, %v3106
      %v3163 = vsel %vm3159, %v3052, %v3108
      %v3164 = vsel %vm3159, %v3054, %v3110
      %v3165 = vsel %vm3159, %v3056, %v3112
      %v3166 = vsel %vm3159, %v3058, %v3114
      %v3167 = vsel %vm3159, %v3060, %v3116
      %v3168 = vsel %vm3159, %v3062, %v3118
      %v3169 = vsel %vm3159, %v3064, %v3120
      %v3170 = vsel %vm3159, %v3066, %v3122
      %v3171 = vsel %vm3159, %v3068, %v3124
      %v3172 = vsel %vm3159, %v3070, %v3126
      %v3173 = vsel %vm3159, %v3072, %v3128
      %v3174 = vsel %vm3159, %v3074, %v3130
      %v3175 = vsel %vm3159, %v3076, %v3132
      %v3176 = vsel %vm3159, %v3078, %v3134
      %v3177 = vsel %vm3159, %v3080, %v3136
      %v3178 = vsel %vm3159, %v3082, %v3138
      %v3179 = vsel %vm3159, %v3084, %v3140
      %v3180 = vsel %vm3159, %v3086, %v3142
      %v3181 = vsel %vm3159, %v3088, %v3144
      %v3182 = vsel %vm3159, %v3090, %v3146
      %v3183 = vsel %vm3159, %v3092, %v3148
      %v3184 = vsel %vm3159, %v3094, %v3150
      %v3185 = vsel %vm3159, %v3096, %v3152
      %v3186 = vsel %vm3159, %v3098, %v3154
      %v3187 = vsel %vm3159, %v3100, %v3156
      %v3188 = vsel %vm3159, %v3102, %v3046
      %v3189 = vsel %vm3159, %v3104, %v3048
      %v3190 = vsel %vm3159, %v3106, %v3050
      %v3191 = vsel %vm3159, %v3108, %v3052
      %v3192 = vsel %vm3159, %v3110, %v3054
      %v3193 = vsel %vm3159, %v3112, %v3056
      %v3194 = vsel %vm3159, %v3114, %v3058
      %v3195 = vsel %vm3159, %v3116, %v3060
      %v3196 = vsel %vm3159, %v3118, %v3062
      %v3197 = vsel %vm3159, %v3120, %v3064
      %v3198 = vsel %vm3159, %v3122, %v3066
      %v3199 = vsel %vm3159, %v3124, %v3068
      %v3200 = vsel %vm3159, %v3126, %v3070
      %v3201 = vsel %vm3159, %v3128, %v3072
      %v3202 = vsel %vm3159, %v3130, %v3074
      %v3203 = vsel %vm3159, %v3132, %v3076
      %v3204 = vsel %vm3159, %v3134, %v3078
      %v3205 = vsel %vm3159, %v3136, %v3080
      %v3206 = vsel %vm3159, %v3138, %v3082
      %v3207 = vsel %vm3159, %v3140, %v3084
      %v3208 = vsel %vm3159, %v3142, %v3086
      %v3209 = vsel %vm3159, %v3144, %v3088
      %v3210 = vsel %vm3159, %v3146, %v3090
      %v3211 = vsel %vm3159, %v3148, %v3092
      %v3212 = vsel %vm3159, %v3150, %v3094
      %v3213 = vsel %vm3159, %v3152, %v3096
      %v3214 = vsel %vm3159, %v3154, %v3098
      %v3215 = vsel %vm3159, %v3156, %v3100
      %v3216 = vmax.f32 %v2989, %v3188
      %v3217 = vmax.f32 %v2990, %v3160
      %v3218 = vmax.f32 %v2991, %v3189
      %v3219 = vmax.f32 %v2992, %v3161
      %v3220 = vmax.f32 %v2993, %v3190
      %v3221 = vmax.f32 %v2994, %v3162
      %v3222 = vmax.f32 %v2995, %v3191
      %v3223 = vmax.f32 %v2996, %v3163
      %v3224 = vmax.f32 %v2997, %v3192
      %v3225 = vmax.f32 %v2998, %v3164
      %v3226 = vmax.f32 %v2999, %v3193
      %v3227 = vmax.f32 %v3000, %v3165
      %v3228 = vmax.f32 %v3001, %v3194
      %v3229 = vmax.f32 %v3002, %v3166
      %v3230 = vmax.f32 %v3003, %v3195
      %v3231 = vmax.f32 %v3004, %v3167
      %v3232 = vmax.f32 %v3005, %v3196
      %v3233 = vmax.f32 %v3006, %v3168
      %v3234 = vmax.f32 %v3007, %v3197
      %v3235 = vmax.f32 %v3008, %v3169
      %v3236 = vmax.f32 %v3009, %v3198
      %v3237 = vmax.f32 %v3010, %v3170
      %v3238 = vmax.f32 %v3011, %v3199
      %v3239 = vmax.f32 %v3012, %v3171
      %v3240 = vmax.f32 %v3013, %v3200
      %v3241 = vmax.f32 %v3014, %v3172
      %v3242 = vmax.f32 %v3015, %v3201
      %v3243 = vmax.f32 %v3016, %v3173
      %v3244 = vmax.f32 %v3017, %v3202
      %v3245 = vmax.f32 %v3018, %v3174
      %v3246 = vmax.f32 %v3019, %v3203
      %v3247 = vmax.f32 %v3020, %v3175
      %v3248 = vmax.f32 %v3021, %v3204
      %v3249 = vmax.f32 %v3022, %v3176
      %v3250 = vmax.f32 %v3023, %v3205
      %v3251 = vmax.f32 %v3024, %v3177
      %v3252 = vmax.f32 %v3025, %v3206
      %v3253 = vmax.f32 %v3026, %v3178
      %v3254 = vmax.f32 %v3027, %v3207
      %v3255 = vmax.f32 %v3028, %v3179
      %v3256 = vmax.f32 %v3029, %v3208
      %v3257 = vmax.f32 %v3030, %v3180
      %v3258 = vmax.f32 %v3031, %v3209
      %v3259 = vmax.f32 %v3032, %v3181
      %v3260 = vmax.f32 %v3033, %v3210
      %v3261 = vmax.f32 %v3034, %v3182
      %v3262 = vmax.f32 %v3035, %v3211
      %v3263 = vmax.f32 %v3036, %v3183
      %v3264 = vmax.f32 %v3037, %v3212
      %v3265 = vmax.f32 %v3038, %v3184
      %v3266 = vmax.f32 %v3039, %v3213
      %v3267 = vmax.f32 %v3040, %v3185
      %v3268 = vmax.f32 %v3041, %v3214
      %v3269 = vmax.f32 %v3042, %v3186
      %v3270 = vmax.f32 %v3043, %v3215
      %v3271 = vmax.f32 %v3044, %v3187
      %v3272 = vld [vmem:[%s3] sm:$0xff]
      %v3273 = vld [vmem:[%s3 + $0x8] sm:$0xff]
      %v3274 = vld [vmem:[%s3 + $0x10] sm:$0xff]
      %v3275 = vld [vmem:[%s3 + $0x18] sm:$0xff]
      %v3276 = vld [vmem:[%s3 + $0x20] sm:$0xff]
      %v3277 = vld [vmem:[%s3 + $0x28] sm:$0xff]
      %v3278 = vld [vmem:[%s3 + $0x30] sm:$0xff]
      %v3279 = vld [vmem:[%s3 + $0x38] sm:$0xff]
      %v3280 = vld [vmem:[%s3 + $0x40] sm:$0xff]
      %v3281 = vld [vmem:[%s3 + $0x48] sm:$0xff]
      %v3282 = vld [vmem:[%s3 + $0x50] sm:$0xff]
      %v3283 = vld [vmem:[%s3 + $0x58] sm:$0xff]
      %v3284 = vld [vmem:[%s3 + $0x60] sm:$0xff]
      %v3285 = vld [vmem:[%s3 + $0x68] sm:$0xff]
      %v3286 = vld [vmem:[%s3 + $0x70] sm:$0xff]
      %v3287 = vld [vmem:[%s3 + $0x78] sm:$0xff]
      %v3288 = vld [vmem:[%s3 + $0x80] sm:$0xff]
      %v3289 = vld [vmem:[%s3 + $0x88] sm:$0xff]
      %v3290 = vld [vmem:[%s3 + $0x90] sm:$0xff]
      %v3291 = vld [vmem:[%s3 + $0x98] sm:$0xff]
      %v3292 = vld [vmem:[%s3 + $0xa0] sm:$0xff]
      %v3293 = vld [vmem:[%s3 + $0xa8] sm:$0xff]
      %v3294 = vld [vmem:[%s3 + $0xb0] sm:$0xff]
      %v3295 = vld [vmem:[%s3 + $0xb8] sm:$0xff]
      %vm3296 = vcmask 785408
      %v3298 = vsel %vm3296, %v3273, 0
      %v3301 = vsel %vm3296, %v3275, 0
      %v3304 = vsel %vm3296, %v3277, 0
      %v3307 = vsel %vm3296, %v3279, 0
      %v3310 = vsel %vm3296, %v3281, 0
      %v3313 = vsel %vm3296, %v3283, 0
      %v3316 = vsel %vm3296, %v3285, 0
      %v3319 = vsel %vm3296, %v3287, 0
      %v3322 = vsel %vm3296, %v3289, 0
      %v3325 = vsel %vm3296, %v3291, 0
      %v3328 = vsel %vm3296, %v3293, 0
      %v3331 = vsel %vm3296, %v3295, 0
      %3333 = vmatprep.subr.mxu0 %v3217
      %3334 = vmatpush1.msra.mxu0 %v3216
      %3335 = vmatprep.subr.mxu0 %v3219
      %3336 = vmatpush1.msra.mxu0 %v3218
      %3337 = vmatprep.subr.mxu0 %v3221
      %3338 = vmatpush1.msra.mxu0 %v3220
      %3339 = vmatprep.subr.mxu0 %v3223
      %3340 = vmatpush1.msra.mxu0 %v3222
      %3341 = vmatprep.subr.mxu0 %v3225
      %3342 = vmatpush1.msra.mxu0 %v3224
      %3343 = vmatprep.subr.mxu0 %v3227
      %3344 = vmatpush1.msra.mxu0 %v3226
      %3345 = vmatprep.subr.mxu0 %v3229
      %3346 = vmatpush1.msra.mxu0 %v3228
      %3347 = vmatprep.subr.mxu0 %v3231
      %3348 = vmatpush1.msra.mxu0 %v3230
      %3349 = vmatprep.subr.mxu0 %v3233
      %3350 = vmatpush1.msra.mxu0 %v3232
      %3351 = vmatprep.subr.mxu0 %v3235
      %3352 = vmatpush1.msra.mxu0 %v3234
      %3353 = vmatprep.subr.mxu0 %v3237
      %3354 = vmatpush1.msra.mxu0 %v3236
      %3355 = vmatprep.subr.mxu0 %v3239
      %3356 = vmatpush1.msra.mxu0 %v3238
      %3357 = vmatprep.subr.mxu0 %v3241
      %3358 = vmatpush1.msra.mxu0 %v3240
      %3359 = vmatprep.subr.mxu0 %v3243
      %3360 = vmatpush1.msra.mxu0 %v3242
      %3361 = vmatprep.subr.mxu0 %v3245
      %3362 = vmatpush1.msra.mxu0 %v3244
      %3363 = vmatprep.subr.mxu0 %v3247
      %3364 = vmatpush1.msra.mxu0 %v3246
      %3365 = vmatprep.subr.mxu0 %v3249
      %3366 = vmatpush1.msra.mxu0 %v3248
      %3367 = vmatprep.subr.mxu0 %v3251
      %3368 = vmatpush1.msra.mxu0 %v3250
      %3369 = vmatprep.subr.mxu0 %v3253
      %3370 = vmatpush1.msra.mxu0 %v3252
      %3371 = vmatprep.subr.mxu0 %v3255
      %3372 = vmatpush1.msra.mxu0 %v3254
      %3373 = vmatprep.subr.mxu0 %v3257
      %3374 = vmatpush1.msra.mxu0 %v3256
      %3375 = vmatprep.subr.mxu0 %v3259
      %3376 = vmatpush1.msra.mxu0 %v3258
      %3377 = vmatprep.subr.mxu0 %v3261
      %3378 = vmatpush1.msra.mxu0 %v3260
      %3379 = vmatprep.subr.mxu0 %v3263
      %3380 = vmatpush1.msra.mxu0 %v3262
      %3381 = vmatprep.subr.mxu0 %v3265
      %3382 = vmatpush1.msra.mxu0 %v3264
      %3383 = vmatprep.subr.mxu0 %v3267
      %3384 = vmatpush1.msra.mxu0 %v3266
      %3385 = vmatprep.subr.mxu0 %v3269
      %3386 = vmatpush1.msra.mxu0 %v3268
      %3387 = vmatprep.subr.mxu0 %v3271
      %3388 = vmatpush1.msra.mxu0 %v3270
      %3389 = vmatprep.subr.mxu0 0.0
      %3390 = vmatpush1.msra.mxu0 0.0
      %3391 = vmatprep.subr.mxu0 0.0
      %3392 = vmatpush1.msra.mxu0 0.0
      %3393 = vmatprep.subr.mxu0 0.0
      %3394 = vmatpush1.msra.mxu0 0.0
      %3395 = vmatprep.subr.mxu0 0.0
      %3396 = vmatpush1.msra.mxu0 0.0
      %3397 = vmatprep.mubr.f32.mxu0 %v3298
      %3398 = vmatmul.mubr.f32.gmra.mrb[0].mxu0 %v3272
      %v3399 = vpop.f32.mrb[0].mxu0
      %v3400 = vadd.f32 0.0, %v3399
      %v3401 = vpop.f32.mrb[0].mxu0
      %v3402 = vadd.f32 0.0, %v3401
      %3403 = vmatprep.mubr.f32.mxu0 %v3301
      %3404 = vmatmul.mubr.f32.gmra.mrb[0].mxu0 %v3274
      %v3405 = vpop.f32.mrb[0].mxu0
      %v3406 = vadd.f32 0.0, %v3405
      %v3407 = vpop.f32.mrb[0].mxu0
      %v3408 = vadd.f32 0.0, %v3407
      %3409 = vmatprep.mubr.f32.mxu0 %v3304
      %3410 = vmatmul.mubr.f32.gmra.mrb[0].mxu0 %v3276
      %v3411 = vpop.f32.mrb[0].mxu0
      %v3412 = vadd.f32 0.0, %v3411
      %v3413 = vpop.f32.mrb[0].mxu0
      %v3414 = vadd.f32 0.0, %v3413
      %3415 = vmatprep.mubr.f32.mxu0 %v3307
      %3416 = vmatmul.mubr.f32.gmra.mrb[0].mxu0 %v3278
      %v3417 = vpop.f32.mrb[0].mxu0
      %v3418 = vadd.f32 0.0, %v3417
      %v3419 = vpop.f32.mrb[0].mxu0
      %v3420 = vadd.f32 0.0, %v3419
      %3421 = vmatprep.mubr.f32.mxu0 %v3310
      %3422 = vmatmul.mubr.f32.gmra.mrb[0].mxu0 %v3280
      %v3423 = vpop.f32.mrb[0].mxu0
      %v3424 = vadd.f32 0.0, %v3423
      %v3425 = vpop.f32.mrb[0].mxu0
      %v3426 = vadd.f32 0.0, %v3425
      %3427 = vmatprep.mubr.f32.mxu0 %v3313
      %3428 = vmatmul.mubr.f32.gmra.mrb[0].mxu0 %v3282
      %v3429 = vpop.f32.mrb[0].mxu0
      %v3430 = vadd.f32 0.0, %v3429
      %v3431 = vpop.f32.mrb[0].mxu0
      %v3432 = vadd.f32 0.0, %v3431
      %3433 = vmatprep.mubr.f32.mxu0 %v3316
      %3434 = vmatmul.mubr.f32.gmra.mrb[0].mxu0 %v3284
      %v3435 = vpop.f32.mrb[0].mxu0
      %v3436 = vadd.f32 0.0, %v3435
      %v3437 = vpop.f32.mrb[0].mxu0
      %v3438 = vadd.f32 0.0, %v3437
      %3439 = vmatprep.mubr.f32.mxu0 %v3319
      %3440 = vmatmul.mubr.f32.gmra.mrb[0].mxu0 %v3286
      %v3441 = vpop.f32.mrb[0].mxu0
      %v3442 = vadd.f32 0.0, %v3441
      %v3443 = vpop.f32.mrb[0].mxu0
      %v3444 = vadd.f32 0.0, %v3443
      %3445 = vmatprep.mubr.f32.mxu0 %v3322
      %3446 = vmatmul.mubr.f32.gmra.mrb[0].mxu0 %v3288
      %v3447 = vpop.f32.mrb[0].mxu0
      %v3448 = vadd.f32 0.0, %v3447
      %v3449 = vpop.f32.mrb[0].mxu0
      %v3450 = vadd.f32 0.0, %v3449
      %3451 = vmatprep.mubr.f32.mxu0 %v3325
      %3452 = vmatmul.mubr.f32.gmra.mrb[0].mxu0 %v3290
      %v3453 = vpop.f32.mrb[0].mxu0
      %v3454 = vadd.f32 0.0, %v3453
      %v3455 = vpop.f32.mrb[0].mxu0
      %v3456 = vadd.f32 0.0, %v3455
      %3457 = vmatprep.mubr.f32.mxu0 %v3328
      %3458 = vmatmul.mubr.f32.gmra.mrb[0].mxu0 %v3292
      %v3459 = vpop.f32.mrb[0].mxu0
      %v3460 = vadd.f32 0.0, %v3459
      %v3461 = vpop.f32.mrb[0].mxu0
      %v3462 = vadd.f32 0.0, %v3461
      %3463 = vmatprep.mubr.f32.mxu0 %v3331
      %3464 = vmatmul.mubr.f32.gmra.mrb[0].mxu0 %v3294
      %v3465 = vpop.f32.mrb[0].mxu0
      %v3466 = vadd.f32 0.0, %v3465
      %v3467 = vpop.f32.mrb[0].mxu0
      %v3468 = vadd.f32 0.0, %v3467
      %3469 = vdwg.mxu0
      %v3470 = vld [vmem:[%s5] sm:$0x1]
      %v3472 = vlaneseq
      %v3473 = vshrl.u32 %v3472, 7
      %v3474 = vsub.s32 0, %v3473
      %v3475 = vrot.slane %v3470, %v3474
      %v3477 = vld [vmem:[%s4] sm:$0xff]
      %v3478 = vld [vmem:[%s4 + $0x8] sm:$0xff]
      %v3479 = vld [vmem:[%s4 + $0x10] sm:$0xff]
      %v3480 = vld [vmem:[%s4 + $0x18] sm:$0xff]
      %v3481 = vld [vmem:[%s4 + $0x20] sm:$0xff]
      %v3482 = vld [vmem:[%s4 + $0x28] sm:$0xff]
      %v3483 = vld [vmem:[%s4 + $0x30] sm:$0xff]
      %v3484 = vld [vmem:[%s4 + $0x38] sm:$0xff]
      %v3485 = vld [vmem:[%s4 + $0x40] sm:$0xff]
      %v3486 = vld [vmem:[%s4 + $0x48] sm:$0xff]
      %v3487 = vld [vmem:[%s4 + $0x50] sm:$0xff]
      %v3488 = vld [vmem:[%s4 + $0x58] sm:$0xff]
      %v3489 = vld [vmem:[%s4 + $0x60] sm:$0xff]
      %v3490 = vld [vmem:[%s4 + $0x68] sm:$0xff]
      %v3491 = vld [vmem:[%s4 + $0x70] sm:$0xff]
      %v3492 = vld [vmem:[%s4 + $0x78] sm:$0xff]
      %v3493 = vld [vmem:[%s4 + $0x80] sm:$0xff]
      %v3494 = vld [vmem:[%s4 + $0x88] sm:$0xff]
      %v3495 = vld [vmem:[%s4 + $0x90] sm:$0xff]
      %v3496 = vld [vmem:[%s4 + $0x98] sm:$0xff]
      %v3497 = vld [vmem:[%s4 + $0xa0] sm:$0xff]
      %v3498 = vld [vmem:[%s4 + $0xa8] sm:$0xff]
      %v3499 = vld [vmem:[%s4 + $0xb0] sm:$0xff]
      %v3500 = vld [vmem:[%s4 + $0xb8] sm:$0xff]
      %v3501 = vld [vmem:[%s4 + $0xc0] sm:$0xff]
      %v3502 = vld [vmem:[%s4 + $0xc8] sm:$0xff]
      %v3503 = vld [vmem:[%s4 + $0xd0] sm:$0xff]
      %v3504 = vld [vmem:[%s4 + $0xd8] sm:$0xff]
      %v3505 = vld [vmem:[%s4 + $0xe0] sm:$0xff]
      %v3506 = vld [vmem:[%s4 + $0xe8] sm:$0xff]
      %v3507 = vld [vmem:[%s4 + $0xf0] sm:$0xff]
      %v3508 = vld [vmem:[%s4 + $0xf8] sm:$0xff]
      %3509 = vmatprep.subr.mxu0 0.0
      %3510 = vmatpush1.msra.mxu0 %v3477
      %3511 = vmatprep.subr.mxu0 0.0
      %3512 = vmatpush1.msra.mxu0 %v3478
      %3513 = vmatprep.subr.mxu0 0.0
      %3514 = vmatpush1.msra.mxu0 %v3479
      %3515 = vmatprep.subr.mxu0 0.0
      %3516 = vmatpush1.msra.mxu0 %v3480
      %3517 = vmatprep.subr.mxu0 0.0
      %3518 = vmatpush1.msra.mxu0 %v3481
      %3519 = vmatprep.subr.mxu0 0.0
      %3520 = vmatpush1.msra.mxu0 %v3482
      %3521 = vmatprep.subr.mxu0 0.0
      %3522 = vmatpush1.msra.mxu0 %v3483
      %3523 = vmatprep.subr.mxu0 0.0
      %3524 = vmatpush1.msra.mxu0 %v3484
      %3525 = vmatprep.subr.mxu0 0.0
      %3526 = vmatpush1.msra.mxu0 %v3485
      %3527 = vmatprep.subr.mxu0 0.0
      %3528 = vmatpush1.msra.mxu0 %v3486
      %3529 = vmatprep.subr.mxu0 0.0
      %3530 = vmatpush1.msra.mxu0 %v3487
      %3531 = vmatprep.subr.mxu0 0.0
      %3532 = vmatpush1.msra.mxu0 %v3488
      %3533 = vmatprep.subr.mxu0 0.0
      %3534 = vmatpush1.msra.mxu0 %v3489
      %3535 = vmatprep.subr.mxu0 0.0
      %3536 = vmatpush1.msra.mxu0 %v3490
      %3537 = vmatprep.subr.mxu0 0.0
      %3538 = vmatpush1.msra.mxu0 %v3491
      %3539 = vmatprep.subr.mxu0 0.0
      %3540 = vmatpush1.msra.mxu0 %v3492
      %3541 = vmatprep.subr.mxu0 0.0
      %3542 = vmatpush1.msra.mxu0 %v3493
      %3543 = vmatprep.subr.mxu0 0.0
      %3544 = vmatpush1.msra.mxu0 %v3494
      %3545 = vmatprep.subr.mxu0 0.0
      %3546 = vmatpush1.msra.mxu0 %v3495
      %3547 = vmatprep.subr.mxu0 0.0
      %3548 = vmatpush1.msra.mxu0 %v3496
      %3549 = vmatprep.subr.mxu0 0.0
      %3550 = vmatpush1.msra.mxu0 %v3497
      %3551 = vmatprep.subr.mxu0 0.0
      %3552 = vmatpush1.msra.mxu0 %v3498
      %3553 = vmatprep.subr.mxu0 0.0
      %3554 = vmatpush1.msra.mxu0 %v3499
      %3555 = vmatprep.subr.mxu0 0.0
      %3556 = vmatpush1.msra.mxu0 %v3500
      %3557 = vmatprep.subr.mxu0 0.0
      %3558 = vmatpush1.msra.mxu0 %v3501
      %3559 = vmatprep.subr.mxu0 0.0
      %3560 = vmatpush1.msra.mxu0 %v3502
      %3561 = vmatprep.subr.mxu0 0.0
      %3562 = vmatpush1.msra.mxu0 %v3503
      %3563 = vmatprep.subr.mxu0 0.0
      %3564 = vmatpush1.msra.mxu0 %v3504
      %3565 = vmatprep.subr.mxu0 0.0
      %3566 = vmatpush1.msra.mxu0 %v3505
      %3567 = vmatprep.subr.mxu0 0.0
      %3568 = vmatpush1.msra.mxu0 %v3506
      %3569 = vmatprep.subr.mxu0 0.0
      %3570 = vmatpush1.msra.mxu0 %v3507
      %3571 = vmatprep.subr.mxu0 0.0
      %3572 = vmatpush1.msra.mxu0 %v3508
      %3573 = vmatprep.mubr.f32.mxu0 %v3402
      %3574 = vmatmul.mubr.f32.gmra.mrb[0].mxu0 %v3400
      %v3575 = vpop.f32.mrb[0].mxu0
      %v3576 = vadd.f32 0.0, %v3575
      %v3577 = vpop.f32.mrb[0].mxu0
      %3578 = vmatprep.mubr.f32.mxu0 %v3408
      %3579 = vmatmul.mubr.f32.gmra.mrb[0].mxu0 %v3406
      %v3580 = vpop.f32.mrb[0].mxu0
      %v3581 = vadd.f32 0.0, %v3580
      %v3582 = vpop.f32.mrb[0].mxu0
      %3583 = vmatprep.mubr.f32.mxu0 %v3414
      %3584 = vmatmul.mubr.f32.gmra.mrb[0].mxu0 %v3412
      %v3585 = vpop.f32.mrb[0].mxu0
      %v3586 = vadd.f32 0.0, %v3585
      %v3587 = vpop.f32.mrb[0].mxu0
      %3588 = vmatprep.mubr.f32.mxu0 %v3420
      %3589 = vmatmul.mubr.f32.gmra.mrb[0].mxu0 %v3418
      %v3590 = vpop.f32.mrb[0].mxu0
      %v3591 = vadd.f32 0.0, %v3590
      %v3592 = vpop.f32.mrb[0].mxu0
      %3593 = vmatprep.mubr.f32.mxu0 %v3426
      %3594 = vmatmul.mubr.f32.gmra.mrb[0].mxu0 %v3424
      %v3595 = vpop.f32.mrb[0].mxu0
      %v3596 = vadd.f32 0.0, %v3595
      %v3597 = vpop.f32.mrb[0].mxu0
      %3598 = vmatprep.mubr.f32.mxu0 %v3432
      %3599 = vmatmul.mubr.f32.gmra.mrb[0].mxu0 %v3430
      %v3600 = vpop.f32.mrb[0].mxu0
      %v3601 = vadd.f32 0.0, %v3600
      %v3602 = vpop.f32.mrb[0].mxu0
      %3603 = vmatprep.mubr.f32.mxu0 %v3438
      %3604 = vmatmul.mubr.f32.gmra.mrb[0].mxu0 %v3436
      %v3605 = vpop.f32.mrb[0].mxu0
      %v3606 = vadd.f32 0.0, %v3605
      %v3607 = vpop.f32.mrb[0].mxu0
      %3608 = vmatprep.mubr.f32.mxu0 %v3444
      %3609 = vmatmul.mubr.f32.gmra.mrb[0].mxu0 %v3442
      %v3610 = vpop.f32.mrb[0].mxu0
      %v3611 = vadd.f32 0.0, %v3610
      %v3612 = vpop.f32.mrb[0].mxu0
      %3613 = vdwg.mxu0
      %v3614 = vadd.f32 %v3475, %v3576
      %v3615 = vadd.f32 %v3475, %v3581
      %v3616 = vadd.f32 %v3475, %v3586
      %v3617 = vadd.f32 %v3475, %v3591
      %v3618 = vadd.f32 %v3475, %v3596
      %v3619 = vadd.f32 %v3475, %v3601
      %v3620 = vadd.f32 %v3475, %v3606
      %v3621 = vadd.f32 %v3475, %v3611
      %s3622 = scalar_lea.vmem %s4, 256
      %v3623 = vld [vmem:[%s3622] sm:$0xff]
      %v3624 = vld [vmem:[%s3622 + $0x8] sm:$0xff]
      %v3625 = vld [vmem:[%s3622 + $0x10] sm:$0xff]
      %v3626 = vld [vmem:[%s3622 + $0x18] sm:$0xff]
      %v3627 = vld [vmem:[%s3622 + $0x20] sm:$0xff]
      %v3628 = vld [vmem:[%s3622 + $0x28] sm:$0xff]
      %v3629 = vld [vmem:[%s3622 + $0x30] sm:$0xff]
      %v3630 = vld [vmem:[%s3622 + $0x38] sm:$0xff]
      %v3631 = vld [vmem:[%s3622 + $0x40] sm:$0xff]
      %v3632 = vld [vmem:[%s3622 + $0x48] sm:$0xff]
      %v3633 = vld [vmem:[%s3622 + $0x50] sm:$0xff]
      %v3634 = vld [vmem:[%s3622 + $0x58] sm:$0xff]
      %v3635 = vld [vmem:[%s3622 + $0x60] sm:$0xff]
      %v3636 = vld [vmem:[%s3622 + $0x68] sm:$0xff]
      %v3637 = vld [vmem:[%s3622 + $0x70] sm:$0xff]
      %v3638 = vld [vmem:[%s3622 + $0x78] sm:$0xff]
      %v3639 = vld [vmem:[%s3622 + $0x80] sm:$0xff]
      %v3640 = vld [vmem:[%s3622 + $0x88] sm:$0xff]
      %v3641 = vld [vmem:[%s3622 + $0x90] sm:$0xff]
      %v3642 = vld [vmem:[%s3622 + $0x98] sm:$0xff]
      %v3643 = vld [vmem:[%s3622 + $0xa0] sm:$0xff]
      %v3644 = vld [vmem:[%s3622 + $0xa8] sm:$0xff]
      %v3645 = vld [vmem:[%s3622 + $0xb0] sm:$0xff]
      %v3646 = vld [vmem:[%s3622 + $0xb8] sm:$0xff]
      %v3647 = vld [vmem:[%s3622 + $0xc0] sm:$0xff]
      %v3648 = vld [vmem:[%s3622 + $0xc8] sm:$0xff]
      %v3649 = vld [vmem:[%s3622 + $0xd0] sm:$0xff]
      %v3650 = vld [vmem:[%s3622 + $0xd8] sm:$0xff]
      %v3651 = vld [vmem:[%s3622 + $0xe0] sm:$0xff]
      %v3652 = vld [vmem:[%s3622 + $0xe8] sm:$0xff]
      %v3653 = vld [vmem:[%s3622 + $0xf0] sm:$0xff]
      %v3654 = vld [vmem:[%s3622 + $0xf8] sm:$0xff]
      %3655 = vmatprep.subr.mxu0 0.0
      %3656 = vmatpush1.msra.mxu0 %v3623
      %3657 = vmatprep.subr.mxu0 0.0
      %3658 = vmatpush1.msra.mxu0 %v3624
      %3659 = vmatprep.subr.mxu0 0.0
      %3660 = vmatpush1.msra.mxu0 %v3625
      %3661 = vmatprep.subr.mxu0 0.0
      %3662 = vmatpush1.msra.mxu0 %v3626
      %3663 = vmatprep.subr.mxu0 0.0
      %3664 = vmatpush1.msra.mxu0 %v3627
      %3665 = vmatprep.subr.mxu0 0.0
      %3666 = vmatpush1.msra.mxu0 %v3628
      %3667 = vmatprep.subr.mxu0 0.0
      %3668 = vmatpush1.msra.mxu0 %v3629
      %3669 = vmatprep.subr.mxu0 0.0
      %3670 = vmatpush1.msra.mxu0 %v3630
      %3671 = vmatprep.subr.mxu0 0.0
      %3672 = vmatpush1.msra.mxu0 %v3631
      %3673 = vmatprep.subr.mxu0 0.0
      %3674 = vmatpush1.msra.mxu0 %v3632
      %3675 = vmatprep.subr.mxu0 0.0
      %3676 = vmatpush1.msra.mxu0 %v3633
      %3677 = vmatprep.subr.mxu0 0.0
      %3678 = vmatpush1.msra.mxu0 %v3634
      %3679 = vmatprep.subr.mxu0 0.0
      %3680 = vmatpush1.msra.mxu0 %v3635
      %3681 = vmatprep.subr.mxu0 0.0
      %3682 = vmatpush1.msra.mxu0 %v3636
      %3683 = vmatprep.subr.mxu0 0.0
      %3684 = vmatpush1.msra.mxu0 %v3637
      %3685 = vmatprep.subr.mxu0 0.0
      %3686 = vmatpush1.msra.mxu0 %v3638
      %3687 = vmatprep.subr.mxu0 0.0
      %3688 = vmatpush1.msra.mxu0 %v3639
      %3689 = vmatprep.subr.mxu0 0.0
      %3690 = vmatpush1.msra.mxu0 %v3640
      %3691 = vmatprep.subr.mxu0 0.0
      %3692 = vmatpush1.msra.mxu0 %v3641
      %3693 = vmatprep.subr.mxu0 0.0
      %3694 = vmatpush1.msra.mxu0 %v3642
      %3695 = vmatprep.subr.mxu0 0.0
      %3696 = vmatpush1.msra.mxu0 %v3643
      %3697 = vmatprep.subr.mxu0 0.0
      %3698 = vmatpush1.msra.mxu0 %v3644
      %3699 = vmatprep.subr.mxu0 0.0
      %3700 = vmatpush1.msra.mxu0 %v3645
      %3701 = vmatprep.subr.mxu0 0.0
      %3702 = vmatpush1.msra.mxu0 %v3646
      %3703 = vmatprep.subr.mxu0 0.0
      %3704 = vmatpush1.msra.mxu0 %v3647
      %3705 = vmatprep.subr.mxu0 0.0
      %3706 = vmatpush1.msra.mxu0 %v3648
      %3707 = vmatprep.subr.mxu0 0.0
      %3708 = vmatpush1.msra.mxu0 %v3649
      %3709 = vmatprep.subr.mxu0 0.0
      %3710 = vmatpush1.msra.mxu0 %v3650
      %3711 = vmatprep.subr.mxu0 0.0
      %3712 = vmatpush1.msra.mxu0 %v3651
      %3713 = vmatprep.subr.mxu0 0.0
      %3714 = vmatpush1.msra.mxu0 %v3652
      %3715 = vmatprep.subr.mxu0 0.0
      %3716 = vmatpush1.msra.mxu0 %v3653
      %3717 = vmatprep.subr.mxu0 0.0
      %3718 = vmatpush1.msra.mxu0 %v3654
      %3719 = vmatprep.mubr.f32.mxu0 %v3408
      %3720 = vmatmul.mubr.f32.gmra.mrb[0].mxu0 %v3406
      %v3721 = vpop.f32.mrb[0].mxu0
      %v3722 = vadd.f32 0.0, %v3721
      %v3723 = vpop.f32.mrb[0].mxu0
      %3724 = vmatprep.mubr.f32.mxu0 %v3414
      %3725 = vmatmul.mubr.f32.gmra.mrb[0].mxu0 %v3412
      %v3726 = vpop.f32.mrb[0].mxu0
      %v3727 = vadd.f32 0.0, %v3726
      %v3728 = vpop.f32.mrb[0].mxu0
      %3729 = vmatprep.mubr.f32.mxu0 %v3420
      %3730 = vmatmul.mubr.f32.gmra.mrb[0].mxu0 %v3418
      %v3731 = vpop.f32.mrb[0].mxu0
      %v3732 = vadd.f32 0.0, %v3731
      %v3733 = vpop.f32.mrb[0].mxu0
      %3734 = vmatprep.mubr.f32.mxu0 %v3426
      %3735 = vmatmul.mubr.f32.gmra.mrb[0].mxu0 %v3424
      %v3736 = vpop.f32.mrb[0].mxu0
      %v3737 = vadd.f32 0.0, %v3736
      %v3738 = vpop.f32.mrb[0].mxu0
      %3739 = vmatprep.mubr.f32.mxu0 %v3432
      %3740 = vmatmul.mubr.f32.gmra.mrb[0].mxu0 %v3430
      %v3741 = vpop.f32.mrb[0].mxu0
      %v3742 = vadd.f32 0.0, %v3741
      %v3743 = vpop.f32.mrb[0].mxu0
      %3744 = vmatprep.mubr.f32.mxu0 %v3438
      %3745 = vmatmul.mubr.f32.gmra.mrb[0].mxu0 %v3436
      %v3746 = vpop.f32.mrb[0].mxu0
      %v3747 = vadd.f32 0.0, %v3746
      %v3748 = vpop.f32.mrb[0].mxu0
      %3749 = vmatprep.mubr.f32.mxu0 %v3444
      %3750 = vmatmul.mubr.f32.gmra.mrb[0].mxu0 %v3442
      %v3751 = vpop.f32.mrb[0].mxu0
      %v3752 = vadd.f32 0.0, %v3751
      %v3753 = vpop.f32.mrb[0].mxu0
      %3754 = vmatprep.mubr.f32.mxu0 %v3450
      %3755 = vmatmul.mubr.f32.gmra.mrb[0].mxu0 %v3448
      %v3756 = vpop.f32.mrb[0].mxu0
      %v3757 = vadd.f32 0.0, %v3756
      %v3758 = vpop.f32.mrb[0].mxu0
      %3759 = vdwg.mxu0
      %v3760 = vadd.f32 %v3614, %v3722
      %v3761 = vadd.f32 %v3615, %v3727
      %v3762 = vadd.f32 %v3616, %v3732
      %v3763 = vadd.f32 %v3617, %v3737
      %v3764 = vadd.f32 %v3618, %v3742
      %v3765 = vadd.f32 %v3619, %v3747
      %v3766 = vadd.f32 %v3620, %v3752
      %v3767 = vadd.f32 %v3621, %v3757
      %s3768 = scalar_lea.vmem %s4, 512
      %v3769 = vld [vmem:[%s3768] sm:$0xff]
      %v3770 = vld [vmem:[%s3768 + $0x8] sm:$0xff]
      %v3771 = vld [vmem:[%s3768 + $0x10] sm:$0xff]
      %v3772 = vld [vmem:[%s3768 + $0x18] sm:$0xff]
      %v3773 = vld [vmem:[%s3768 + $0x20] sm:$0xff]
      %v3774 = vld [vmem:[%s3768 + $0x28] sm:$0xff]
      %v3775 = vld [vmem:[%s3768 + $0x30] sm:$0xff]
      %v3776 = vld [vmem:[%s3768 + $0x38] sm:$0xff]
      %v3777 = vld [vmem:[%s3768 + $0x40] sm:$0xff]
      %v3778 = vld [vmem:[%s3768 + $0x48] sm:$0xff]
      %v3779 = vld [vmem:[%s3768 + $0x50] sm:$0xff]
      %v3780 = vld [vmem:[%s3768 + $0x58] sm:$0xff]
      %v3781 = vld [vmem:[%s3768 + $0x60] sm:$0xff]
      %v3782 = vld [vmem:[%s3768 + $0x68] sm:$0xff]
      %v3783 = vld [vmem:[%s3768 + $0x70] sm:$0xff]
      %v3784 = vld [vmem:[%s3768 + $0x78] sm:$0xff]
      %v3785 = vld [vmem:[%s3768 + $0x80] sm:$0xff]
      %v3786 = vld [vmem:[%s3768 + $0x88] sm:$0xff]
      %v3787 = vld [vmem:[%s3768 + $0x90] sm:$0xff]
      %v3788 = vld [vmem:[%s3768 + $0x98] sm:$0xff]
      %v3789 = vld [vmem:[%s3768 + $0xa0] sm:$0xff]
      %v3790 = vld [vmem:[%s3768 + $0xa8] sm:$0xff]
      %v3791 = vld [vmem:[%s3768 + $0xb0] sm:$0xff]
      %v3792 = vld [vmem:[%s3768 + $0xb8] sm:$0xff]
      %v3793 = vld [vmem:[%s3768 + $0xc0] sm:$0xff]
      %v3794 = vld [vmem:[%s3768 + $0xc8] sm:$0xff]
      %v3795 = vld [vmem:[%s3768 + $0xd0] sm:$0xff]
      %v3796 = vld [vmem:[%s3768 + $0xd8] sm:$0xff]
      %v3797 = vld [vmem:[%s3768 + $0xe0] sm:$0xff]
      %v3798 = vld [vmem:[%s3768 + $0xe8] sm:$0xff]
      %v3799 = vld [vmem:[%s3768 + $0xf0] sm:$0xff]
      %v3800 = vld [vmem:[%s3768 + $0xf8] sm:$0xff]
      %3801 = vmatprep.subr.mxu0 0.0
      %3802 = vmatpush1.msra.mxu0 %v3769
      %3803 = vmatprep.subr.mxu0 0.0
      %3804 = vmatpush1.msra.mxu0 %v3770
      %3805 = vmatprep.subr.mxu0 0.0
      %3806 = vmatpush1.msra.mxu0 %v3771
      %3807 = vmatprep.subr.mxu0 0.0
      %3808 = vmatpush1.msra.mxu0 %v3772
      %3809 = vmatprep.subr.mxu0 0.0
      %3810 = vmatpush1.msra.mxu0 %v3773
      %3811 = vmatprep.subr.mxu0 0.0
      %3812 = vmatpush1.msra.mxu0 %v3774
      %3813 = vmatprep.subr.mxu0 0.0
      %3814 = vmatpush1.msra.mxu0 %v3775
      %3815 = vmatprep.subr.mxu0 0.0
      %3816 = vmatpush1.msra.mxu0 %v3776
      %3817 = vmatprep.subr.mxu0 0.0
      %3818 = vmatpush1.msra.mxu0 %v3777
      %3819 = vmatprep.subr.mxu0 0.0
      %3820 = vmatpush1.msra.mxu0 %v3778
      %3821 = vmatprep.subr.mxu0 0.0
      %3822 = vmatpush1.msra.mxu0 %v3779
      %3823 = vmatprep.subr.mxu0 0.0
      %3824 = vmatpush1.msra.mxu0 %v3780
      %3825 = vmatprep.subr.mxu0 0.0
      %3826 = vmatpush1.msra.mxu0 %v3781
      %3827 = vmatprep.subr.mxu0 0.0
      %3828 = vmatpush1.msra.mxu0 %v3782
      %3829 = vmatprep.subr.mxu0 0.0
      %3830 = vmatpush1.msra.mxu0 %v3783
      %3831 = vmatprep.subr.mxu0 0.0
      %3832 = vmatpush1.msra.mxu0 %v3784
      %3833 = vmatprep.subr.mxu0 0.0
      %3834 = vmatpush1.msra.mxu0 %v3785
      %3835 = vmatprep.subr.mxu0 0.0
      %3836 = vmatpush1.msra.mxu0 %v3786
      %3837 = vmatprep.subr.mxu0 0.0
      %3838 = vmatpush1.msra.mxu0 %v3787
      %3839 = vmatprep.subr.mxu0 0.0
      %3840 = vmatpush1.msra.mxu0 %v3788
      %3841 = vmatprep.subr.mxu0 0.0
      %3842 = vmatpush1.msra.mxu0 %v3789
      %3843 = vmatprep.subr.mxu0 0.0
      %3844 = vmatpush1.msra.mxu0 %v3790
      %3845 = vmatprep.subr.mxu0 0.0
      %3846 = vmatpush1.msra.mxu0 %v3791
      %3847 = vmatprep.subr.mxu0 0.0
      %3848 = vmatpush1.msra.mxu0 %v3792
      %3849 = vmatprep.subr.mxu0 0.0
      %3850 = vmatpush1.msra.mxu0 %v3793
      %3851 = vmatprep.subr.mxu0 0.0
      %3852 = vmatpush1.msra.mxu0 %v3794
      %3853 = vmatprep.subr.mxu0 0.0
      %3854 = vmatpush1.msra.mxu0 %v3795
      %3855 = vmatprep.subr.mxu0 0.0
      %3856 = vmatpush1.msra.mxu0 %v3796
      %3857 = vmatprep.subr.mxu0 0.0
      %3858 = vmatpush1.msra.mxu0 %v3797
      %3859 = vmatprep.subr.mxu0 0.0
      %3860 = vmatpush1.msra.mxu0 %v3798
      %3861 = vmatprep.subr.mxu0 0.0
      %3862 = vmatpush1.msra.mxu0 %v3799
      %3863 = vmatprep.subr.mxu0 0.0
      %3864 = vmatpush1.msra.mxu0 %v3800
      %3865 = vmatprep.mubr.f32.mxu0 %v3414
      %3866 = vmatmul.mubr.f32.gmra.mrb[0].mxu0 %v3412
      %v3867 = vpop.f32.mrb[0].mxu0
      %v3868 = vadd.f32 0.0, %v3867
      %v3869 = vpop.f32.mrb[0].mxu0
      %3870 = vmatprep.mubr.f32.mxu0 %v3420
      %3871 = vmatmul.mubr.f32.gmra.mrb[0].mxu0 %v3418
      %v3872 = vpop.f32.mrb[0].mxu0
      %v3873 = vadd.f32 0.0, %v3872
      %v3874 = vpop.f32.mrb[0].mxu0
      %3875 = vmatprep.mubr.f32.mxu0 %v3426
      %3876 = vmatmul.mubr.f32.gmra.mrb[0].mxu0 %v3424
      %v3877 = vpop.f32.mrb[0].mxu0
      %v3878 = vadd.f32 0.0, %v3877
      %v3879 = vpop.f32.mrb[0].mxu0
      %3880 = vmatprep.mubr.f32.mxu0 %v3432
      %3881 = vmatmul.mubr.f32.gmra.mrb[0].mxu0 %v3430
      %v3882 = vpop.f32.mrb[0].mxu0
      %v3883 = vadd.f32 0.0, %v3882
      %v3884 = vpop.f32.mrb[0].mxu0
      %3885 = vmatprep.mubr.f32.mxu0 %v3438
      %3886 = vmatmul.mubr.f32.gmra.mrb[0].mxu0 %v3436
      %v3887 = vpop.f32.mrb[0].mxu0
      %v3888 = vadd.f32 0.0, %v3887
      %v3889 = vpop.f32.mrb[0].mxu0
      %3890 = vmatprep.mubr.f32.mxu0 %v3444
      %3891 = vmatmul.mubr.f32.gmra.mrb[0].mxu0 %v3442
      %v3892 = vpop.f32.mrb[0].mxu0
      %v3893 = vadd.f32 0.0, %v3892
      %v3894 = vpop.f32.mrb[0].mxu0
      %3895 = vmatprep.mubr.f32.mxu0 %v3450
      %3896 = vmatmul.mubr.f32.gmra.mrb[0].mxu0 %v3448
      %v3897 = vpop.f32.mrb[0].mxu0
      %v3898 = vadd.f32 0.0, %v3897
      %v3899 = vpop.f32.mrb[0].mxu0
      %3900 = vmatprep.mubr.f32.mxu0 %v3456
      %3901 = vmatmul.mubr.f32.gmra.mrb[0].mxu0 %v3454
      %v3902 = vpop.f32.mrb[0].mxu0
      %v3903 = vadd.f32 0.0, %v3902
      %v3904 = vpop.f32.mrb[0].mxu0
      %3905 = vdwg.mxu0
      %v3906 = vadd.f32 %v3760, %v3868
      %v3907 = vadd.f32 %v3761, %v3873
      %v3908 = vadd.f32 %v3762, %v3878
      %v3909 = vadd.f32 %v3763, %v3883
      %v3910 = vadd.f32 %v3764, %v3888
      %v3911 = vadd.f32 %v3765, %v3893
      %v3912 = vadd.f32 %v3766, %v3898
      %v3913 = vadd.f32 %v3767, %v3903
      %s3914 = scalar_lea.vmem %s4, 768
      %v3915 = vld [vmem:[%s3914] sm:$0xff]
      %v3916 = vld [vmem:[%s3914 + $0x8] sm:$0xff]
      %v3917 = vld [vmem:[%s3914 + $0x10] sm:$0xff]
      %v3918 = vld [vmem:[%s3914 + $0x18] sm:$0xff]
      %v3919 = vld [vmem:[%s3914 + $0x20] sm:$0xff]
      %v3920 = vld [vmem:[%s3914 + $0x28] sm:$0xff]
      %v3921 = vld [vmem:[%s3914 + $0x30] sm:$0xff]
      %v3922 = vld [vmem:[%s3914 + $0x38] sm:$0xff]
      %v3923 = vld [vmem:[%s3914 + $0x40] sm:$0xff]
      %v3924 = vld [vmem:[%s3914 + $0x48] sm:$0xff]
      %v3925 = vld [vmem:[%s3914 + $0x50] sm:$0xff]
      %v3926 = vld [vmem:[%s3914 + $0x58] sm:$0xff]
      %v3927 = vld [vmem:[%s3914 + $0x60] sm:$0xff]
      %v3928 = vld [vmem:[%s3914 + $0x68] sm:$0xff]
      %v3929 = vld [vmem:[%s3914 + $0x70] sm:$0xff]
      %v3930 = vld [vmem:[%s3914 + $0x78] sm:$0xff]
      %v3931 = vld [vmem:[%s3914 + $0x80] sm:$0xff]
      %v3932 = vld [vmem:[%s3914 + $0x88] sm:$0xff]
      %v3933 = vld [vmem:[%s3914 + $0x90] sm:$0xff]
      %v3934 = vld [vmem:[%s3914 + $0x98] sm:$0xff]
      %v3935 = vld [vmem:[%s3914 + $0xa0] sm:$0xff]
      %v3936 = vld [vmem:[%s3914 + $0xa8] sm:$0xff]
      %v3937 = vld [vmem:[%s3914 + $0xb0] sm:$0xff]
      %v3938 = vld [vmem:[%s3914 + $0xb8] sm:$0xff]
      %v3939 = vld [vmem:[%s3914 + $0xc0] sm:$0xff]
      %v3940 = vld [vmem:[%s3914 + $0xc8] sm:$0xff]
      %v3941 = vld [vmem:[%s3914 + $0xd0] sm:$0xff]
      %v3942 = vld [vmem:[%s3914 + $0xd8] sm:$0xff]
      %v3943 = vld [vmem:[%s3914 + $0xe0] sm:$0xff]
      %v3944 = vld [vmem:[%s3914 + $0xe8] sm:$0xff]
      %v3945 = vld [vmem:[%s3914 + $0xf0] sm:$0xff]
      %v3946 = vld [vmem:[%s3914 + $0xf8] sm:$0xff]
      %3947 = vmatprep.subr.mxu0 0.0
      %3948 = vmatpush1.msra.mxu0 %v3915
      %3949 = vmatprep.subr.mxu0 0.0
      %3950 = vmatpush1.msra.mxu0 %v3916
      %3951 = vmatprep.subr.mxu0 0.0
      %3952 = vmatpush1.msra.mxu0 %v3917
      %3953 = vmatprep.subr.mxu0 0.0
      %3954 = vmatpush1.msra.mxu0 %v3918
      %3955 = vmatprep.subr.mxu0 0.0
      %3956 = vmatpush1.msra.mxu0 %v3919
      %3957 = vmatprep.subr.mxu0 0.0
      %3958 = vmatpush1.msra.mxu0 %v3920
      %3959 = vmatprep.subr.mxu0 0.0
      %3960 = vmatpush1.msra.mxu0 %v3921
      %3961 = vmatprep.subr.mxu0 0.0
      %3962 = vmatpush1.msra.mxu0 %v3922
      %3963 = vmatprep.subr.mxu0 0.0
      %3964 = vmatpush1.msra.mxu0 %v3923
      %3965 = vmatprep.subr.mxu0 0.0
      %3966 = vmatpush1.msra.mxu0 %v3924
      %3967 = vmatprep.subr.mxu0 0.0
      %3968 = vmatpush1.msra.mxu0 %v3925
      %3969 = vmatprep.subr.mxu0 0.0
      %3970 = vmatpush1.msra.mxu0 %v3926
      %3971 = vmatprep.subr.mxu0 0.0
      %3972 = vmatpush1.msra.mxu0 %v3927
      %3973 = vmatprep.subr.mxu0 0.0
      %3974 = vmatpush1.msra.mxu0 %v3928
      %3975 = vmatprep.subr.mxu0 0.0
      %3976 = vmatpush1.msra.mxu0 %v3929
      %3977 = vmatprep.subr.mxu0 0.0
      %3978 = vmatpush1.msra.mxu0 %v3930
      %3979 = vmatprep.subr.mxu0 0.0
      %3980 = vmatpush1.msra.mxu0 %v3931
      %3981 = vmatprep.subr.mxu0 0.0
      %3982 = vmatpush1.msra.mxu0 %v3932
      %3983 = vmatprep.subr.mxu0 0.0
      %3984 = vmatpush1.msra.mxu0 %v3933
      %3985 = vmatprep.subr.mxu0 0.0
      %3986 = vmatpush1.msra.mxu0 %v3934
      %3987 = vmatprep.subr.mxu0 0.0
      %3988 = vmatpush1.msra.mxu0 %v3935
      %3989 = vmatprep.subr.mxu0 0.0
      %3990 = vmatpush1.msra.mxu0 %v3936
      %3991 = vmatprep.subr.mxu0 0.0
      %3992 = vmatpush1.msra.mxu0 %v3937
      %3993 = vmatprep.subr.mxu0 0.0
      %3994 = vmatpush1.msra.mxu0 %v3938
      %3995 = vmatprep.subr.mxu0 0.0
      %3996 = vmatpush1.msra.mxu0 %v3939
      %3997 = vmatprep.subr.mxu0 0.0
      %3998 = vmatpush1.msra.mxu0 %v3940
      %3999 = vmatprep.subr.mxu0 0.0
      %4000 = vmatpush1.msra.mxu0 %v3941
      %4001 = vmatprep.subr.mxu0 0.0
      %4002 = vmatpush1.msra.mxu0 %v3942
      %4003 = vmatprep.subr.mxu0 0.0
      %4004 = vmatpush1.msra.mxu0 %v3943
      %4005 = vmatprep.subr.mxu0 0.0
      %4006 = vmatpush1.msra.mxu0 %v3944
      %4007 = vmatprep.subr.mxu0 0.0
      %4008 = vmatpush1.msra.mxu0 %v3945
      %4009 = vmatprep.subr.mxu0 0.0
      %4010 = vmatpush1.msra.mxu0 %v3946
      %4011 = vmatprep.mubr.f32.mxu0 %v3420
      %4012 = vmatmul.mubr.f32.gmra.mrb[0].mxu0 %v3418
      %v4013 = vpop.f32.mrb[0].mxu0
      %v4014 = vadd.f32 0.0, %v4013
      %v4015 = vpop.f32.mrb[0].mxu0
      %4016 = vmatprep.mubr.f32.mxu0 %v3426
      %4017 = vmatmul.mubr.f32.gmra.mrb[0].mxu0 %v3424
      %v4018 = vpop.f32.mrb[0].mxu0
      %v4019 = vadd.f32 0.0, %v4018
      %v4020 = vpop.f32.mrb[0].mxu0
      %4021 = vmatprep.mubr.f32.mxu0 %v3432
      %4022 = vmatmul.mubr.f32.gmra.mrb[0].mxu0 %v3430
      %v4023 = vpop.f32.mrb[0].mxu0
      %v4024 = vadd.f32 0.0, %v4023
      %v4025 = vpop.f32.mrb[0].mxu0
      %4026 = vmatprep.mubr.f32.mxu0 %v3438
      %4027 = vmatmul.mubr.f32.gmra.mrb[0].mxu0 %v3436
      %v4028 = vpop.f32.mrb[0].mxu0
      %v4029 = vadd.f32 0.0, %v4028
      %v4030 = vpop.f32.mrb[0].mxu0
      %4031 = vmatprep.mubr.f32.mxu0 %v3444
      %4032 = vmatmul.mubr.f32.gmra.mrb[0].mxu0 %v3442
      %v4033 = vpop.f32.mrb[0].mxu0
      %v4034 = vadd.f32 0.0, %v4033
      %v4035 = vpop.f32.mrb[0].mxu0
      %4036 = vmatprep.mubr.f32.mxu0 %v3450
      %4037 = vmatmul.mubr.f32.gmra.mrb[0].mxu0 %v3448
      %v4038 = vpop.f32.mrb[0].mxu0
      %v4039 = vadd.f32 0.0, %v4038
      %v4040 = vpop.f32.mrb[0].mxu0
      %4041 = vmatprep.mubr.f32.mxu0 %v3456
      %4042 = vmatmul.mubr.f32.gmra.mrb[0].mxu0 %v3454
      %v4043 = vpop.f32.mrb[0].mxu0
      %v4044 = vadd.f32 0.0, %v4043
      %v4045 = vpop.f32.mrb[0].mxu0
      %4046 = vmatprep.mubr.f32.mxu0 %v3462
      %4047 = vmatmul.mubr.f32.gmra.mrb[0].mxu0 %v3460
      %v4048 = vpop.f32.mrb[0].mxu0
      %v4049 = vadd.f32 0.0, %v4048
      %v4050 = vpop.f32.mrb[0].mxu0
      %4051 = vdwg.mxu0
      %v4052 = vadd.f32 %v3906, %v4014
      %v4053 = vadd.f32 %v3907, %v4019
      %v4054 = vadd.f32 %v3908, %v4024
      %v4055 = vadd.f32 %v3909, %v4029
      %v4056 = vadd.f32 %v3910, %v4034
      %v4057 = vadd.f32 %v3911, %v4039
      %v4058 = vadd.f32 %v3912, %v4044
      %v4059 = vadd.f32 %v3913, %v4049
      %s4060 = scalar_lea.vmem %s4, 1024
      %v4061 = vld [vmem:[%s4060] sm:$0xff]
      %v4062 = vld [vmem:[%s4060 + $0x8] sm:$0xff]
      %v4063 = vld [vmem:[%s4060 + $0x10] sm:$0xff]
      %v4064 = vld [vmem:[%s4060 + $0x18] sm:$0xff]
      %v4065 = vld [vmem:[%s4060 + $0x20] sm:$0xff]
      %v4066 = vld [vmem:[%s4060 + $0x28] sm:$0xff]
      %v4067 = vld [vmem:[%s4060 + $0x30] sm:$0xff]
      %v4068 = vld [vmem:[%s4060 + $0x38] sm:$0xff]
      %v4069 = vld [vmem:[%s4060 + $0x40] sm:$0xff]
      %v4070 = vld [vmem:[%s4060 + $0x48] sm:$0xff]
      %v4071 = vld [vmem:[%s4060 + $0x50] sm:$0xff]
      %v4072 = vld [vmem:[%s4060 + $0x58] sm:$0xff]
      %v4073 = vld [vmem:[%s4060 + $0x60] sm:$0xff]
      %v4074 = vld [vmem:[%s4060 + $0x68] sm:$0xff]
      %v4075 = vld [vmem:[%s4060 + $0x70] sm:$0xff]
      %v4076 = vld [vmem:[%s4060 + $0x78] sm:$0xff]
      %v4077 = vld [vmem:[%s4060 + $0x80] sm:$0xff]
      %v4078 = vld [vmem:[%s4060 + $0x88] sm:$0xff]
      %v4079 = vld [vmem:[%s4060 + $0x90] sm:$0xff]
      %v4080 = vld [vmem:[%s4060 + $0x98] sm:$0xff]
      %v4081 = vld [vmem:[%s4060 + $0xa0] sm:$0xff]
      %v4082 = vld [vmem:[%s4060 + $0xa8] sm:$0xff]
      %v4083 = vld [vmem:[%s4060 + $0xb0] sm:$0xff]
      %v4084 = vld [vmem:[%s4060 + $0xb8] sm:$0xff]
      %v4085 = vld [vmem:[%s4060 + $0xc0] sm:$0xff]
      %v4086 = vld [vmem:[%s4060 + $0xc8] sm:$0xff]
      %v4087 = vld [vmem:[%s4060 + $0xd0] sm:$0xff]
      %v4088 = vld [vmem:[%s4060 + $0xd8] sm:$0xff]
      %v4089 = vld [vmem:[%s4060 + $0xe0] sm:$0xff]
      %v4090 = vld [vmem:[%s4060 + $0xe8] sm:$0xff]
      %v4091 = vld [vmem:[%s4060 + $0xf0] sm:$0xff]
      %v4092 = vld [vmem:[%s4060 + $0xf8] sm:$0xff]
      %4093 = vmatprep.subr.mxu0 0.0
      %4094 = vmatpush1.msra.mxu0 %v4061
      %4095 = vmatprep.subr.mxu0 0.0
      %4096 = vmatpush1.msra.mxu0 %v4062
      %4097 = vmatprep.subr.mxu0 0.0
      %4098 = vmatpush1.msra.mxu0 %v4063
      %4099 = vmatprep.subr.mxu0 0.0
      %4100 = vmatpush1.msra.mxu0 %v4064
      %4101 = vmatprep.subr.mxu0 0.0
      %4102 = vmatpush1.msra.mxu0 %v4065
      %4103 = vmatprep.subr.mxu0 0.0
      %4104 = vmatpush1.msra.mxu0 %v4066
      %4105 = vmatprep.subr.mxu0 0.0
      %4106 = vmatpush1.msra.mxu0 %v4067
      %4107 = vmatprep.subr.mxu0 0.0
      %4108 = vmatpush1.msra.mxu0 %v4068
      %4109 = vmatprep.subr.mxu0 0.0
      %4110 = vmatpush1.msra.mxu0 %v4069
      %4111 = vmatprep.subr.mxu0 0.0
      %4112 = vmatpush1.msra.mxu0 %v4070
      %4113 = vmatprep.subr.mxu0 0.0
      %4114 = vmatpush1.msra.mxu0 %v4071
      %4115 = vmatprep.subr.mxu0 0.0
      %4116 = vmatpush1.msra.mxu0 %v4072
      %4117 = vmatprep.subr.mxu0 0.0
      %4118 = vmatpush1.msra.mxu0 %v4073
      %4119 = vmatprep.subr.mxu0 0.0
      %4120 = vmatpush1.msra.mxu0 %v4074
      %4121 = vmatprep.subr.mxu0 0.0
      %4122 = vmatpush1.msra.mxu0 %v4075
      %4123 = vmatprep.subr.mxu0 0.0
      %4124 = vmatpush1.msra.mxu0 %v4076
      %4125 = vmatprep.subr.mxu0 0.0
      %4126 = vmatpush1.msra.mxu0 %v4077
      %4127 = vmatprep.subr.mxu0 0.0
      %4128 = vmatpush1.msra.mxu0 %v4078
      %4129 = vmatprep.subr.mxu0 0.0
      %4130 = vmatpush1.msra.mxu0 %v4079
      %4131 = vmatprep.subr.mxu0 0.0
      %4132 = vmatpush1.msra.mxu0 %v4080
      %4133 = vmatprep.subr.mxu0 0.0
      %4134 = vmatpush1.msra.mxu0 %v4081
      %4135 = vmatprep.subr.mxu0 0.0
      %4136 = vmatpush1.msra.mxu0 %v4082
      %4137 = vmatprep.subr.mxu0 0.0
      %4138 = vmatpush1.msra.mxu0 %v4083
      %4139 = vmatprep.subr.mxu0 0.0
      %4140 = vmatpush1.msra.mxu0 %v4084
      %4141 = vmatprep.subr.mxu0 0.0
      %4142 = vmatpush1.msra.mxu0 %v4085
      %4143 = vmatprep.subr.mxu0 0.0
      %4144 = vmatpush1.msra.mxu0 %v4086
      %4145 = vmatprep.subr.mxu0 0.0
      %4146 = vmatpush1.msra.mxu0 %v4087
      %4147 = vmatprep.subr.mxu0 0.0
      %4148 = vmatpush1.msra.mxu0 %v4088
      %4149 = vmatprep.subr.mxu0 0.0
      %4150 = vmatpush1.msra.mxu0 %v4089
      %4151 = vmatprep.subr.mxu0 0.0
      %4152 = vmatpush1.msra.mxu0 %v4090
      %4153 = vmatprep.subr.mxu0 0.0
      %4154 = vmatpush1.msra.mxu0 %v4091
      %4155 = vmatprep.subr.mxu0 0.0
      %4156 = vmatpush1.msra.mxu0 %v4092
      %4157 = vmatprep.mubr.f32.mxu0 %v3426
      %4158 = vmatmul.mubr.f32.gmra.mrb[0].mxu0 %v3424
      %v4159 = vpop.f32.mrb[0].mxu0
      %v4160 = vadd.f32 0.0, %v4159
      %v4161 = vpop.f32.mrb[0].mxu0
      %4162 = vmatprep.mubr.f32.mxu0 %v3432
      %4163 = vmatmul.mubr.f32.gmra.mrb[0].mxu0 %v3430
      %v4164 = vpop.f32.mrb[0].mxu0
      %v4165 = vadd.f32 0.0, %v4164
      %v4166 = vpop.f32.mrb[0].mxu0
      %4167 = vmatprep.mubr.f32.mxu0 %v3438
      %4168 = vmatmul.mubr.f32.gmra.mrb[0].mxu0 %v3436
      %v4169 = vpop.f32.mrb[0].mxu0
      %v4170 = vadd.f32 0.0, %v4169
      %v4171 = vpop.f32.mrb[0].mxu0
      %4172 = vmatprep.mubr.f32.mxu0 %v3444
      %4173 = vmatmul.mubr.f32.gmra.mrb[0].mxu0 %v3442
      %v4174 = vpop.f32.mrb[0].mxu0
      %v4175 = vadd.f32 0.0, %v4174
      %v4176 = vpop.f32.mrb[0].mxu0
      %4177 = vmatprep.mubr.f32.mxu0 %v3450
      %4178 = vmatmul.mubr.f32.gmra.mrb[0].mxu0 %v3448
      %v4179 = vpop.f32.mrb[0].mxu0
      %v4180 = vadd.f32 0.0, %v4179
      %v4181 = vpop.f32.mrb[0].mxu0
      %4182 = vmatprep.mubr.f32.mxu0 %v3456
      %4183 = vmatmul.mubr.f32.gmra.mrb[0].mxu0 %v3454
      %v4184 = vpop.f32.mrb[0].mxu0
      %v4185 = vadd.f32 0.0, %v4184
      %v4186 = vpop.f32.mrb[0].mxu0
      %4187 = vmatprep.mubr.f32.mxu0 %v3462
      %4188 = vmatmul.mubr.f32.gmra.mrb[0].mxu0 %v3460
      %v4189 = vpop.f32.mrb[0].mxu0
      %v4190 = vadd.f32 0.0, %v4189
      %v4191 = vpop.f32.mrb[0].mxu0
      %4192 = vmatprep.mubr.f32.mxu0 %v3468
      %4193 = vmatmul.mubr.f32.gmra.mrb[0].mxu0 %v3466
      %v4194 = vpop.f32.mrb[0].mxu0
      %v4195 = vadd.f32 0.0, %v4194
      %v4196 = vpop.f32.mrb[0].mxu0
      %4197 = vdwg.mxu0
      %v4198 = vadd.f32 %v4052, %v4160
      %v4199 = vadd.f32 %v4053, %v4165
      %v4200 = vadd.f32 %v4054, %v4170
      %v4201 = vadd.f32 %v4055, %v4175
      %v4202 = vadd.f32 %v4056, %v4180
      %v4203 = vadd.f32 %v4057, %v4185
      %v4204 = vadd.f32 %v4058, %v4190
      %v4205 = vadd.f32 %v4059, %v4195
      %v4206 = vmul.f32 %v4198, 0.5
      %v4207 = vmul.f32 %v4199, 0.5
      %v4208 = vmul.f32 %v4200, 0.5
      %v4209 = vmul.f32 %v4201, 0.5
      %v4210 = vmul.f32 %v4202, 0.5
      %v4211 = vmul.f32 %v4203, 0.5
      %v4212 = vmul.f32 %v4204, 0.5
      %v4213 = vmul.f32 %v4205, 0.5
      %v4214 = vtanh.pop %v4206
      %v4215 = vtanh.pop %v4207
      %v4216 = vtanh.pop %v4208
      %v4217 = vtanh.pop %v4209
      %v4218 = vtanh.pop %v4210
      %v4219 = vtanh.pop %v4211
      %v4220 = vtanh.pop %v4212
      %v4221 = vtanh.pop %v4213
      %v4222 = vadd.f32 %v4214, 1.0
      %v4223 = vadd.f32 %v4215, 1.0
      %v4224 = vadd.f32 %v4216, 1.0
      %v4225 = vadd.f32 %v4217, 1.0
      %v4226 = vadd.f32 %v4218, 1.0
      %v4227 = vadd.f32 %v4219, 1.0
      %v4228 = vadd.f32 %v4220, 1.0
      %v4229 = vadd.f32 %v4221, 1.0
      %v4230 = vmul.f32 %v4222, 0.5
      %v4231 = vmul.f32 %v4223, 0.5
      %v4232 = vmul.f32 %v4224, 0.5
      %v4233 = vmul.f32 %v4225, 0.5
      %v4234 = vmul.f32 %v4226, 0.5
      %v4235 = vmul.f32 %v4227, 0.5
      %v4236 = vmul.f32 %v4228, 0.5
      %v4237 = vmul.f32 %v4229, 0.5
      %v4238 = vmax.f32 %v4230, %v4237
      %v4239 = vmax.f32 %v4231, %v4230
      %v4240 = vmax.f32 %v4232, %v4231
      %v4241 = vmax.f32 %v4233, %v4232
      %v4242 = vmax.f32 %v4234, %v4233
      %v4243 = vmax.f32 %v4235, %v4234
      %v4244 = vmax.f32 %v4236, %v4235
      %v4245 = vmax.f32 %v4237, %v4236
      %4246 = vrot.lane.b32.xlu0 %v4238, 1
      %v4247 = vpop.permute.xlu0 %4246
      %4248 = vrot.lane.b32.xlu0 %v4239, 1
      %v4249 = vpop.permute.xlu0 %4248
      %4250 = vrot.lane.b32.xlu0 %v4240, 1
      %v4251 = vpop.permute.xlu0 %4250
      %4252 = vrot.lane.b32.xlu0 %v4241, 1
      %v4253 = vpop.permute.xlu0 %4252
      %4254 = vrot.lane.b32.xlu0 %v4242, 1
      %v4255 = vpop.permute.xlu0 %4254
      %4256 = vrot.lane.b32.xlu0 %v4243, 1
      %v4257 = vpop.permute.xlu0 %4256
      %4258 = vrot.lane.b32.xlu0 %v4244, 1
      %v4259 = vpop.permute.xlu0 %4258
      %4260 = vrot.lane.b32.xlu0 %v4245, 1
      %v4261 = vpop.permute.xlu0 %4260
      %v4262 = vmax.f32 %v4238, %v4247
      %v4263 = vmax.f32 %v4239, %v4249
      %v4264 = vmax.f32 %v4240, %v4251
      %v4265 = vmax.f32 %v4241, %v4253
      %v4266 = vmax.f32 %v4242, %v4255
      %v4267 = vmax.f32 %v4243, %v4257
      %v4268 = vmax.f32 %v4244, %v4259
      %v4269 = vmax.f32 %v4245, %v4261
      %v4270 = vld [vmem:[%s6] sm:$0xff]
      %v4271 = vld [vmem:[%s6 + $0x8] sm:$0xff]
      %v4272 = vld [vmem:[%s6 + $0x10] sm:$0xff]
      %v4273 = vld [vmem:[%s6 + $0x18] sm:$0xff]
      %vm4274 = vcmask 523264
      %v4276 = vsel %vm4274, %v4270, 0
      %v4279 = vsel %vm4274, %v4271, 0
      %v4282 = vsel %vm4274, %v4272, 0
      %v4285 = vsel %vm4274, %v4273, 0
      %4287 = vmatprep.subr.mxu0 0.0
      %4288 = vmatpush1.msra.mxu0 %v4262
      %4289 = vmatprep.subr.mxu0 0.0
      %4290 = vmatpush1.msra.mxu0 %v4263
      %4291 = vmatprep.subr.mxu0 0.0
      %4292 = vmatpush1.msra.mxu0 %v4264
      %4293 = vmatprep.subr.mxu0 0.0
      %4294 = vmatpush1.msra.mxu0 %v4265
      %4295 = vmatprep.subr.mxu0 0.0
      %4296 = vmatpush1.msra.mxu0 %v4266
      %4297 = vmatprep.subr.mxu0 0.0
      %4298 = vmatpush1.msra.mxu0 %v4267
      %4299 = vmatprep.subr.mxu0 0.0
      %4300 = vmatpush1.msra.mxu0 %v4268
      %4301 = vmatprep.subr.mxu0 0.0
      %4302 = vmatpush1.msra.mxu0 %v4269
      %4303 = vmatprep.subr.mxu0 0.0
      %4304 = vmatpush1.msra.mxu0 0.0
      %4305 = vmatprep.subr.mxu0 0.0
      %4306 = vmatpush1.msra.mxu0 0.0
      %4307 = vmatprep.subr.mxu0 0.0
      %4308 = vmatpush1.msra.mxu0 0.0
      %4309 = vmatprep.subr.mxu0 0.0
      %4310 = vmatpush1.msra.mxu0 0.0
      %4311 = vmatprep.subr.mxu0 0.0
      %4312 = vmatpush1.msra.mxu0 0.0
      %4313 = vmatprep.subr.mxu0 0.0
      %4314 = vmatpush1.msra.mxu0 0.0
      %4315 = vmatprep.subr.mxu0 0.0
      %4316 = vmatpush1.msra.mxu0 0.0
      %4317 = vmatprep.subr.mxu0 0.0
      %4318 = vmatpush1.msra.mxu0 0.0
      %4319 = vmatprep.subr.mxu0 0.0
      %4320 = vmatpush1.msra.mxu0 0.0
      %4321 = vmatprep.subr.mxu0 0.0
      %4322 = vmatpush1.msra.mxu0 0.0
      %4323 = vmatprep.subr.mxu0 0.0
      %4324 = vmatpush1.msra.mxu0 0.0
      %4325 = vmatprep.subr.mxu0 0.0
      %4326 = vmatpush1.msra.mxu0 0.0
      %4327 = vmatprep.subr.mxu0 0.0
      %4328 = vmatpush1.msra.mxu0 0.0
      %4329 = vmatprep.subr.mxu0 0.0
      %4330 = vmatpush1.msra.mxu0 0.0
      %4331 = vmatprep.subr.mxu0 0.0
      %4332 = vmatpush1.msra.mxu0 0.0
      %4333 = vmatprep.subr.mxu0 0.0
      %4334 = vmatpush1.msra.mxu0 0.0
      %4335 = vmatprep.subr.mxu0 0.0
      %4336 = vmatpush1.msra.mxu0 0.0
      %4337 = vmatprep.subr.mxu0 0.0
      %4338 = vmatpush1.msra.mxu0 0.0
      %4339 = vmatprep.subr.mxu0 0.0
      %4340 = vmatpush1.msra.mxu0 0.0
      %4341 = vmatprep.subr.mxu0 0.0
      %4342 = vmatpush1.msra.mxu0 0.0
      %4343 = vmatprep.subr.mxu0 0.0
      %4344 = vmatpush1.msra.mxu0 0.0
      %4345 = vmatprep.subr.mxu0 0.0
      %4346 = vmatpush1.msra.mxu0 0.0
      %4347 = vmatprep.subr.mxu0 0.0
      %4348 = vmatpush1.msra.mxu0 0.0
      %4349 = vmatprep.subr.mxu0 0.0
      %4350 = vmatpush1.msra.mxu0 0.0
      %4351 = vmatprep.mubr.f32.mxu0 0.0
      %4352 = vmatmul.mubr.f32.gmra.mrb[0].mxu0 %v4276
      %v4353 = vpop.f32.mrb[0].mxu0
      %v4354 = vadd.f32 0.0, %v4353
      %v4355 = vpop.f32.mrb[0].mxu0
      %4356 = vmatprep.mubr.f32.mxu0 0.0
      %4357 = vmatmul.mubr.f32.gmra.mrb[0].mxu0 %v4279
      %v4358 = vpop.f32.mrb[0].mxu0
      %v4359 = vadd.f32 0.0, %v4358
      %v4360 = vpop.f32.mrb[0].mxu0
      %4361 = vmatprep.mubr.f32.mxu0 0.0
      %4362 = vmatmul.mubr.f32.gmra.mrb[0].mxu0 %v4282
      %v4363 = vpop.f32.mrb[0].mxu0
      %v4364 = vadd.f32 0.0, %v4363
      %v4365 = vpop.f32.mrb[0].mxu0
      %4366 = vmatprep.mubr.f32.mxu0 0.0
      %4367 = vmatmul.mubr.f32.gmra.mrb[0].mxu0 %v4285
      %v4368 = vpop.f32.mrb[0].mxu0
      %v4369 = vadd.f32 0.0, %v4368
      %v4370 = vpop.f32.mrb[0].mxu0
      %4371 = vdwg.mxu0
      %v4372 = vld [vmem:[%s8] sm:$0x1]
      %v4374 = vlaneseq
      %v4375 = vshrl.u32 %v4374, 7
      %v4376 = vsub.s32 0, %v4375
      %v4377 = vrot.slane %v4372, %v4376
      %v4379 = vld [vmem:[%s7] sm:$0xff]
      %v4380 = vld [vmem:[%s7 + $0x8] sm:$0xff]
      %v4381 = vld [vmem:[%s7 + $0x10] sm:$0xff]
      %v4382 = vld [vmem:[%s7 + $0x18] sm:$0xff]
      %v4383 = vld [vmem:[%s7 + $0x20] sm:$0xff]
      %v4384 = vld [vmem:[%s7 + $0x28] sm:$0xff]
      %v4385 = vld [vmem:[%s7 + $0x30] sm:$0xff]
      %v4386 = vld [vmem:[%s7 + $0x38] sm:$0xff]
      %v4387 = vld [vmem:[%s7 + $0x40] sm:$0xff]
      %v4388 = vld [vmem:[%s7 + $0x48] sm:$0xff]
      %v4389 = vld [vmem:[%s7 + $0x50] sm:$0xff]
      %v4390 = vld [vmem:[%s7 + $0x58] sm:$0xff]
      %v4391 = vld [vmem:[%s7 + $0x60] sm:$0xff]
      %v4392 = vld [vmem:[%s7 + $0x68] sm:$0xff]
      %v4393 = vld [vmem:[%s7 + $0x70] sm:$0xff]
      %v4394 = vld [vmem:[%s7 + $0x78] sm:$0xff]
      %4395 = vmatprep.subr.mxu0 0.0
      %4396 = vmatpush1.msra.mxu0 %v4379
      %4397 = vmatprep.subr.mxu0 0.0
      %4398 = vmatpush1.msra.mxu0 %v4380
      %4399 = vmatprep.subr.mxu0 0.0
      %4400 = vmatpush1.msra.mxu0 %v4381
      %4401 = vmatprep.subr.mxu0 0.0
      %4402 = vmatpush1.msra.mxu0 %v4382
      %4403 = vmatprep.subr.mxu0 0.0
      %4404 = vmatpush1.msra.mxu0 %v4383
      %4405 = vmatprep.subr.mxu0 0.0
      %4406 = vmatpush1.msra.mxu0 %v4384
      %4407 = vmatprep.subr.mxu0 0.0
      %4408 = vmatpush1.msra.mxu0 %v4385
      %4409 = vmatprep.subr.mxu0 0.0
      %4410 = vmatpush1.msra.mxu0 %v4386
      %4411 = vmatprep.subr.mxu0 0.0
      %4412 = vmatpush1.msra.mxu0 %v4387
      %4413 = vmatprep.subr.mxu0 0.0
      %4414 = vmatpush1.msra.mxu0 %v4388
      %4415 = vmatprep.subr.mxu0 0.0
      %4416 = vmatpush1.msra.mxu0 %v4389
      %4417 = vmatprep.subr.mxu0 0.0
      %4418 = vmatpush1.msra.mxu0 %v4390
      %4419 = vmatprep.subr.mxu0 0.0
      %4420 = vmatpush1.msra.mxu0 %v4391
      %4421 = vmatprep.subr.mxu0 0.0
      %4422 = vmatpush1.msra.mxu0 %v4392
      %4423 = vmatprep.subr.mxu0 0.0
      %4424 = vmatpush1.msra.mxu0 %v4393
      %4425 = vmatprep.subr.mxu0 0.0
      %4426 = vmatpush1.msra.mxu0 %v4394
      %4427 = vmatprep.subr.mxu0 0.0
      %4428 = vmatpush1.msra.mxu0 0.0
      %4429 = vmatprep.subr.mxu0 0.0
      %4430 = vmatpush1.msra.mxu0 0.0
      %4431 = vmatprep.subr.mxu0 0.0
      %4432 = vmatpush1.msra.mxu0 0.0
      %4433 = vmatprep.subr.mxu0 0.0
      %4434 = vmatpush1.msra.mxu0 0.0
      %4435 = vmatprep.subr.mxu0 0.0
      %4436 = vmatpush1.msra.mxu0 0.0
      %4437 = vmatprep.subr.mxu0 0.0
      %4438 = vmatpush1.msra.mxu0 0.0
      %4439 = vmatprep.subr.mxu0 0.0
      %4440 = vmatpush1.msra.mxu0 0.0
      %4441 = vmatprep.subr.mxu0 0.0
      %4442 = vmatpush1.msra.mxu0 0.0
      %4443 = vmatprep.subr.mxu0 0.0
      %4444 = vmatpush1.msra.mxu0 0.0
      %4445 = vmatprep.subr.mxu0 0.0
      %4446 = vmatpush1.msra.mxu0 0.0
      %4447 = vmatprep.subr.mxu0 0.0
      %4448 = vmatpush1.msra.mxu0 0.0
      %4449 = vmatprep.subr.mxu0 0.0
      %4450 = vmatpush1.msra.mxu0 0.0
      %4451 = vmatprep.subr.mxu0 0.0
      %4452 = vmatpush1.msra.mxu0 0.0
      %4453 = vmatprep.subr.mxu0 0.0
      %4454 = vmatpush1.msra.mxu0 0.0
      %4455 = vmatprep.subr.mxu0 0.0
      %4456 = vmatpush1.msra.mxu0 0.0
      %4457 = vmatprep.subr.mxu0 0.0
      %4458 = vmatpush1.msra.mxu0 0.0
      %4459 = vmatprep.mubr.f32.mxu0 0.0
      %4460 = vmatmul.mubr.f32.gmra.mrb[0].mxu0 %v4354
      %v4461 = vpop.f32.mrb[0].mxu0
      %v4462 = vadd.f32 0.0, %v4461
      %v4463 = vpop.f32.mrb[0].mxu0
      %4464 = vdwg.mxu0
      %v4465 = vadd.f32 %v4377, %v4462
      %s4466 = scalar_lea.vmem %s7, 128
      %v4467 = vld [vmem:[%s4466] sm:$0xff]
      %v4468 = vld [vmem:[%s4466 + $0x8] sm:$0xff]
      %v4469 = vld [vmem:[%s4466 + $0x10] sm:$0xff]
      %v4470 = vld [vmem:[%s4466 + $0x18] sm:$0xff]
      %v4471 = vld [vmem:[%s4466 + $0x20] sm:$0xff]
      %v4472 = vld [vmem:[%s4466 + $0x28] sm:$0xff]
      %v4473 = vld [vmem:[%s4466 + $0x30] sm:$0xff]
      %v4474 = vld [vmem:[%s4466 + $0x38] sm:$0xff]
      %v4475 = vld [vmem:[%s4466 + $0x40] sm:$0xff]
      %v4476 = vld [vmem:[%s4466 + $0x48] sm:$0xff]
      %v4477 = vld [vmem:[%s4466 + $0x50] sm:$0xff]
      %v4478 = vld [vmem:[%s4466 + $0x58] sm:$0xff]
      %v4479 = vld [vmem:[%s4466 + $0x60] sm:$0xff]
      %v4480 = vld [vmem:[%s4466 + $0x68] sm:$0xff]
      %v4481 = vld [vmem:[%s4466 + $0x70] sm:$0xff]
      %v4482 = vld [vmem:[%s4466 + $0x78] sm:$0xff]
      %4483 = vmatprep.subr.mxu0 0.0
      %4484 = vmatpush1.msra.mxu0 %v4467
      %4485 = vmatprep.subr.mxu0 0.0
      %4486 = vmatpush1.msra.mxu0 %v4468
      %4487 = vmatprep.subr.mxu0 0.0
      %4488 = vmatpush1.msra.mxu0 %v4469
      %4489 = vmatprep.subr.mxu0 0.0
      %4490 = vmatpush1.msra.mxu0 %v4470
      %4491 = vmatprep.subr.mxu0 0.0
      %4492 = vmatpush1.msra.mxu0 %v4471
      %4493 = vmatprep.subr.mxu0 0.0
      %4494 = vmatpush1.msra.mxu0 %v4472
      %4495 = vmatprep.subr.mxu0 0.0
      %4496 = vmatpush1.msra.mxu0 %v4473
      %4497 = vmatprep.subr.mxu0 0.0
      %4498 = vmatpush1.msra.mxu0 %v4474
      %4499 = vmatprep.subr.mxu0 0.0
      %4500 = vmatpush1.msra.mxu0 %v4475
      %4501 = vmatprep.subr.mxu0 0.0
      %4502 = vmatpush1.msra.mxu0 %v4476
      %4503 = vmatprep.subr.mxu0 0.0
      %4504 = vmatpush1.msra.mxu0 %v4477
      %4505 = vmatprep.subr.mxu0 0.0
      %4506 = vmatpush1.msra.mxu0 %v4478
      %4507 = vmatprep.subr.mxu0 0.0
      %4508 = vmatpush1.msra.mxu0 %v4479
      %4509 = vmatprep.subr.mxu0 0.0
      %4510 = vmatpush1.msra.mxu0 %v4480
      %4511 = vmatprep.subr.mxu0 0.0
      %4512 = vmatpush1.msra.mxu0 %v4481
      %4513 = vmatprep.subr.mxu0 0.0
      %4514 = vmatpush1.msra.mxu0 %v4482
      %4515 = vmatprep.subr.mxu0 0.0
      %4516 = vmatpush1.msra.mxu0 0.0
      %4517 = vmatprep.subr.mxu0 0.0
      %4518 = vmatpush1.msra.mxu0 0.0
      %4519 = vmatprep.subr.mxu0 0.0
      %4520 = vmatpush1.msra.mxu0 0.0
      %4521 = vmatprep.subr.mxu0 0.0
      %4522 = vmatpush1.msra.mxu0 0.0
      %4523 = vmatprep.subr.mxu0 0.0
      %4524 = vmatpush1.msra.mxu0 0.0
      %4525 = vmatprep.subr.mxu0 0.0
      %4526 = vmatpush1.msra.mxu0 0.0
      %4527 = vmatprep.subr.mxu0 0.0
      %4528 = vmatpush1.msra.mxu0 0.0
      %4529 = vmatprep.subr.mxu0 0.0
      %4530 = vmatpush1.msra.mxu0 0.0
      %4531 = vmatprep.subr.mxu0 0.0
      %4532 = vmatpush1.msra.mxu0 0.0
      %4533 = vmatprep.subr.mxu0 0.0
      %4534 = vmatpush1.msra.mxu0 0.0
      %4535 = vmatprep.subr.mxu0 0.0
      %4536 = vmatpush1.msra.mxu0 0.0
      %4537 = vmatprep.subr.mxu0 0.0
      %4538 = vmatpush1.msra.mxu0 0.0
      %4539 = vmatprep.subr.mxu0 0.0
      %4540 = vmatpush1.msra.mxu0 0.0
      %4541 = vmatprep.subr.mxu0 0.0
      %4542 = vmatpush1.msra.mxu0 0.0
      %4543 = vmatprep.subr.mxu0 0.0
      %4544 = vmatpush1.msra.mxu0 0.0
      %4545 = vmatprep.subr.mxu0 0.0
      %4546 = vmatpush1.msra.mxu0 0.0
      %4547 = vmatprep.mubr.f32.mxu0 0.0
      %4548 = vmatmul.mubr.f32.gmra.mrb[0].mxu0 %v4359
      %v4549 = vpop.f32.mrb[0].mxu0
      %v4550 = vadd.f32 0.0, %v4549
      %v4551 = vpop.f32.mrb[0].mxu0
      %4552 = vdwg.mxu0
      %v4553 = vadd.f32 %v4465, %v4550
      %s4554 = scalar_lea.vmem %s7, 256
      %v4555 = vld [vmem:[%s4554] sm:$0xff]
      %v4556 = vld [vmem:[%s4554 + $0x8] sm:$0xff]
      %v4557 = vld [vmem:[%s4554 + $0x10] sm:$0xff]
      %v4558 = vld [vmem:[%s4554 + $0x18] sm:$0xff]
      %v4559 = vld [vmem:[%s4554 + $0x20] sm:$0xff]
      %v4560 = vld [vmem:[%s4554 + $0x28] sm:$0xff]
      %v4561 = vld [vmem:[%s4554 + $0x30] sm:$0xff]
      %v4562 = vld [vmem:[%s4554 + $0x38] sm:$0xff]
      %v4563 = vld [vmem:[%s4554 + $0x40] sm:$0xff]
      %v4564 = vld [vmem:[%s4554 + $0x48] sm:$0xff]
      %v4565 = vld [vmem:[%s4554 + $0x50] sm:$0xff]
      %v4566 = vld [vmem:[%s4554 + $0x58] sm:$0xff]
      %v4567 = vld [vmem:[%s4554 + $0x60] sm:$0xff]
      %v4568 = vld [vmem:[%s4554 + $0x68] sm:$0xff]
      %v4569 = vld [vmem:[%s4554 + $0x70] sm:$0xff]
      %v4570 = vld [vmem:[%s4554 + $0x78] sm:$0xff]
      %4571 = vmatprep.subr.mxu0 0.0
      %4572 = vmatpush1.msra.mxu0 %v4555
      %4573 = vmatprep.subr.mxu0 0.0
      %4574 = vmatpush1.msra.mxu0 %v4556
      %4575 = vmatprep.subr.mxu0 0.0
      %4576 = vmatpush1.msra.mxu0 %v4557
      %4577 = vmatprep.subr.mxu0 0.0
      %4578 = vmatpush1.msra.mxu0 %v4558
      %4579 = vmatprep.subr.mxu0 0.0
      %4580 = vmatpush1.msra.mxu0 %v4559
      %4581 = vmatprep.subr.mxu0 0.0
      %4582 = vmatpush1.msra.mxu0 %v4560
      %4583 = vmatprep.subr.mxu0 0.0
      %4584 = vmatpush1.msra.mxu0 %v4561
      %4585 = vmatprep.subr.mxu0 0.0
      %4586 = vmatpush1.msra.mxu0 %v4562
      %4587 = vmatprep.subr.mxu0 0.0
      %4588 = vmatpush1.msra.mxu0 %v4563
      %4589 = vmatprep.subr.mxu0 0.0
      %4590 = vmatpush1.msra.mxu0 %v4564
      %4591 = vmatprep.subr.mxu0 0.0
      %4592 = vmatpush1.msra.mxu0 %v4565
      %4593 = vmatprep.subr.mxu0 0.0
      %4594 = vmatpush1.msra.mxu0 %v4566
      %4595 = vmatprep.subr.mxu0 0.0
      %4596 = vmatpush1.msra.mxu0 %v4567
      %4597 = vmatprep.subr.mxu0 0.0
      %4598 = vmatpush1.msra.mxu0 %v4568
      %4599 = vmatprep.subr.mxu0 0.0
      %4600 = vmatpush1.msra.mxu0 %v4569
      %4601 = vmatprep.subr.mxu0 0.0
      %4602 = vmatpush1.msra.mxu0 %v4570
      %4603 = vmatprep.subr.mxu0 0.0
      %4604 = vmatpush1.msra.mxu0 0.0
      %4605 = vmatprep.subr.mxu0 0.0
      %4606 = vmatpush1.msra.mxu0 0.0
      %4607 = vmatprep.subr.mxu0 0.0
      %4608 = vmatpush1.msra.mxu0 0.0
      %4609 = vmatprep.subr.mxu0 0.0
      %4610 = vmatpush1.msra.mxu0 0.0
      %4611 = vmatprep.subr.mxu0 0.0
      %4612 = vmatpush1.msra.mxu0 0.0
      %4613 = vmatprep.subr.mxu0 0.0
      %4614 = vmatpush1.msra.mxu0 0.0
      %4615 = vmatprep.subr.mxu0 0.0
      %4616 = vmatpush1.msra.mxu0 0.0
      %4617 = vmatprep.subr.mxu0 0.0
      %4618 = vmatpush1.msra.mxu0 0.0
      %4619 = vmatprep.subr.mxu0 0.0
      %4620 = vmatpush1.msra.mxu0 0.0
      %4621 = vmatprep.subr.mxu0 0.0
      %4622 = vmatpush1.msra.mxu0 0.0
      %4623 = vmatprep.subr.mxu0 0.0
      %4624 = vmatpush1.msra.mxu0 0.0
      %4625 = vmatprep.subr.mxu0 0.0
      %4626 = vmatpush1.msra.mxu0 0.0
      %4627 = vmatprep.subr.mxu0 0.0
      %4628 = vmatpush1.msra.mxu0 0.0
      %4629 = vmatprep.subr.mxu0 0.0
      %4630 = vmatpush1.msra.mxu0 0.0
      %4631 = vmatprep.subr.mxu0 0.0
      %4632 = vmatpush1.msra.mxu0 0.0
      %4633 = vmatprep.subr.mxu0 0.0
      %4634 = vmatpush1.msra.mxu0 0.0
      %4635 = vmatprep.mubr.f32.mxu0 0.0
      %4636 = vmatmul.mubr.f32.gmra.mrb[0].mxu0 %v4364
      %v4637 = vpop.f32.mrb[0].mxu0
      %v4638 = vadd.f32 0.0, %v4637
      %v4639 = vpop.f32.mrb[0].mxu0
      %4640 = vdwg.mxu0
      %v4641 = vadd.f32 %v4553, %v4638
      %s4642 = scalar_lea.vmem %s7, 384
      %v4643 = vld [vmem:[%s4642] sm:$0xff]
      %v4644 = vld [vmem:[%s4642 + $0x8] sm:$0xff]
      %v4645 = vld [vmem:[%s4642 + $0x10] sm:$0xff]
      %v4646 = vld [vmem:[%s4642 + $0x18] sm:$0xff]
      %v4647 = vld [vmem:[%s4642 + $0x20] sm:$0xff]
      %v4648 = vld [vmem:[%s4642 + $0x28] sm:$0xff]
      %v4649 = vld [vmem:[%s4642 + $0x30] sm:$0xff]
      %v4650 = vld [vmem:[%s4642 + $0x38] sm:$0xff]
      %v4651 = vld [vmem:[%s4642 + $0x40] sm:$0xff]
      %v4652 = vld [vmem:[%s4642 + $0x48] sm:$0xff]
      %v4653 = vld [vmem:[%s4642 + $0x50] sm:$0xff]
      %v4654 = vld [vmem:[%s4642 + $0x58] sm:$0xff]
      %v4655 = vld [vmem:[%s4642 + $0x60] sm:$0xff]
      %v4656 = vld [vmem:[%s4642 + $0x68] sm:$0xff]
      %v4657 = vld [vmem:[%s4642 + $0x70] sm:$0xff]
      %v4658 = vld [vmem:[%s4642 + $0x78] sm:$0xff]
      %4659 = vmatprep.subr.mxu0 0.0
      %4660 = vmatpush1.msra.mxu0 %v4643
      %4661 = vmatprep.subr.mxu0 0.0
      %4662 = vmatpush1.msra.mxu0 %v4644
      %4663 = vmatprep.subr.mxu0 0.0
      %4664 = vmatpush1.msra.mxu0 %v4645
      %4665 = vmatprep.subr.mxu0 0.0
      %4666 = vmatpush1.msra.mxu0 %v4646
      %4667 = vmatprep.subr.mxu0 0.0
      %4668 = vmatpush1.msra.mxu0 %v4647
      %4669 = vmatprep.subr.mxu0 0.0
      %4670 = vmatpush1.msra.mxu0 %v4648
      %4671 = vmatprep.subr.mxu0 0.0
      %4672 = vmatpush1.msra.mxu0 %v4649
      %4673 = vmatprep.subr.mxu0 0.0
      %4674 = vmatpush1.msra.mxu0 %v4650
      %4675 = vmatprep.subr.mxu0 0.0
      %4676 = vmatpush1.msra.mxu0 %v4651
      %4677 = vmatprep.subr.mxu0 0.0
      %4678 = vmatpush1.msra.mxu0 %v4652
      %4679 = vmatprep.subr.mxu0 0.0
      %4680 = vmatpush1.msra.mxu0 %v4653
      %4681 = vmatprep.subr.mxu0 0.0
      %4682 = vmatpush1.msra.mxu0 %v4654
      %4683 = vmatprep.subr.mxu0 0.0
      %4684 = vmatpush1.msra.mxu0 %v4655
      %4685 = vmatprep.subr.mxu0 0.0
      %4686 = vmatpush1.msra.mxu0 %v4656
      %4687 = vmatprep.subr.mxu0 0.0
      %4688 = vmatpush1.msra.mxu0 %v4657
      %4689 = vmatprep.subr.mxu0 0.0
      %4690 = vmatpush1.msra.mxu0 %v4658
      %4691 = vmatprep.subr.mxu0 0.0
      %4692 = vmatpush1.msra.mxu0 0.0
      %4693 = vmatprep.subr.mxu0 0.0
      %4694 = vmatpush1.msra.mxu0 0.0
      %4695 = vmatprep.subr.mxu0 0.0
      %4696 = vmatpush1.msra.mxu0 0.0
      %4697 = vmatprep.subr.mxu0 0.0
      %4698 = vmatpush1.msra.mxu0 0.0
      %4699 = vmatprep.subr.mxu0 0.0
      %4700 = vmatpush1.msra.mxu0 0.0
      %4701 = vmatprep.subr.mxu0 0.0
      %4702 = vmatpush1.msra.mxu0 0.0
      %4703 = vmatprep.subr.mxu0 0.0
      %4704 = vmatpush1.msra.mxu0 0.0
      %4705 = vmatprep.subr.mxu0 0.0
      %4706 = vmatpush1.msra.mxu0 0.0
      %4707 = vmatprep.subr.mxu0 0.0
      %4708 = vmatpush1.msra.mxu0 0.0
      %4709 = vmatprep.subr.mxu0 0.0
      %4710 = vmatpush1.msra.mxu0 0.0
      %4711 = vmatprep.subr.mxu0 0.0
      %4712 = vmatpush1.msra.mxu0 0.0
      %4713 = vmatprep.subr.mxu0 0.0
      %4714 = vmatpush1.msra.mxu0 0.0
      %4715 = vmatprep.subr.mxu0 0.0
      %4716 = vmatpush1.msra.mxu0 0.0
      %4717 = vmatprep.subr.mxu0 0.0
      %4718 = vmatpush1.msra.mxu0 0.0
      %4719 = vmatprep.subr.mxu0 0.0
      %4720 = vmatpush1.msra.mxu0 0.0
      %4721 = vmatprep.subr.mxu0 0.0
      %4722 = vmatpush1.msra.mxu0 0.0
      %4723 = vmatprep.mubr.f32.mxu0 0.0
      %4724 = vmatmul.mubr.f32.gmra.mrb[0].mxu0 %v4369
      %v4725 = vpop.f32.mrb[0].mxu0
      %v4726 = vadd.f32 0.0, %v4725
      %v4727 = vpop.f32.mrb[0].mxu0
      %4728 = vdwg.mxu0
      %v4729 = vadd.f32 %v4641, %v4726
      %v4730 = vmul.f32 %v4729, 0.5
      %v4731 = vtanh.pop %v4730
      %v4732 = vadd.f32 %v4731, 1.0
      %v4733 = vmul.f32 %v4732, 0.5
      %v4734 = vld [vmem:[%s9] sm:$0xff]
      %v4735 = vld [vmem:[%s9 + $0x8] sm:$0xff]
      %v4736 = vld [vmem:[%s9 + $0x10] sm:$0xff]
      %v4737 = vld [vmem:[%s9 + $0x18] sm:$0xff]
      %v4738 = vld [vmem:[%s9 + $0x20] sm:$0xff]
      %v4739 = vld [vmem:[%s9 + $0x28] sm:$0xff]
      %v4740 = vld [vmem:[%s9 + $0x30] sm:$0xff]
      %v4741 = vld [vmem:[%s9 + $0x38] sm:$0xff]
      %v4742 = vld [vmem:[%s9 + $0x40] sm:$0xff]
      %v4743 = vld [vmem:[%s9 + $0x48] sm:$0xff]
      %v4744 = vld [vmem:[%s9 + $0x50] sm:$0xff]
      %v4745 = vld [vmem:[%s9 + $0x58] sm:$0xff]
      %v4746 = vld [vmem:[%s9 + $0x60] sm:$0xff]
      %v4747 = vld [vmem:[%s9 + $0x68] sm:$0xff]
      %v4748 = vld [vmem:[%s9 + $0x70] sm:$0xff]
      %v4749 = vld [vmem:[%s9 + $0x78] sm:$0xff]
      %v4750 = vld [vmem:[%s10] sm:$0x1]
      %v4752 = vlaneseq
      %v4753 = vshrl.u32 %v4752, 7
      %v4754 = vsub.s32 0, %v4753
      %v4755 = vrot.slane %v4750, %v4754
      %4757 = vmatprep.subr.mxu0 0.0
      %4758 = vmatpush1.msra.mxu0 %v4734
      %4759 = vmatprep.subr.mxu0 0.0
      %4760 = vmatpush1.msra.mxu0 %v4735
      %4761 = vmatprep.subr.mxu0 0.0
      %4762 = vmatpush1.msra.mxu0 %v4736
      %4763 = vmatprep.subr.mxu0 0.0
      %4764 = vmatpush1.msra.mxu0 %v4737
      %4765 = vmatprep.subr.mxu0 0.0
      %4766 = vmatpush1.msra.mxu0 %v4738
      %4767 = vmatprep.subr.mxu0 0.0
      %4768 = vmatpush1.msra.mxu0 %v4739
      %4769 = vmatprep.subr.mxu0 0.0
      %4770 = vmatpush1.msra.mxu0 %v4740
      %4771 = vmatprep.subr.mxu0 0.0
      %4772 = vmatpush1.msra.mxu0 %v4741
      %4773 = vmatprep.subr.mxu0 0.0
      %4774 = vmatpush1.msra.mxu0 %v4742
      %4775 = vmatprep.subr.mxu0 0.0
      %4776 = vmatpush1.msra.mxu0 %v4743
      %4777 = vmatprep.subr.mxu0 0.0
      %4778 = vmatpush1.msra.mxu0 %v4744
      %4779 = vmatprep.subr.mxu0 0.0
      %4780 = vmatpush1.msra.mxu0 %v4745
      %4781 = vmatprep.subr.mxu0 0.0
      %4782 = vmatpush1.msra.mxu0 %v4746
      %4783 = vmatprep.subr.mxu0 0.0
      %4784 = vmatpush1.msra.mxu0 %v4747
      %4785 = vmatprep.subr.mxu0 0.0
      %4786 = vmatpush1.msra.mxu0 %v4748
      %4787 = vmatprep.subr.mxu0 0.0
      %4788 = vmatpush1.msra.mxu0 %v4749
      %4789 = vmatprep.subr.mxu0 0.0
      %4790 = vmatpush1.msra.mxu0 0.0
      %4791 = vmatprep.subr.mxu0 0.0
      %4792 = vmatpush1.msra.mxu0 0.0
      %4793 = vmatprep.subr.mxu0 0.0
      %4794 = vmatpush1.msra.mxu0 0.0
      %4795 = vmatprep.subr.mxu0 0.0
      %4796 = vmatpush1.msra.mxu0 0.0
      %4797 = vmatprep.subr.mxu0 0.0
      %4798 = vmatpush1.msra.mxu0 0.0
      %4799 = vmatprep.subr.mxu0 0.0
      %4800 = vmatpush1.msra.mxu0 0.0
      %4801 = vmatprep.subr.mxu0 0.0
      %4802 = vmatpush1.msra.mxu0 0.0
      %4803 = vmatprep.subr.mxu0 0.0
      %4804 = vmatpush1.msra.mxu0 0.0
      %4805 = vmatprep.subr.mxu0 0.0
      %4806 = vmatpush1.msra.mxu0 0.0
      %4807 = vmatprep.subr.mxu0 0.0
      %4808 = vmatpush1.msra.mxu0 0.0
      %4809 = vmatprep.subr.mxu0 0.0
      %4810 = vmatpush1.msra.mxu0 0.0
      %4811 = vmatprep.subr.mxu0 0.0
      %4812 = vmatpush1.msra.mxu0 0.0
      %4813 = vmatprep.subr.mxu0 0.0
      %4814 = vmatpush1.msra.mxu0 0.0
      %4815 = vmatprep.subr.mxu0 0.0
      %4816 = vmatpush1.msra.mxu0 0.0
      %4817 = vmatprep.subr.mxu0 0.0
      %4818 = vmatpush1.msra.mxu0 0.0
      %4819 = vmatprep.subr.mxu0 0.0
      %4820 = vmatpush1.msra.mxu0 0.0
      %4821 = vmatprep.mubr.f32.mxu0 0.0
      %4822 = vmatmul.mubr.f32.gmra.mrb[0].mxu0 %v4733
      %v4823 = vpop.f32.mrb[0].mxu0
      %v4824 = vadd.f32 %v4755, %v4823
      %v4825 = vpop.f32.mrb[0].mxu0
      %4826 = vdwg.mxu0
      %v4827 = vmul.f32 %v4824, 0.5
      %v4828 = vtanh.pop %v4827
      %v4829 = vadd.f32 %v4828, 1.0
      %v4830 = vmul.f32 %v4829, 0.5
      %v4831 = vld [vmem:[%s11] sm:$0xff]
      %v4832 = vld [vmem:[%s11 + $0x8] sm:$0xff]
      %v4833 = vld [vmem:[%s11 + $0x10] sm:$0xff]
      %v4834 = vld [vmem:[%s11 + $0x18] sm:$0xff]
      %v4835 = vld [vmem:[%s11 + $0x20] sm:$0xff]
      %v4836 = vld [vmem:[%s11 + $0x28] sm:$0xff]
      %v4837 = vld [vmem:[%s11 + $0x30] sm:$0xff]
      %v4838 = vld [vmem:[%s11 + $0x38] sm:$0xff]
      %v4839 = vld [vmem:[%s11 + $0x40] sm:$0xff]
      %v4840 = vld [vmem:[%s11 + $0x48] sm:$0xff]
      %v4841 = vld [vmem:[%s11 + $0x50] sm:$0xff]
      %v4842 = vld [vmem:[%s11 + $0x58] sm:$0xff]
      %v4843 = vld [vmem:[%s11 + $0x60] sm:$0xff]
      %v4844 = vld [vmem:[%s11 + $0x68] sm:$0xff]
      %v4845 = vld [vmem:[%s11 + $0x70] sm:$0xff]
      %v4846 = vld [vmem:[%s11 + $0x78] sm:$0xff]
      %v4847 = vld [vmem:[%s12] sm:$0x1]
      %v4849 = vlaneseq
      %v4850 = vshrl.u32 %v4849, 7
      %v4851 = vsub.s32 0, %v4850
      %v4852 = vrot.slane %v4847, %v4851
      %4854 = vmatprep.subr.mxu0 0.0
      %4855 = vmatpush1.msra.mxu0 %v4831
      %4856 = vmatprep.subr.mxu0 0.0
      %4857 = vmatpush1.msra.mxu0 %v4832
      %4858 = vmatprep.subr.mxu0 0.0
      %4859 = vmatpush1.msra.mxu0 %v4833
      %4860 = vmatprep.subr.mxu0 0.0
      %4861 = vmatpush1.msra.mxu0 %v4834
      %4862 = vmatprep.subr.mxu0 0.0
      %4863 = vmatpush1.msra.mxu0 %v4835
      %4864 = vmatprep.subr.mxu0 0.0
      %4865 = vmatpush1.msra.mxu0 %v4836
      %4866 = vmatprep.subr.mxu0 0.0
      %4867 = vmatpush1.msra.mxu0 %v4837
      %4868 = vmatprep.subr.mxu0 0.0
      %4869 = vmatpush1.msra.mxu0 %v4838
      %4870 = vmatprep.subr.mxu0 0.0
      %4871 = vmatpush1.msra.mxu0 %v4839
      %4872 = vmatprep.subr.mxu0 0.0
      %4873 = vmatpush1.msra.mxu0 %v4840
      %4874 = vmatprep.subr.mxu0 0.0
      %4875 = vmatpush1.msra.mxu0 %v4841
      %4876 = vmatprep.subr.mxu0 0.0
      %4877 = vmatpush1.msra.mxu0 %v4842
      %4878 = vmatprep.subr.mxu0 0.0
      %4879 = vmatpush1.msra.mxu0 %v4843
      %4880 = vmatprep.subr.mxu0 0.0
      %4881 = vmatpush1.msra.mxu0 %v4844
      %4882 = vmatprep.subr.mxu0 0.0
      %4883 = vmatpush1.msra.mxu0 %v4845
      %4884 = vmatprep.subr.mxu0 0.0
      %4885 = vmatpush1.msra.mxu0 %v4846
      %4886 = vmatprep.subr.mxu0 0.0
      %4887 = vmatpush1.msra.mxu0 0.0
      %4888 = vmatprep.subr.mxu0 0.0
      %4889 = vmatpush1.msra.mxu0 0.0
      %4890 = vmatprep.subr.mxu0 0.0
      %4891 = vmatpush1.msra.mxu0 0.0
      %4892 = vmatprep.subr.mxu0 0.0
      %4893 = vmatpush1.msra.mxu0 0.0
      %4894 = vmatprep.subr.mxu0 0.0
      %4895 = vmatpush1.msra.mxu0 0.0
      %4896 = vmatprep.subr.mxu0 0.0
      %4897 = vmatpush1.msra.mxu0 0.0
      %4898 = vmatprep.subr.mxu0 0.0
      %4899 = vmatpush1.msra.mxu0 0.0
      %4900 = vmatprep.subr.mxu0 0.0
      %4901 = vmatpush1.msra.mxu0 0.0
      %4902 = vmatprep.subr.mxu0 0.0
      %4903 = vmatpush1.msra.mxu0 0.0
      %4904 = vmatprep.subr.mxu0 0.0
      %4905 = vmatpush1.msra.mxu0 0.0
      %4906 = vmatprep.subr.mxu0 0.0
      %4907 = vmatpush1.msra.mxu0 0.0
      %4908 = vmatprep.subr.mxu0 0.0
      %4909 = vmatpush1.msra.mxu0 0.0
      %4910 = vmatprep.subr.mxu0 0.0
      %4911 = vmatpush1.msra.mxu0 0.0
      %4912 = vmatprep.subr.mxu0 0.0
      %4913 = vmatpush1.msra.mxu0 0.0
      %4914 = vmatprep.subr.mxu0 0.0
      %4915 = vmatpush1.msra.mxu0 0.0
      %4916 = vmatprep.subr.mxu0 0.0
      %4917 = vmatpush1.msra.mxu0 0.0
      %4918 = vmatprep.mubr.f32.mxu0 0.0
      %4919 = vmatmul.mubr.f32.gmra.mrb[0].mxu0 %v4830
      %v4920 = vpop.f32.mrb[0].mxu0
      %v4921 = vadd.f32 %v4852, %v4920
      %v4922 = vpop.f32.mrb[0].mxu0
      %4923 = vdwg.mxu0
      %4924 = vst [vmem:[%s440] sm:$0xff] %v4921
      %p4925 = scmp.lt.s32.totalorder %s24, 3
      %s4926 = scalar_select %p4925, %s24, 3
      %s4927 = smul.addr %s4926, 8
      %s4928 = scalar_lea.vmem %s13, %s4927
      // Predicated region
      $region73: #{lenet_forward.1} parent=71 // pred_check
        %p4929 = pneg %p320
      $region74: #{lenet_forward.1} parent=71 // pred_check_branch
        %4931 = sbr.rel (%p4929) target = $region76
      $region75: #{lenet_forward.1} parent=71 // pred_region
        _
      $region76: #{lenet_forward.1} parent=71 // pred_fallthru
        _
    $region72: #{lenet_forward.1} parent=5 // pred_fallthru
      _
    %p4932 = scmp.le.s32.totalorder 2, %s19
    // Predicated region
    $region77: #{lenet_forward.1} parent=5 // pred_check
      %p4933 = pneg %p4932
    $region78: #{lenet_forward.1} parent=5 // pred_check_branch
      %4935 = sbr.rel (%p4933) target = $region80
    $region79: #{lenet_forward.1} parent=5 // pred_region
      %s4936 = ssub.s32 %s19, 2
      // Predicated region
      $region81: #{lenet_forward.1} parent=79 // pred_check
        %p4937 = pneg %p326
      $region82: #{lenet_forward.1} parent=79 // pred_check_branch
        %4939 = sbr.rel (%p4937) target = $region84
      $region83: #{lenet_forward.1} parent=79 // pred_region
        %p4940 = scmp.lt.s32.totalorder %s25, 3
        %s4941 = scalar_select %p4940, %s25, 3
        %s4942 = smul.addr %s4941, 8
        %s4943 = scalar_lea.vmem %s13, %s4942
      $region84: #{lenet_forward.1} parent=79 // pred_fallthru
        _
    $region80: #{lenet_forward.1} parent=5 // pred_fallthru
      _
  $region6: #{lenet_forward.1} parent=0 // loop_footer
    %s23 = sadd.s32 1, %s19
  $region7: #{lenet_forward.1} parent=0 // loop_footer_branch
    %18 = sbr.rel target = $region3
  $region8: #{lenet_forward.1} parent=0 // loop_exit
    _

</llo_original>
